<compile_context>
chip_gen: v7x
topology: tpu7x:2x2x1
jax: 0.10.0
libtpu: 0.0.40
codegen_flags: <defaults>
</compile_context>

<pallas_src>
import functools

import jax
import jax.numpy as jnp
from jax.experimental import pallas as pl
from jax.experimental.pallas import tpu as pltpu

LANES = 128


def _round_up(x, m):
    return (x + m - 1) // m * m


def _tap_groups(C):
    """Pack the 9 conv taps into 128-lane groups so K has (almost) no zero padding."""
    if C >= LANES:
        return tuple((k,) for k in range(9)), _round_up(C, LANES)
    g = LANES // C                                      # taps per 128-lane group
    return tuple(tuple(range(i, min(i + g, 9))) for i in range(0, 9, g)), LANES


def resblock_kernel(xm_ref, xt_ref, xb_ref, w1_ref, b1_ref, w2_ref, b2_ref, o_ref,
                    pad1_ref, pad2_ref, cols_ref, *,
                    R, W, C, Cp, groups, gw, chunk_rows, res_scale):
    """One (batch, row-band) tile per grid step.

    xm_ref:   (1, R, W, Cp)  bf16  main band of x            (Cp = channels padded to 128)
    xt_ref:   (1, 2, W, Cp)  bf16  2-row top halo   (clamped block; masked to 0 at the frame edge)
    xb_ref:   (1, 2, W, Cp)  bf16  2-row bottom halo (clamped block; masked to 0 at the frame edge)
    w*_ref:   (K, Cp)        bf16  tap-packed im2col weights
    b*_ref:   (1, Cp)        f32   biases (zero in padded channels)
    o_ref:    (1, R, W, Cp)  bf16  lane-dense output band
    pad1_ref: (R+4, W+2, C)  bf16  W-zero-padded x band (+2-row halo each side)
    pad2_ref: (R+2, W+2, C)  bf16  W-zero-padded relu(conv1) band (+1 recomputed halo row each side)
    cols_ref: ((R+2)*W, K)   bf16  im2col matrix (reused by both convs, chunk by chunk)
    """
    b = pl.program_id(1)
    nb = pl.num_programs(1)

    tmask = jnp.where(b > 0, 1.0, 0.0).astype(jnp.bfloat16)
    bmask = jnp.where(b < nb - 1, 1.0, 0.0).astype(jnp.bfloat16)

    def w_pad(v):                      # (rows, W, C) -> (rows, W+2, C); zero side columns in-register
        z = jnp.zeros((v.shape[0], 1, C), jnp.bfloat16)
        return jnp.concatenate([z, v, z], axis=1)

    # Stage x band + halo into pad1_ref (full-width row stores only; offsets on the major dim).
    pad1_ref[0:2] = w_pad(xt_ref[0][..., :C] * tmask)
    pad1_ref[2:2 + R] = w_pad(xm_ref[0][..., :C])
    pad1_ref[2 + R:4 + R] = w_pad(xb_ref[0][..., :C] * bmask)

    def conv3x3(src_ref, out_rows, w_ref, bias_ref, emit):
        # Chunk over output rows so the cols build of chunk i+1 can overlap chunk i's MXU work.
        for r0 in range(0, out_rows, chunk_rows):
            cr = min(chunk_rows, out_rows - r0)
            m0, m1 = r0 * W, (r0 + cr) * W
            for gi, taps in enumerate(groups):
                parts = []
                for t in taps:
                    dy, dx = t // 3, t % 3
                    p = src_ref[r0 + dy:r0 + dy + cr, dx:dx + W, :]      # (cr, W, C)
                    parts.append(p.reshape(cr * W, C))
                width = len(taps) * C
                if width < gw:
                    parts.append(jnp.zeros((cr * W, gw - width), jnp.bfloat16))
                grp = parts[0] if len(parts) == 1 else jnp.concatenate(parts, axis=-1)
                cols_ref[m0:m1, gi * gw:(gi + 1) * gw] = grp             # 128-aligned lane offsets
            y = jnp.dot(cols_ref[m0:m1, :], w_ref[...],
                        preferred_element_type=jnp.float32) + bias_ref[...]
            emit(r0, cr, y)                                              # (cr*W, Cp) f32

    # ---- conv1 + bias + ReLU, written (W-zero-padded) into pad2_ref ----
    def emit1(r0, cr, y):
        a = jnp.maximum(y, 0.0).astype(jnp.bfloat16).reshape(cr, W, Cp)
        pad2_ref[r0:r0 + cr] = w_pad(a[..., :C])

    conv3x3(pad1_ref, R + 2, w1_ref, b1_ref, emit1)

    # conv2's zero padding at the frame boundary must be a literal zero row (not conv1(0-padded x)).
    @pl.when(b == 0)
    def _zero_top():
        pad2_ref[0:1] = jnp.zeros((1, W + 2, C), jnp.bfloat16)

    @pl.when(b == nb - 1)
    def _zero_bot():
        pad2_ref[R + 1:R + 2] = jnp.zeros((1, W + 2, C), jnp.bfloat16)

    # ---- conv2 + bias, residual epilogue (f32 accumulate), bf16 lane-dense store ----
    # TODO(synk): identity path uses the bf16-quantized input (activations are kept bf16 between
    #             blocks); per-block error ~2^-9 relative, acceptable for inference trunks.
    def emit2(r0, cr, y):
        ident = xm_ref[0, r0:r0 + cr].astype(jnp.float32)                # (cr, W, Cp)
        out = ident + y.reshape(cr, W, Cp) * res_scale
        o_ref[0, r0:r0 + cr] = out.astype(jnp.bfloat16)

    conv3x3(pad2_ref, R, w2_ref, b2_ref, emit2)


# ------------------------------- packing / sizing helpers -------------------------------
def _pack_conv_weight(w, groups, gw, cp_out):
    """(Cout, Cin, 3, 3) OIHW -> (len(groups)*gw, Cp_out) bf16 tap-packed im2col layout."""
    cout = int(w.shape[0])
    wt = jnp.transpose(w, (2, 3, 1, 0))                                  # (ky, kx, Cin, Cout)
    blocks = []
    for taps in groups:
        rows = jnp.concatenate([wt[t // 3, t % 3] for t in taps], axis=0)
        blocks.append(jnp.pad(rows, ((0, gw - rows.shape[0]), (0, cp_out - cout))))
    return jnp.concatenate(blocks, axis=0).astype(jnp.bfloat16)


def _vmem_capacity_bytes():
    try:
        return int(pltpu.get_tpu_info().vmem_capacity_bytes)
    except Exception:
        return 64 * 2 ** 20                    # conservative default (v7x per-core VMEM)


def _chunk_rows(out_rows, W):
    cr = max(1, min(out_rows, max(1, 2048 // max(W, 1))))
    if cr >= out_rows and out_rows >= 4:       # ensure >= 2 chunks so build/matmul can interleave
        cr = (out_rows + 1) // 2
    return cr


def _footprint_bytes(R, W, C, Cp, K, chunk_rows):
    cl = _round_up(C, LANES)
    wp = _round_up(W + 2, 16)
    scratch = ((R + 4) + (R + 2)) * wp * cl * 2 + _round_up((R + 2) * W, 16) * K * 2
    io = 2 * (R * W * Cp * 2) * 2              # main in + out band blocks, double buffered
    io += 2 * (2 * W * Cp * 2) * 2             # two 2-row halo blocks, double buffered
    io += 2 * (K * Cp * 2) + 2 * (Cp * 4)      # weights / biases (constant index maps)
    m = chunk_rows * W
    temps = 4 * m * Cp * 4 + m * K * 2 + (R + 4) * wp * cl * 2
    return scratch + io + temps + 4 * 2 ** 20  # slack for Mosaic internal scratch


def _choose_band(H, W, C, Cp, K, budget, max_band_rows=None):
    if H % 2 == 1 or H < 4:
        return H                               # single band (halo blocks fully masked)
    cap = 64 if max_band_rows is None else max(2, int(max_band_rows))
    cands = [r for r in range(min(H, cap), 1, -1) if r % 2 == 0 and H % r == 0]
    for r in cands:
        if _footprint_bytes(r, W, C, Cp, K, _chunk_rows(r + 2, W)) <= budget:
            return r
    return cands[-1] if cands else H


# ------------------------------------ wrappers ------------------------------------
def residual_block_nobn_nhwc(x, w1, b1, w2, b2, res_scale=1.0, num_channels=None,
                             max_band_rows=None):
    """Layout-preserving block: x is (N, H, W, Cp) bf16, Cp = round_up(C,128), padded lanes zero.
    Returns (N, H, W, Cp) bf16 in the same layout (padded lanes stay zero) — chain-friendly."""
    N, H, W, Cp = x.shape
    C = int(num_channels) if num_channels is not None else int(w1.shape[0])
    assert Cp == _round_up(C, LANES) and H >= 2
    x = x.astype(jnp.bfloat16)

    groups, gw = _tap_groups(C)
    K = len(groups) * gw
    w1t = _pack_conv_weight(w1, groups, gw, Cp)
    w2t = _pack_conv_weight(w2, groups, gw, Cp)
    b1r = jnp.pad(b1, (0, Cp - C)).reshape(1, Cp).astype(jnp.float32)
    b2r = jnp.pad(b2, (0, Cp - C)).reshape(1, Cp).astype(jnp.float32)

    budget = int(_vmem_capacity_bytes() * 0.85)
    R = _choose_band(H, W, C, Cp, K, budget, max_band_rows)
    nb = H // R
    chunk = _chunk_rows(R + 2, W)
    est = _footprint_bytes(R, W, C, Cp, K, chunk)
    vmem_limit = int(min(budget, max(32 * 2 ** 20, int(1.25 * est))))

    out = pl.pallas_call(
        functools.partial(resblock_kernel, R=R, W=W, C=C, Cp=Cp, groups=groups, gw=gw,
                          chunk_rows=chunk, res_scale=float(res_scale)),
        out_shape=jax.ShapeDtypeStruct((N, H, W, Cp), jnp.bfloat16),
        grid_spec=pltpu.PrefetchScalarGridSpec(
            num_scalar_prefetch=0,
            grid=(N, nb),
            in_specs=[
                pl.BlockSpec((1, R, W, Cp), lambda n, b: (n, b, 0, 0)),
                pl.BlockSpec((1, 2, W, Cp),
                             lambda n, b: (n, jnp.maximum(b * (R // 2) - 1, 0), 0, 0)),
                pl.BlockSpec((1, 2, W, Cp),
                             lambda n, b: (n, jnp.minimum((b + 1) * (R // 2), H // 2 - 1), 0, 0)),
                pl.BlockSpec((K, Cp), lambda n, b: (0, 0)),
                pl.BlockSpec((1, Cp), lambda n, b: (0, 0)),
                pl.BlockSpec((K, Cp), lambda n, b: (0, 0)),
                pl.BlockSpec((1, Cp), lambda n, b: (0, 0)),
            ],
            out_specs=pl.BlockSpec((1, R, W, Cp), lambda n, b: (n, b, 0, 0)),
            scratch_shapes=[
                pltpu.VMEM((R + 4, W + 2, C), jnp.bfloat16),
                pltpu.VMEM((R + 2, W + 2, C), jnp.bfloat16),
                pltpu.VMEM(((R + 2) * W, K), jnp.bfloat16),
            ],
        ),
        compiler_params=pltpu.CompilerParams(
            dimension_semantics=("parallel", "parallel"),
            vmem_limit_bytes=vmem_limit,
        ),
    )(x, x, x, w1t, b1r, w2t, b2r)
    return out


def residual_block_nobn(x_nchw, w1, b1, w2, b2, res_scale=1.0, max_band_rows=None):
    """PyTorch-interface wrapper: (N, C, H, W) f32 in / out (conversion only at the boundary)."""
    N, C, H, W = x_nchw.shape
    Cp = _round_up(C, LANES)
    x = jnp.transpose(x_nchw, (0, 2, 3, 1))
    x = jnp.pad(x, ((0, 0), (0, 0), (0, 0), (0, Cp - C))).astype(jnp.bfloat16)
    out = residual_block_nobn_nhwc(x, w1, b1, w2, b2, res_scale, num_channels=C,
                                   max_band_rows=max_band_rows)
    return jnp.transpose(out[..., :C].astype(jnp.float32), (0, 3, 1, 2))


# ------------------------------- references for validation -------------------------------
def _conv2d_nchw(x, w, b):
    dn = jax.lax.conv_dimension_numbers(x.shape, w.shape, ('NCHW', 'OIHW', 'NCHW'))
    y = jax.lax.conv_general_dilated(x, w, (1, 1), ((1, 1), (1, 1)),
                                     dimension_numbers=dn,
                                     preferred_element_type=jnp.float32)
    return y + b.astype(jnp.float32)[None, :, None, None]


def _reference_f32(x, w1, b1, w2, b2, res_scale):
    y = jnp.maximum(_conv2d_nchw(x, w1, b1), 0.0)
    y = _conv2d_nchw(y, w2, b2)
    return x + y * res_scale


def _reference_bf16(x, w1, b1, w2, b2, res_scale):
    # Mirrors the kernel numerics: bf16 matmul operands / identity, f32 accumulation and epilogue.
    xb = x.astype(jnp.bfloat16)
    y = jnp.maximum(_conv2d_nchw(xb, w1.astype(jnp.bfloat16), b1), 0.0)
    y = _conv2d_nchw(y.astype(jnp.bfloat16), w2.astype(jnp.bfloat16), b2)
    return xb.astype(jnp.float32) + y * res_scale


if __name__ == "__main__":
    N, C, H, W = 2, 4, 16, 16
    res_scale = 1.0

    key = jax.random.PRNGKey(0)
    kx, k1, k2, k3, k4, k5, k6, k7, k8 = jax.random.split(key, 9)

    x = jax.random.normal(kx, (N, C, H, W), jnp.float32)
    w1 = 0.1 * jax.random.normal(k1, (C, C, 3, 3), jnp.float32)
    b1 = 0.1 * jax.random.normal(k2, (C,), jnp.float32)
    w2 = 0.1 * jax.random.normal(k3, (C, C, 3, 3), jnp.float32)
    b2 = 0.1 * jax.random.normal(k4, (C,), jnp.float32)

    # Force 2 row-bands so the halo / boundary logic is exercised at runtime.
    out = residual_block_nobn(x, w1, b1, w2, b2, res_scale, max_band_rows=8)
    out = jax.block_until_ready(out)
    assert out.shape == (N, C, H, W) and out.dtype == jnp.float32

    ref16 = _reference_bf16(x, w1, b1, w2, b2, res_scale)
    assert jnp.allclose(out, ref16, rtol=3e-2, atol=3e-2), "mismatch vs bf16-matmul conv reference"
    ref32 = _reference_f32(x, w1, b1, w2, b2, res_scale)
    assert jnp.allclose(out, ref32, rtol=1.5e-1, atol=1.5e-1), "mismatch vs f32 conv reference"

    # Trunk-style chaining in the persistent bf16 / NHWC / Cp-padded layout (no per-block transposes).
    w3 = 0.1 * jax.random.normal(k5, (C, C, 3, 3), jnp.float32)
    b3 = 0.1 * jax.random.normal(k6, (C,), jnp.float32)
    w4 = 0.1 * jax.random.normal(k7, (C, C, 3, 3), jnp.float32)
    b4 = 0.1 * jax.random.normal(k8, (C,), jnp.float32)
    Cp = _round_up(C, LANES)
    xn = jnp.pad(jnp.transpose(x, (0, 2, 3, 1)),
                 ((0, 0), (0, 0), (0, 0), (0, Cp - C))).astype(jnp.bfloat16)
    h1 = residual_block_nobn_nhwc(xn, w1, b1, w2, b2, res_scale, num_channels=C)
    h2 = residual_block_nobn_nhwc(h1, w3, b3, w4, b4, res_scale, num_channels=C)
    h2 = jax.block_until_ready(h2)
    chain_out = jnp.transpose(h2[..., :C].astype(jnp.float32), (0, 3, 1, 2))
    r1 = _reference_bf16(x, w1, b1, w2, b2, res_scale).astype(jnp.bfloat16).astype(jnp.float32)
    r2 = _reference_bf16(r1, w3, b3, w4, b4, res_scale)
    assert jnp.allclose(chain_out, r2, rtol=1e-1, atol=1e-1), "mismatch in chained residual blocks"

    print("KERNEL_OK")
</pallas_src>

<mosaic_0001>
module attributes {stable_mosaic.version = 11 : i64} {
  func.func @resblock_kernel(%arg0: i32, %arg1: i32, %arg2: memref<1x8x16x128xbf16, #tpu.memory_space<vmem>>, %arg3: memref<1x2x16x128xbf16, #tpu.memory_space<vmem>>, %arg4: memref<1x2x16x128xbf16, #tpu.memory_space<vmem>>, %arg5: memref<128x128xbf16, #tpu.memory_space<vmem>>, %arg6: memref<1x128xf32, #tpu.memory_space<vmem>>, %arg7: memref<128x128xbf16, #tpu.memory_space<vmem>>, %arg8: memref<1x128xf32, #tpu.memory_space<vmem>>, %arg9: memref<1x8x16x128xbf16, #tpu.memory_space<vmem>>, %arg10: memref<12x18x4xbf16, #tpu.memory_space<vmem>>, %arg11: memref<10x18x4xbf16, #tpu.memory_space<vmem>>, %arg12: memref<160x128xbf16, #tpu.memory_space<vmem>>) attributes {dimension_semantics = [#tpu.dimension_semantics<parallel>, #tpu.dimension_semantics<parallel>], iteration_bounds = array<i64: 2, 2>, scalar_prefetch = 0 : i64, scratch_operands = 3 : i64, tpu.core_type = #tpu.core_type<tc>, window_params = [{transform_indices = @transform_0, window_bounds = array<i64: 1, 8, 16, 128>}, {transform_indices = @transform_1, window_bounds = array<i64: 1, 2, 16, 128>}, {transform_indices = @transform_2, window_bounds = array<i64: 1, 2, 16, 128>}, {pipeline_mode = #tpu.pipeline_mode<synchronous>, transform_indices = @transform_3, window_bounds = array<i64: 128, 128>}, {pipeline_mode = #tpu.pipeline_mode<synchronous>, transform_indices = @transform_4, window_bounds = array<i64: 1, 128>}, {pipeline_mode = #tpu.pipeline_mode<synchronous>, transform_indices = @transform_5, window_bounds = array<i64: 128, 128>}, {pipeline_mode = #tpu.pipeline_mode<synchronous>, transform_indices = @transform_6, window_bounds = array<i64: 1, 128>}, {transform_indices = @transform_7, window_bounds = array<i64: 1, 8, 16, 128>}]} {
    %c0_i32 = arith.constant 0 : i32
    %0 = arith.cmpi sgt, %arg1, %c0_i32 : i32
    %cst = arith.constant 1.000000e+00 : f32
    %cst_0 = arith.constant 0.000000e+00 : f32
    %1 = arith.select %0, %cst, %cst_0 : f32
    %2 = arith.truncf %1 : f32 to bf16
    %c1_i32 = arith.constant 1 : i32
    %3 = arith.cmpi slt, %arg1, %c1_i32 : i32
    %cst_1 = arith.constant 1.000000e+00 : f32
    %cst_2 = arith.constant 0.000000e+00 : f32
    %4 = arith.select %3, %cst_1, %cst_2 : f32
    %5 = arith.truncf %4 : f32 to bf16
    %c0 = arith.constant 0 : index
    %c0_3 = arith.constant 0 : index
    %c0_4 = arith.constant 0 : index
    %c0_5 = arith.constant 0 : index
    %6 = vector.load %arg3[%c0, %c0_3, %c0_4, %c0_5] : memref<1x2x16x128xbf16, #tpu.memory_space<vmem>>, vector<1x2x16x128xbf16>
    %7 = vector.shape_cast %6 : vector<1x2x16x128xbf16> to vector<2x16x128xbf16>
    %8 = vector.extract_strided_slice %7 {offsets = [0, 0, 0], sizes = [2, 16, 4], strides = [1, 1, 1]} : vector<2x16x128xbf16> to vector<2x16x4xbf16>
    %9 = vector.broadcast %2 : bf16 to vector<2x16x4xbf16>
    %10 = arith.mulf %8, %9 : vector<2x16x4xbf16>
    %cst_6 = arith.constant 0.000000e+00 : bf16
    %11 = vector.broadcast %cst_6 : bf16 to vector<2x1x4xbf16>
    %12 = tpu.concatenate %11, %10, %11 in 1 : vector<2x1x4xbf16>, vector<2x16x4xbf16>, vector<2x1x4xbf16> -> vector<2x18x4xbf16>
    %c0_7 = arith.constant 0 : index
    %c0_8 = arith.constant 0 : index
    %c0_9 = arith.constant 0 : index
    %13 = vector.load %arg10[%c0_7, %c0_8, %c0_9] : memref<12x18x4xbf16, #tpu.memory_space<vmem>>, vector<2x18x4xbf16>
    tpu.vector_store %arg10[%c0_7, %c0_8, %c0_9], %12 {strides = array<i32>} : memref<12x18x4xbf16, #tpu.memory_space<vmem>>, vector<2x18x4xbf16>,
    %c0_10 = arith.constant 0 : index
    %c0_11 = arith.constant 0 : index
    %c0_12 = arith.constant 0 : index
    %c0_13 = arith.constant 0 : index
    %14 = vector.load %arg2[%c0_10, %c0_11, %c0_12, %c0_13] : memref<1x8x16x128xbf16, #tpu.memory_space<vmem>>, vector<1x8x16x128xbf16>
    %15 = vector.shape_cast %14 : vector<1x8x16x128xbf16> to vector<8x16x128xbf16>
    %16 = vector.extract_strided_slice %15 {offsets = [0, 0, 0], sizes = [8, 16, 4], strides = [1, 1, 1]} : vector<8x16x128xbf16> to vector<8x16x4xbf16>
    %cst_14 = arith.constant 0.000000e+00 : bf16
    %17 = vector.broadcast %cst_14 : bf16 to vector<8x1x4xbf16>
    %18 = tpu.concatenate %17, %16, %17 in 1 : vector<8x1x4xbf16>, vector<8x16x4xbf16>, vector<8x1x4xbf16> -> vector<8x18x4xbf16>
    %c2 = arith.constant 2 : index
    %c0_15 = arith.constant 0 : index
    %c0_16 = arith.constant 0 : index
    %19 = vector.load %arg10[%c2, %c0_15, %c0_16] : memref<12x18x4xbf16, #tpu.memory_space<vmem>>, vector<8x18x4xbf16>
    tpu.vector_store %arg10[%c2, %c0_15, %c0_16], %18 {strides = array<i32>} : memref<12x18x4xbf16, #tpu.memory_space<vmem>>, vector<8x18x4xbf16>,
    %c0_17 = arith.constant 0 : index
    %c0_18 = arith.constant 0 : index
    %c0_19 = arith.constant 0 : index
    %c0_20 = arith.constant 0 : index
    %20 = vector.load %arg4[%c0_17, %c0_18, %c0_19, %c0_20] : memref<1x2x16x128xbf16, #tpu.memory_space<vmem>>, vector<1x2x16x128xbf16>
    %21 = vector.shape_cast %20 : vector<1x2x16x128xbf16> to vector<2x16x128xbf16>
    %22 = vector.extract_strided_slice %21 {offsets = [0, 0, 0], sizes = [2, 16, 4], strides = [1, 1, 1]} : vector<2x16x128xbf16> to vector<2x16x4xbf16>
    %23 = vector.broadcast %5 : bf16 to vector<2x16x4xbf16>
    %24 = arith.mulf %22, %23 : vector<2x16x4xbf16>
    %cst_21 = arith.constant 0.000000e+00 : bf16
    %25 = vector.broadcast %cst_21 : bf16 to vector<2x1x4xbf16>
    %26 = tpu.concatenate %25, %24, %25 in 1 : vector<2x1x4xbf16>, vector<2x16x4xbf16>, vector<2x1x4xbf16> -> vector<2x18x4xbf16>
    %c10 = arith.constant 10 : index
    %c0_22 = arith.constant 0 : index
    %c0_23 = arith.constant 0 : index
    %27 = vector.load %arg10[%c10, %c0_22, %c0_23] : memref<12x18x4xbf16, #tpu.memory_space<vmem>>, vector<2x18x4xbf16>
    tpu.vector_store %arg10[%c10, %c0_22, %c0_23], %26 {strides = array<i32>} : memref<12x18x4xbf16, #tpu.memory_space<vmem>>, vector<2x18x4xbf16>,
    %c0_24 = arith.constant 0 : index
    %c0_25 = arith.constant 0 : index
    %c0_26 = arith.constant 0 : index
    %28 = vector.load %arg10[%c0_24, %c0_25, %c0_26] : memref<12x18x4xbf16, #tpu.memory_space<vmem>>, vector<5x16x4xbf16>
    %29 = vector.shape_cast %28 : vector<5x16x4xbf16> to vector<80x4xbf16>
    %c0_27 = arith.constant 0 : index
    %c1 = arith.constant 1 : index
    %c0_28 = arith.constant 0 : index
    %30 = vector.load %arg10[%c0_27, %c1, %c0_28] : memref<12x18x4xbf16, #tpu.memory_space<vmem>>, vector<5x16x4xbf16>
    %31 = vector.shape_cast %30 : vector<5x16x4xbf16> to vector<80x4xbf16>
    %c0_29 = arith.constant 0 : index
    %c2_30 = arith.constant 2 : index
    %c0_31 = arith.constant 0 : index
    %32 = vector.load %arg10[%c0_29, %c2_30, %c0_31] : memref<12x18x4xbf16, #tpu.memory_space<vmem>>, vector<5x16x4xbf16>
    %33 = vector.shape_cast %32 : vector<5x16x4xbf16> to vector<80x4xbf16>
    %c1_32 = arith.constant 1 : index
    %c0_33 = arith.constant 0 : index
    %c0_34 = arith.constant 0 : index
    %34 = vector.load %arg10[%c1_32, %c0_33, %c0_34] : memref<12x18x4xbf16, #tpu.memory_space<vmem>>, vector<5x16x4xbf16>
    %35 = vector.shape_cast %34 : vector<5x16x4xbf16> to vector<80x4xbf16>
    %c1_35 = arith.constant 1 : index
    %c1_36 = arith.constant 1 : index
    %c0_37 = arith.constant 0 : index
    %36 = vector.load %arg10[%c1_35, %c1_36, %c0_37] : memref<12x18x4xbf16, #tpu.memory_space<vmem>>, vector<5x16x4xbf16>
    %37 = vector.shape_cast %36 : vector<5x16x4xbf16> to vector<80x4xbf16>
    %c1_38 = arith.constant 1 : index
    %c2_39 = arith.constant 2 : index
    %c0_40 = arith.constant 0 : index
    %38 = vector.load %arg10[%c1_38, %c2_39, %c0_40] : memref<12x18x4xbf16, #tpu.memory_space<vmem>>, vector<5x16x4xbf16>
    %39 = vector.shape_cast %38 : vector<5x16x4xbf16> to vector<80x4xbf16>
    %c2_41 = arith.constant 2 : index
    %c0_42 = arith.constant 0 : index
    %c0_43 = arith.constant 0 : index
    %40 = vector.load %arg10[%c2_41, %c0_42, %c0_43] : memref<12x18x4xbf16, #tpu.memory_space<vmem>>, vector<5x16x4xbf16>
    %41 = vector.shape_cast %40 : vector<5x16x4xbf16> to vector<80x4xbf16>
    %c2_44 = arith.constant 2 : index
    %c1_45 = arith.constant 1 : index
    %c0_46 = arith.constant 0 : index
    %42 = vector.load %arg10[%c2_44, %c1_45, %c0_46] : memref<12x18x4xbf16, #tpu.memory_space<vmem>>, vector<5x16x4xbf16>
    %43 = vector.shape_cast %42 : vector<5x16x4xbf16> to vector<80x4xbf16>
    %c2_47 = arith.constant 2 : index
    %c2_48 = arith.constant 2 : index
    %c0_49 = arith.constant 0 : index
    %44 = vector.load %arg10[%c2_47, %c2_48, %c0_49] : memref<12x18x4xbf16, #tpu.memory_space<vmem>>, vector<5x16x4xbf16>
    %45 = vector.shape_cast %44 : vector<5x16x4xbf16> to vector<80x4xbf16>
    %cst_50 = arith.constant 0.000000e+00 : bf16
    %46 = vector.broadcast %cst_50 : bf16 to vector<80x92xbf16>
    %47 = tpu.concatenate %29, %31, %33, %35, %37, %39, %41, %43, %45, %46 in 1 : vector<80x4xbf16>, vector<80x4xbf16>, vector<80x4xbf16>, vector<80x4xbf16>, vector<80x4xbf16>, vector<80x4xbf16>, vector<80x4xbf16>, vector<80x4xbf16>, vector<80x4xbf16>, vector<80x92xbf16> -> vector<80x128xbf16>
    %c0_51 = arith.constant 0 : index
    %c0_52 = arith.constant 0 : index
    %48 = vector.load %arg12[%c0_51, %c0_52] : memref<160x128xbf16, #tpu.memory_space<vmem>>, vector<80x128xbf16>
    tpu.vector_store %arg12[%c0_51, %c0_52], %47 {strides = array<i32>} : memref<160x128xbf16, #tpu.memory_space<vmem>>, vector<80x128xbf16>,
    %c0_53 = arith.constant 0 : index
    %c0_54 = arith.constant 0 : index
    %49 = vector.load %arg12[%c0_53, %c0_54] : memref<160x128xbf16, #tpu.memory_space<vmem>>, vector<80x128xbf16>
    %c0_55 = arith.constant 0 : index
    %c0_56 = arith.constant 0 : index
    %50 = vector.load %arg5[%c0_55, %c0_56] : memref<128x128xbf16, #tpu.memory_space<vmem>>, vector<128x128xbf16>
    %cst_57 = arith.constant dense<0.000000e+00> : vector<80x128xf32>
    %51 = tpu.matmul %49, %50, %cst_57 {dimension_numbers = #tpu.dot_dimension_numbers<[1], [0], [0], [1], [0, 0, 1, 1], [], []>} : vector<80x128xbf16>, vector<128x128xbf16>, vector<80x128xf32> -> vector<80x128xf32>
    %c0_58 = arith.constant 0 : index
    %c0_59 = arith.constant 0 : index
    %52 = vector.load %arg6[%c0_58, %c0_59] : memref<1x128xf32, #tpu.memory_space<vmem>>, vector<1x128xf32>
    %53 = vector.broadcast %52 : vector<1x128xf32> to vector<80x128xf32>
    %54 = arith.addf %51, %53 : vector<80x128xf32>
    %cst_60 = arith.constant 0.000000e+00 : f32
    %55 = vector.broadcast %cst_60 : f32 to vector<80x128xf32>
    %56 = arith.maximumf %54, %55 : vector<80x128xf32>
    %57 = arith.truncf %56 : vector<80x128xf32> to vector<80x128xbf16>
    %58 = vector.shape_cast %57 : vector<80x128xbf16> to vector<5x16x128xbf16>
    %59 = vector.extract_strided_slice %58 {offsets = [0, 0, 0], sizes = [5, 16, 4], strides = [1, 1, 1]} : vector<5x16x128xbf16> to vector<5x16x4xbf16>
    %cst_61 = arith.constant 0.000000e+00 : bf16
    %60 = vector.broadcast %cst_61 : bf16 to vector<5x1x4xbf16>
    %61 = tpu.concatenate %60, %59, %60 in 1 : vector<5x1x4xbf16>, vector<5x16x4xbf16>, vector<5x1x4xbf16> -> vector<5x18x4xbf16>
    %c0_62 = arith.constant 0 : index
    %c0_63 = arith.constant 0 : index
    %c0_64 = arith.constant 0 : index
    %62 = vector.load %arg11[%c0_62, %c0_63, %c0_64] : memref<10x18x4xbf16, #tpu.memory_space<vmem>>, vector<5x18x4xbf16>
    tpu.vector_store %arg11[%c0_62, %c0_63, %c0_64], %61 {strides = array<i32>} : memref<10x18x4xbf16, #tpu.memory_space<vmem>>, vector<5x18x4xbf16>,
    %c5 = arith.constant 5 : index
    %c0_65 = arith.constant 0 : index
    %c0_66 = arith.constant 0 : index
    %63 = vector.load %arg10[%c5, %c0_65, %c0_66] : memref<12x18x4xbf16, #tpu.memory_space<vmem>>, vector<5x16x4xbf16>
    %64 = vector.shape_cast %63 : vector<5x16x4xbf16> to vector<80x4xbf16>
    %c5_67 = arith.constant 5 : index
    %c1_68 = arith.constant 1 : index
    %c0_69 = arith.constant 0 : index
    %65 = vector.load %arg10[%c5_67, %c1_68, %c0_69] : memref<12x18x4xbf16, #tpu.memory_space<vmem>>, vector<5x16x4xbf16>
    %66 = vector.shape_cast %65 : vector<5x16x4xbf16> to vector<80x4xbf16>
    %c5_70 = arith.constant 5 : index
    %c2_71 = arith.constant 2 : index
    %c0_72 = arith.constant 0 : index
    %67 = vector.load %arg10[%c5_70, %c2_71, %c0_72] : memref<12x18x4xbf16, #tpu.memory_space<vmem>>, vector<5x16x4xbf16>
    %68 = vector.shape_cast %67 : vector<5x16x4xbf16> to vector<80x4xbf16>
    %c6 = arith.constant 6 : index
    %c0_73 = arith.constant 0 : index
    %c0_74 = arith.constant 0 : index
    %69 = vector.load %arg10[%c6, %c0_73, %c0_74] : memref<12x18x4xbf16, #tpu.memory_space<vmem>>, vector<5x16x4xbf16>
    %70 = vector.shape_cast %69 : vector<5x16x4xbf16> to vector<80x4xbf16>
    %c6_75 = arith.constant 6 : index
    %c1_76 = arith.constant 1 : index
    %c0_77 = arith.constant 0 : index
    %71 = vector.load %arg10[%c6_75, %c1_76, %c0_77] : memref<12x18x4xbf16, #tpu.memory_space<vmem>>, vector<5x16x4xbf16>
    %72 = vector.shape_cast %71 : vector<5x16x4xbf16> to vector<80x4xbf16>
    %c6_78 = arith.constant 6 : index
    %c2_79 = arith.constant 2 : index
    %c0_80 = arith.constant 0 : index
    %73 = vector.load %arg10[%c6_78, %c2_79, %c0_80] : memref<12x18x4xbf16, #tpu.memory_space<vmem>>, vector<5x16x4xbf16>
    %74 = vector.shape_cast %73 : vector<5x16x4xbf16> to vector<80x4xbf16>
    %c7 = arith.constant 7 : index
    %c0_81 = arith.constant 0 : index
    %c0_82 = arith.constant 0 : index
    %75 = vector.load %arg10[%c7, %c0_81, %c0_82] : memref<12x18x4xbf16, #tpu.memory_space<vmem>>, vector<5x16x4xbf16>
    %76 = vector.shape_cast %75 : vector<5x16x4xbf16> to vector<80x4xbf16>
    %c7_83 = arith.constant 7 : index
    %c1_84 = arith.constant 1 : index
    %c0_85 = arith.constant 0 : index
    %77 = vector.load %arg10[%c7_83, %c1_84, %c0_85] : memref<12x18x4xbf16, #tpu.memory_space<vmem>>, vector<5x16x4xbf16>
    %78 = vector.shape_cast %77 : vector<5x16x4xbf16> to vector<80x4xbf16>
    %c7_86 = arith.constant 7 : index
    %c2_87 = arith.constant 2 : index
    %c0_88 = arith.constant 0 : index
    %79 = vector.load %arg10[%c7_86, %c2_87, %c0_88] : memref<12x18x4xbf16, #tpu.memory_space<vmem>>, vector<5x16x4xbf16>
    %80 = vector.shape_cast %79 : vector<5x16x4xbf16> to vector<80x4xbf16>
    %cst_89 = arith.constant 0.000000e+00 : bf16
    %81 = vector.broadcast %cst_89 : bf16 to vector<80x92xbf16>
    %82 = tpu.concatenate %64, %66, %68, %70, %72, %74, %76, %78, %80, %81 in 1 : vector<80x4xbf16>, vector<80x4xbf16>, vector<80x4xbf16>, vector<80x4xbf16>, vector<80x4xbf16>, vector<80x4xbf16>, vector<80x4xbf16>, vector<80x4xbf16>, vector<80x4xbf16>, vector<80x92xbf16> -> vector<80x128xbf16>
    %c80 = arith.constant 80 : index
    %c0_90 = arith.constant 0 : index
    %83 = vector.load %arg12[%c80, %c0_90] : memref<160x128xbf16, #tpu.memory_space<vmem>>, vector<80x128xbf16>
    tpu.vector_store %arg12[%c80, %c0_90], %82 {strides = array<i32>} : memref<160x128xbf16, #tpu.memory_space<vmem>>, vector<80x128xbf16>,
    %c80_91 = arith.constant 80 : index
    %c0_92 = arith.constant 0 : index
    %84 = vector.load %arg12[%c80_91, %c0_92] : memref<160x128xbf16, #tpu.memory_space<vmem>>, vector<80x128xbf16>
    %c0_93 = arith.constant 0 : index
    %c0_94 = arith.constant 0 : index
    %85 = vector.load %arg5[%c0_93, %c0_94] : memref<128x128xbf16, #tpu.memory_space<vmem>>, vector<128x128xbf16>
    %cst_95 = arith.constant dense<0.000000e+00> : vector<80x128xf32>
    %86 = tpu.matmul %84, %85, %cst_95 {dimension_numbers = #tpu.dot_dimension_numbers<[1], [0], [0], [1], [0, 0, 1, 1], [], []>} : vector<80x128xbf16>, vector<128x128xbf16>, vector<80x128xf32> -> vector<80x128xf32>
    %c0_96 = arith.constant 0 : index
    %c0_97 = arith.constant 0 : index
    %87 = vector.load %arg6[%c0_96, %c0_97] : memref<1x128xf32, #tpu.memory_space<vmem>>, vector<1x128xf32>
    %88 = vector.broadcast %87 : vector<1x128xf32> to vector<80x128xf32>
    %89 = arith.addf %86, %88 : vector<80x128xf32>
    %cst_98 = arith.constant 0.000000e+00 : f32
    %90 = vector.broadcast %cst_98 : f32 to vector<80x128xf32>
    %91 = arith.maximumf %89, %90 : vector<80x128xf32>
    %92 = arith.truncf %91 : vector<80x128xf32> to vector<80x128xbf16>
    %93 = vector.shape_cast %92 : vector<80x128xbf16> to vector<5x16x128xbf16>
    %94 = vector.extract_strided_slice %93 {offsets = [0, 0, 0], sizes = [5, 16, 4], strides = [1, 1, 1]} : vector<5x16x128xbf16> to vector<5x16x4xbf16>
    %cst_99 = arith.constant 0.000000e+00 : bf16
    %95 = vector.broadcast %cst_99 : bf16 to vector<5x1x4xbf16>
    %96 = tpu.concatenate %95, %94, %95 in 1 : vector<5x1x4xbf16>, vector<5x16x4xbf16>, vector<5x1x4xbf16> -> vector<5x18x4xbf16>
    %c5_100 = arith.constant 5 : index
    %c0_101 = arith.constant 0 : index
    %c0_102 = arith.constant 0 : index
    %97 = vector.load %arg11[%c5_100, %c0_101, %c0_102] : memref<10x18x4xbf16, #tpu.memory_space<vmem>>, vector<5x18x4xbf16>
    tpu.vector_store %arg11[%c5_100, %c0_101, %c0_102], %96 {strides = array<i32>} : memref<10x18x4xbf16, #tpu.memory_space<vmem>>, vector<5x18x4xbf16>,
    %c0_i32_103 = arith.constant 0 : i32
    %98 = arith.cmpi eq, %arg1, %c0_i32_103 : i32
    %99 = arith.extui %98 : i1 to i32
    %c0_i32_104 = arith.constant 0 : i32
    %100 = arith.cmpi ne, %99, %c0_i32_104 : i32
    scf.if %100 {
      %cst_199 = arith.constant 0.000000e+00 : bf16
      %180 = vector.broadcast %cst_199 : bf16 to vector<1x18x4xbf16>
      %c0_200 = arith.constant 0 : index
      %c0_201 = arith.constant 0 : index
      %c0_202 = arith.constant 0 : index
      %181 = vector.load %arg11[%c0_200, %c0_201, %c0_202] : memref<10x18x4xbf16, #tpu.memory_space<vmem>>, vector<1x18x4xbf16>
      tpu.vector_store %arg11[%c0_200, %c0_201, %c0_202], %180 {strides = array<i32>} : memref<10x18x4xbf16, #tpu.memory_space<vmem>>, vector<1x18x4xbf16>,
    } else {
    }
    %c1_i32_105 = arith.constant 1 : i32
    %101 = arith.cmpi eq, %arg1, %c1_i32_105 : i32
    %102 = arith.extui %101 : i1 to i32
    %c0_i32_106 = arith.constant 0 : i32
    %103 = arith.cmpi ne, %102, %c0_i32_106 : i32
    scf.if %103 {
      %cst_199 = arith.constant 0.000000e+00 : bf16
      %180 = vector.broadcast %cst_199 : bf16 to vector<1x18x4xbf16>
      %c9 = arith.constant 9 : index
      %c0_200 = arith.constant 0 : index
      %c0_201 = arith.constant 0 : index
      %181 = vector.load %arg11[%c9, %c0_200, %c0_201] : memref<10x18x4xbf16, #tpu.memory_space<vmem>>, vector<1x18x4xbf16>
      tpu.vector_store %arg11[%c9, %c0_200, %c0_201], %180 {strides = array<i32>} : memref<10x18x4xbf16, #tpu.memory_space<vmem>>, vector<1x18x4xbf16>,
    } else {
    }
    %c0_107 = arith.constant 0 : index
    %c0_108 = arith.constant 0 : index
    %c0_109 = arith.constant 0 : index
    %104 = vector.load %arg11[%c0_107, %c0_108, %c0_109] : memref<10x18x4xbf16, #tpu.memory_space<vmem>>, vector<5x16x4xbf16>
    %105 = vector.shape_cast %104 : vector<5x16x4xbf16> to vector<80x4xbf16>
    %c0_110 = arith.constant 0 : index
    %c1_111 = arith.constant 1 : index
    %c0_112 = arith.constant 0 : index
    %106 = vector.load %arg11[%c0_110, %c1_111, %c0_112] : memref<10x18x4xbf16, #tpu.memory_space<vmem>>, vector<5x16x4xbf16>
    %107 = vector.shape_cast %106 : vector<5x16x4xbf16> to vector<80x4xbf16>
    %c0_113 = arith.constant 0 : index
    %c2_114 = arith.constant 2 : index
    %c0_115 = arith.constant 0 : index
    %108 = vector.load %arg11[%c0_113, %c2_114, %c0_115] : memref<10x18x4xbf16, #tpu.memory_space<vmem>>, vector<5x16x4xbf16>
    %109 = vector.shape_cast %108 : vector<5x16x4xbf16> to vector<80x4xbf16>
    %c1_116 = arith.constant 1 : index
    %c0_117 = arith.constant 0 : index
    %c0_118 = arith.constant 0 : index
    %110 = vector.load %arg11[%c1_116, %c0_117, %c0_118] : memref<10x18x4xbf16, #tpu.memory_space<vmem>>, vector<5x16x4xbf16>
    %111 = vector.shape_cast %110 : vector<5x16x4xbf16> to vector<80x4xbf16>
    %c1_119 = arith.constant 1 : index
    %c1_120 = arith.constant 1 : index
    %c0_121 = arith.constant 0 : index
    %112 = vector.load %arg11[%c1_119, %c1_120, %c0_121] : memref<10x18x4xbf16, #tpu.memory_space<vmem>>, vector<5x16x4xbf16>
    %113 = vector.shape_cast %112 : vector<5x16x4xbf16> to vector<80x4xbf16>
    %c1_122 = arith.constant 1 : index
    %c2_123 = arith.constant 2 : index
    %c0_124 = arith.constant 0 : index
    %114 = vector.load %arg11[%c1_122, %c2_123, %c0_124] : memref<10x18x4xbf16, #tpu.memory_space<vmem>>, vector<5x16x4xbf16>
    %115 = vector.shape_cast %114 : vector<5x16x4xbf16> to vector<80x4xbf16>
    %c2_125 = arith.constant 2 : index
    %c0_126 = arith.constant 0 : index
    %c0_127 = arith.constant 0 : index
    %116 = vector.load %arg11[%c2_125, %c0_126, %c0_127] : memref<10x18x4xbf16, #tpu.memory_space<vmem>>, vector<5x16x4xbf16>
    %117 = vector.shape_cast %116 : vector<5x16x4xbf16> to vector<80x4xbf16>
    %c2_128 = arith.constant 2 : index
    %c1_129 = arith.constant 1 : index
    %c0_130 = arith.constant 0 : index
    %118 = vector.load %arg11[%c2_128, %c1_129, %c0_130] : memref<10x18x4xbf16, #tpu.memory_space<vmem>>, vector<5x16x4xbf16>
    %119 = vector.shape_cast %118 : vector<5x16x4xbf16> to vector<80x4xbf16>
    %c2_131 = arith.constant 2 : index
    %c2_132 = arith.constant 2 : index
    %c0_133 = arith.constant 0 : index
    %120 = vector.load %arg11[%c2_131, %c2_132, %c0_133] : memref<10x18x4xbf16, #tpu.memory_space<vmem>>, vector<5x16x4xbf16>
    %121 = vector.shape_cast %120 : vector<5x16x4xbf16> to vector<80x4xbf16>
    %cst_134 = arith.constant 0.000000e+00 : bf16
    %122 = vector.broadcast %cst_134 : bf16 to vector<80x92xbf16>
    %123 = tpu.concatenate %105, %107, %109, %111, %113, %115, %117, %119, %121, %122 in 1 : vector<80x4xbf16>, vector<80x4xbf16>, vector<80x4xbf16>, vector<80x4xbf16>, vector<80x4xbf16>, vector<80x4xbf16>, vector<80x4xbf16>, vector<80x4xbf16>, vector<80x4xbf16>, vector<80x92xbf16> -> vector<80x128xbf16>
    %c0_135 = arith.constant 0 : index
    %c0_136 = arith.constant 0 : index
    %124 = vector.load %arg12[%c0_135, %c0_136] : memref<160x128xbf16, #tpu.memory_space<vmem>>, vector<80x128xbf16>
    tpu.vector_store %arg12[%c0_135, %c0_136], %123 {strides = array<i32>} : memref<160x128xbf16, #tpu.memory_space<vmem>>, vector<80x128xbf16>,
    %c0_137 = arith.constant 0 : index
    %c0_138 = arith.constant 0 : index
    %125 = vector.load %arg12[%c0_137, %c0_138] : memref<160x128xbf16, #tpu.memory_space<vmem>>, vector<80x128xbf16>
    %c0_139 = arith.constant 0 : index
    %c0_140 = arith.constant 0 : index
    %126 = vector.load %arg7[%c0_139, %c0_140] : memref<128x128xbf16, #tpu.memory_space<vmem>>, vector<128x128xbf16>
    %cst_141 = arith.constant dense<0.000000e+00> : vector<80x128xf32>
    %127 = tpu.matmul %125, %126, %cst_141 {dimension_numbers = #tpu.dot_dimension_numbers<[1], [0], [0], [1], [0, 0, 1, 1], [], []>} : vector<80x128xbf16>, vector<128x128xbf16>, vector<80x128xf32> -> vector<80x128xf32>
    %c0_142 = arith.constant 0 : index
    %c0_143 = arith.constant 0 : index
    %128 = vector.load %arg8[%c0_142, %c0_143] : memref<1x128xf32, #tpu.memory_space<vmem>>, vector<1x128xf32>
    %129 = vector.broadcast %128 : vector<1x128xf32> to vector<80x128xf32>
    %130 = arith.addf %127, %129 : vector<80x128xf32>
    %c0_144 = arith.constant 0 : index
    %c0_145 = arith.constant 0 : index
    %c0_146 = arith.constant 0 : index
    %c0_147 = arith.constant 0 : index
    %131 = vector.load %arg2[%c0_144, %c0_145, %c0_146, %c0_147] : memref<1x8x16x128xbf16, #tpu.memory_space<vmem>>, vector<1x5x16x128xbf16>
    %132 = vector.shape_cast %131 : vector<1x5x16x128xbf16> to vector<5x16x128xbf16>
    %133 = arith.extf %132 : vector<5x16x128xbf16> to vector<5x16x128xf32>
    %134 = vector.shape_cast %130 : vector<80x128xf32> to vector<5x16x128xf32>
    %cst_148 = arith.constant 1.000000e+00 : f32
    %135 = vector.broadcast %cst_148 : f32 to vector<5x16x128xf32>
    %136 = arith.mulf %134, %135 : vector<5x16x128xf32>
    %137 = arith.addf %133, %136 : vector<5x16x128xf32>
    %138 = arith.truncf %137 : vector<5x16x128xf32> to vector<5x16x128xbf16>
    %c0_149 = arith.constant 0 : index
    %c0_150 = arith.constant 0 : index
    %c0_151 = arith.constant 0 : index
    %c0_152 = arith.constant 0 : index
    %139 = vector.load %arg9[%c0_149, %c0_150, %c0_151, %c0_152] : memref<1x8x16x128xbf16, #tpu.memory_space<vmem>>, vector<1x5x16x128xbf16>
    %140 = vector.shape_cast %139 : vector<1x5x16x128xbf16> to vector<5x16x128xbf16>
    %141 = vector.shape_cast %138 : vector<5x16x128xbf16> to vector<1x5x16x128xbf16>
    tpu.vector_store %arg9[%c0_149, %c0_150, %c0_151, %c0_152], %141 {strides = array<i32>} : memref<1x8x16x128xbf16, #tpu.memory_space<vmem>>, vector<1x5x16x128xbf16>,
    %c5_153 = arith.constant 5 : index
    %c0_154 = arith.constant 0 : index
    %c0_155 = arith.constant 0 : index
    %142 = vector.load %arg11[%c5_153, %c0_154, %c0_155] : memref<10x18x4xbf16, #tpu.memory_space<vmem>>, vector<3x16x4xbf16>
    %143 = vector.shape_cast %142 : vector<3x16x4xbf16> to vector<48x4xbf16>
    %c5_156 = arith.constant 5 : index
    %c1_157 = arith.constant 1 : index
    %c0_158 = arith.constant 0 : index
    %144 = vector.load %arg11[%c5_156, %c1_157, %c0_158] : memref<10x18x4xbf16, #tpu.memory_space<vmem>>, vector<3x16x4xbf16>
    %145 = vector.shape_cast %144 : vector<3x16x4xbf16> to vector<48x4xbf16>
    %c5_159 = arith.constant 5 : index
    %c2_160 = arith.constant 2 : index
    %c0_161 = arith.constant 0 : index
    %146 = vector.load %arg11[%c5_159, %c2_160, %c0_161] : memref<10x18x4xbf16, #tpu.memory_space<vmem>>, vector<3x16x4xbf16>
    %147 = vector.shape_cast %146 : vector<3x16x4xbf16> to vector<48x4xbf16>
    %c6_162 = arith.constant 6 : index
    %c0_163 = arith.constant 0 : index
    %c0_164 = arith.constant 0 : index
    %148 = vector.load %arg11[%c6_162, %c0_163, %c0_164] : memref<10x18x4xbf16, #tpu.memory_space<vmem>>, vector<3x16x4xbf16>
    %149 = vector.shape_cast %148 : vector<3x16x4xbf16> to vector<48x4xbf16>
    %c6_165 = arith.constant 6 : index
    %c1_166 = arith.constant 1 : index
    %c0_167 = arith.constant 0 : index
    %150 = vector.load %arg11[%c6_165, %c1_166, %c0_167] : memref<10x18x4xbf16, #tpu.memory_space<vmem>>, vector<3x16x4xbf16>
    %151 = vector.shape_cast %150 : vector<3x16x4xbf16> to vector<48x4xbf16>
    %c6_168 = arith.constant 6 : index
    %c2_169 = arith.constant 2 : index
    %c0_170 = arith.constant 0 : index
    %152 = vector.load %arg11[%c6_168, %c2_169, %c0_170] : memref<10x18x4xbf16, #tpu.memory_space<vmem>>, vector<3x16x4xbf16>
    %153 = vector.shape_cast %152 : vector<3x16x4xbf16> to vector<48x4xbf16>
    %c7_171 = arith.constant 7 : index
    %c0_172 = arith.constant 0 : index
    %c0_173 = arith.constant 0 : index
    %154 = vector.load %arg11[%c7_171, %c0_172, %c0_173] : memref<10x18x4xbf16, #tpu.memory_space<vmem>>, vector<3x16x4xbf16>
    %155 = vector.shape_cast %154 : vector<3x16x4xbf16> to vector<48x4xbf16>
    %c7_174 = arith.constant 7 : index
    %c1_175 = arith.constant 1 : index
    %c0_176 = arith.constant 0 : index
    %156 = vector.load %arg11[%c7_174, %c1_175, %c0_176] : memref<10x18x4xbf16, #tpu.memory_space<vmem>>, vector<3x16x4xbf16>
    %157 = vector.shape_cast %156 : vector<3x16x4xbf16> to vector<48x4xbf16>
    %c7_177 = arith.constant 7 : index
    %c2_178 = arith.constant 2 : index
    %c0_179 = arith.constant 0 : index
    %158 = vector.load %arg11[%c7_177, %c2_178, %c0_179] : memref<10x18x4xbf16, #tpu.memory_space<vmem>>, vector<3x16x4xbf16>
    %159 = vector.shape_cast %158 : vector<3x16x4xbf16> to vector<48x4xbf16>
    %cst_180 = arith.constant 0.000000e+00 : bf16
    %160 = vector.broadcast %cst_180 : bf16 to vector<48x92xbf16>
    %161 = tpu.concatenate %143, %145, %147, %149, %151, %153, %155, %157, %159, %160 in 1 : vector<48x4xbf16>, vector<48x4xbf16>, vector<48x4xbf16>, vector<48x4xbf16>, vector<48x4xbf16>, vector<48x4xbf16>, vector<48x4xbf16>, vector<48x4xbf16>, vector<48x4xbf16>, vector<48x92xbf16> -> vector<48x128xbf16>
    %c80_181 = arith.constant 80 : index
    %c0_182 = arith.constant 0 : index
    %162 = vector.load %arg12[%c80_181, %c0_182] : memref<160x128xbf16, #tpu.memory_space<vmem>>, vector<48x128xbf16>
    tpu.vector_store %arg12[%c80_181, %c0_182], %161 {strides = array<i32>} : memref<160x128xbf16, #tpu.memory_space<vmem>>, vector<48x128xbf16>,
    %c80_183 = arith.constant 80 : index
    %c0_184 = arith.constant 0 : index
    %163 = vector.load %arg12[%c80_183, %c0_184] : memref<160x128xbf16, #tpu.memory_space<vmem>>, vector<48x128xbf16>
    %c0_185 = arith.constant 0 : index
    %c0_186 = arith.constant 0 : index
    %164 = vector.load %arg7[%c0_185, %c0_186] : memref<128x128xbf16, #tpu.memory_space<vmem>>, vector<128x128xbf16>
    %cst_187 = arith.constant dense<0.000000e+00> : vector<48x128xf32>
    %165 = tpu.matmul %163, %164, %cst_187 {dimension_numbers = #tpu.dot_dimension_numbers<[1], [0], [0], [1], [0, 0, 1, 1], [], []>} : vector<48x128xbf16>, vector<128x128xbf16>, vector<48x128xf32> -> vector<48x128xf32>
    %c0_188 = arith.constant 0 : index
    %c0_189 = arith.constant 0 : index
    %166 = vector.load %arg8[%c0_188, %c0_189] : memref<1x128xf32, #tpu.memory_space<vmem>>, vector<1x128xf32>
    %167 = vector.broadcast %166 : vector<1x128xf32> to vector<48x128xf32>
    %168 = arith.addf %165, %167 : vector<48x128xf32>
    %c0_190 = arith.constant 0 : index
    %c5_191 = arith.constant 5 : index
    %c0_192 = arith.constant 0 : index
    %c0_193 = arith.constant 0 : index
    %169 = vector.load %arg2[%c0_190, %c5_191, %c0_192, %c0_193] : memref<1x8x16x128xbf16, #tpu.memory_space<vmem>>, vector<1x3x16x128xbf16>
    %170 = vector.shape_cast %169 : vector<1x3x16x128xbf16> to vector<3x16x128xbf16>
    %171 = arith.extf %170 : vector<3x16x128xbf16> to vector<3x16x128xf32>
    %172 = vector.shape_cast %168 : vector<48x128xf32> to vector<3x16x128xf32>
    %cst_194 = arith.constant 1.000000e+00 : f32
    %173 = vector.broadcast %cst_194 : f32 to vector<3x16x128xf32>
    %174 = arith.mulf %172, %173 : vector<3x16x128xf32>
    %175 = arith.addf %171, %174 : vector<3x16x128xf32>
    %176 = arith.truncf %175 : vector<3x16x128xf32> to vector<3x16x128xbf16>
    %c0_195 = arith.constant 0 : index
    %c5_196 = arith.constant 5 : index
    %c0_197 = arith.constant 0 : index
    %c0_198 = arith.constant 0 : index
    %177 = vector.load %arg9[%c0_195, %c5_196, %c0_197, %c0_198] : memref<1x8x16x128xbf16, #tpu.memory_space<vmem>>, vector<1x3x16x128xbf16>
    %178 = vector.shape_cast %177 : vector<1x3x16x128xbf16> to vector<3x16x128xbf16>
    %179 = vector.shape_cast %176 : vector<3x16x128xbf16> to vector<1x3x16x128xbf16>
    tpu.vector_store %arg9[%c0_195, %c5_196, %c0_197, %c0_198], %179 {strides = array<i32>} : memref<1x8x16x128xbf16, #tpu.memory_space<vmem>>, vector<1x3x16x128xbf16>,
    return
  }
  func.func @transform_0(%arg0: i32, %arg1: i32) -> (i32, i32, i32, i32) {
    %c0_i32 = arith.constant 0 : i32
    %c0_i32_0 = arith.constant 0 : i32
    %c0_i32_1 = arith.constant 0 : i32
    return %arg0, %arg1, %c0_i32, %c0_i32_0 : i32, i32, i32, i32
  }
  func.func @transform_1(%arg0: i32, %arg1: i32) -> (i32, i32, i32, i32) {
    %c4_i32 = arith.constant 4 : i32
    %0 = arith.muli %arg1, %c4_i32 : i32
    %c1_i32 = arith.constant 1 : i32
    %1 = arith.subi %0, %c1_i32 : i32
    %c0_i32 = arith.constant 0 : i32
    %2 = arith.maxsi %1, %c0_i32 : i32
    %c0_i32_0 = arith.constant 0 : i32
    %c0_i32_1 = arith.constant 0 : i32
    %c0_i32_2 = arith.constant 0 : i32
    return %arg0, %2, %c0_i32_0, %c0_i32_1 : i32, i32, i32, i32
  }
  func.func @transform_2(%arg0: i32, %arg1: i32) -> (i32, i32, i32, i32) {
    %c1_i32 = arith.constant 1 : i32
    %0 = arith.addi %arg1, %c1_i32 : i32
    %c4_i32 = arith.constant 4 : i32
    %1 = arith.muli %0, %c4_i32 : i32
    %c7_i32 = arith.constant 7 : i32
    %2 = arith.minsi %1, %c7_i32 : i32
    %c0_i32 = arith.constant 0 : i32
    %c0_i32_0 = arith.constant 0 : i32
    %c0_i32_1 = arith.constant 0 : i32
    return %arg0, %2, %c0_i32, %c0_i32_0 : i32, i32, i32, i32
  }
  func.func @transform_3(%arg0: i32, %arg1: i32) -> (i32, i32) {
    %c0_i32 = arith.constant 0 : i32
    %c0_i32_0 = arith.constant 0 : i32
    %c0_i32_1 = arith.constant 0 : i32
    return %c0_i32, %c0_i32_0 : i32, i32
  }
  func.func @transform_4(%arg0: i32, %arg1: i32) -> (i32, i32) {
    %c0_i32 = arith.constant 0 : i32
    %c0_i32_0 = arith.constant 0 : i32
    %c0_i32_1 = arith.constant 0 : i32
    return %c0_i32, %c0_i32_0 : i32, i32
  }
  func.func @transform_5(%arg0: i32, %arg1: i32) -> (i32, i32) {
    %c0_i32 = arith.constant 0 : i32
    %c0_i32_0 = arith.constant 0 : i32
    %c0_i32_1 = arith.constant 0 : i32
    return %c0_i32, %c0_i32_0 : i32, i32
  }
  func.func @transform_6(%arg0: i32, %arg1: i32) -> (i32, i32) {
    %c0_i32 = arith.constant 0 : i32
    %c0_i32_0 = arith.constant 0 : i32
    %c0_i32_1 = arith.constant 0 : i32
    return %c0_i32, %c0_i32_0 : i32, i32
  }
  func.func @transform_7(%arg0: i32, %arg1: i32) -> (i32, i32, i32, i32) {
    %c0_i32 = arith.constant 0 : i32
    %c0_i32_0 = arith.constant 0 : i32
    %c0_i32_1 = arith.constant 0 : i32
    return %arg0, %arg1, %c0_i32, %c0_i32_0 : i32, i32, i32, i32
  }
}

</mosaic_0001>

<llo_original>
// kernel: tpu_custom_call.1
$region0: #{tpu_custom_call.1}
  #allocation0 [shape = 'u32[]', space=smem, size = 0x4, offset = 0x4, fixed_abs, tag = 'smem constant byte address 0x4 - core index']
  #allocation1 [shape = 'u32[144,128]{1,0:T(1,128)}', space=vmem, size = 0x12000, scoped, tag = 'internal scratch']
  #allocation2 [shape = 'bf16[12,18,4]{2,1,0:T(8,128)(2,1)}', space=vmem, size = 0x12000, scoped, tag = 'scratch operand']
  #allocation3 [shape = 'bf16[10,18,4]{2,1,0:T(8,128)(2,1)}', space=vmem, size = 0xf000, scoped, tag = 'scratch operand']
  #allocation4 [shape = 'bf16[160,128]{1,0:T(16,128)(2,1)}', space=vmem, size = 0xa000, scoped, tag = 'scratch operand']
  %s0 = inlined_call_operand.hbm [shape: bf16[2,16,16,128], index: 0, kind: input, shape index: {}]
  %s1 = inlined_call_operand.hbm [shape: bf16[2,16,16,128], index: 1, kind: input, shape index: {}]
  %s2 = inlined_call_operand.hbm [shape: bf16[2,16,16,128], index: 2, kind: input, shape index: {}]
  %s3 = inlined_call_operand.hbm [shape: bf16[128,128], index: 3, kind: input, shape index: {}]
  %s4 = inlined_call_operand.vmem [shape: f32[1,128], index: 4, kind: input, shape index: {}]
  %s5 = inlined_call_operand.hbm [shape: bf16[128,128], index: 5, kind: input, shape index: {}]
  %s6 = inlined_call_operand.vmem [shape: f32[1,128], index: 6, kind: input, shape index: {}]
  %s7 = inlined_call_operand.hbm [shape: bf16[2,16,16,128], index: 7, kind: output, shape index: {}]
  %s8 = sld [smem:[#allocation0]]
  $region89: #{tpu_custom_call.1} parent=0
    _
  %s10 = ssub.s32 1, %s8
  %s11 = scalar_select 0, %s10, %s8
  $region1: #{tpu_custom_call.1} parent=0
    #allocation5 [shape = 'u8[65536]{0}', space=vmem, size = 0x10000, scoped, tag = 'input window, operand 0']
    #allocation6 [shape = 's32[2]{0}', space=sflag, size = 0x8, scoped, tag = 'scoped memory for tpu_custom_call.1']
    #allocation7 [shape = 's32[2]{0}', space=sflag, size = 0x8, scoped, tag = 'scoped memory for tpu_custom_call.1']
    #allocation8 [shape = 'u8[16384]{0}', space=vmem, size = 0x4000, scoped, tag = 'input window, operand 1']
    #allocation9 [shape = 's32[2]{0}', space=sflag, size = 0x8, scoped, tag = 'scoped memory for tpu_custom_call.1']
    #allocation10 [shape = 'u8[16384]{0}', space=vmem, size = 0x4000, scoped, tag = 'input window, operand 2']
    #allocation11 [shape = 'u8[32768]{0}', space=vmem, size = 0x8000, scoped, tag = 'input window, operand 3, single buffered']
    #allocation12 [shape = 's32[1]{0}', space=sflag, size = 0x4, scoped, tag = 'scoped memory for tpu_custom_call.1']
    #allocation13 [shape = 'u8[32768]{0}', space=vmem, size = 0x8000, scoped, tag = 'input window, operand 5, single buffered']
    #allocation14 [shape = 'u8[65536]{0}', space=vmem, size = 0x10000, scoped, tag = 'output window, operand 0']
    %12 = vsyncpa [#allocation6], 0
    %s13 = scalar_lea.sflag [#allocation6], 1
    %14 = vsyncpa %s13, 0
    %15 = vsyncpa [#allocation9], 0
    %s16 = scalar_lea.sflag [#allocation9], 1
    %17 = vsyncpa %s16, 0
    %18 = vsyncpa [#allocation12], 0
    %19 = vsyncpa [#allocation7], 0
    %s20 = scalar_lea.sflag [#allocation7], 1
    %21 = vsyncpa %s20, 0
    loop: start=0, step=1, limit=6
    $region2: #{tpu_custom_call.1} parent=1 // loop_pre_header
      _
    $region3: #{tpu_custom_call.1} parent=1 // loop_header
      %s23 = sphi 0, %s27
      %p24 = scmp.ge.s32.totalorder %s23, 6
      %s30 = sphi 0, %s42
      %s31 = sphi 0, %s38
      %s32 = sphi 0, %s30
      %s33 = sphi 0, %s31
      %s34 = sphi 0, %s32
      %s35 = sphi 0, %s33
      %s47 = sphi 0, %s49
      %s50 = sphi 0, %s47
      %s51 = sphi 0, %s50
      %s67 = sphi 0, %s51
      %s83 = sphi 0, %s85
      %s86 = sphi 0, %s83
      %s87 = sphi 0, %s86
      %s103 = sphi 0, %s87
      %s119 = sphi 0, %s121
      %s122 = sphi 0, %s119
      %s123 = sphi 0, %s122
      %s139 = sphi 0, %s123
      %s143 = sphi 0, %s143
      %s145 = sphi 0, %s143
      %s146 = sphi 0, %s145
      %s160 = sphi 0, %s146
      %s164 = sphi 0, %s164
      %s166 = sphi 0, %s164
      %s167 = sphi 0, %s166
      %s181 = sphi 0, %s167
      %s185 = sphi 0, %s185
      %s187 = sphi 0, %s185
      %s188 = sphi 0, %s187
      %s202 = sphi 0, %s188
      %s206 = sphi 0, %s206
      %s208 = sphi 0, %s206
      %s209 = sphi 0, %s208
      %s223 = sphi 0, %s209
      %s231 = sphi 0, %s233
      %s234 = sphi 0, %s231
      %s235 = sphi 0, %s234
      %s251 = sphi 0, %s235
    $region4: #{tpu_custom_call.1} parent=1 // loop_header_branch
      %26 = sbr.rel (%p24) target = $region8
    $region5: #{tpu_custom_call.1} parent=1 // loop_body
      %s28 = ssub.s32 %s23, 1
      %s29 = ssub.s32 %s23, 2
      %s36 = sadd.s32 1, %s31
      %p37 = scmp.ge.s32.totalorder %s36, 2
      %s38 = scalar_select %p37, 0, %s36
      %s39 = sadd.s32 1, %s30
      %s40 = scalar_select %p37, %s39, %s30
      %p41 = scmp.ge.s32.totalorder %s40, 2
      %s42 = scalar_select %p41, 0, %s40
      %s43 = ssub.s32 %s30, %s42
      %s44 = ssub.s32 %s31, %s38
      %s45 = sor.u32 %s43, %s44
      %p46 = scmp.eq.s32.totalorder %s45, 0
      %s48 = sadd.s32 %s47, 1
      %s49 = scalar_select %p46, %s47, %s48
      %p52 = pneg %p46
      %p53 = scmp.eq.s32.totalorder %s23, 3
      %p54 = por %p52, %p53
      %p55 = scmp.ne.s32.totalorder %s47, %s50
      %p56 = scmp.eq.s32.totalorder %s23, 0
      %p57 = por %p55, %p56
      %p58 = scmp.ne.s32.totalorder %s47, %s50
      %p59 = scmp.eq.s32.totalorder %s28, 3
      %p60 = por %p58, %p59
      %p61 = scmp.ne.s32.totalorder %s50, %s51
      %p62 = scmp.eq.s32.totalorder %s28, 0
      %p63 = por %p61, %p62
      %p64 = scmp.ne.s32.totalorder %s50, %s51
      %p65 = scmp.eq.s32.totalorder %s29, 3
      %p66 = por %p64, %p65
      %p68 = scmp.ne.s32.totalorder %s51, %s67
      %p69 = scmp.eq.s32.totalorder %s29, 0
      %p70 = por %p68, %p69
      %s71 = smul.u32 %s31, 4
      %s72 = ssub.s32 %s71, 1
      %p73 = scmp.gt.s32.totalorder %s72, 0
      %s74 = scalar_select %p73, %s72, 0
      %s75 = smul.u32 %s38, 4
      %s76 = ssub.s32 %s75, 1
      %p77 = scmp.gt.s32.totalorder %s76, 0
      %s78 = scalar_select %p77, %s76, 0
      %s79 = ssub.s32 %s30, %s42
      %s80 = ssub.s32 %s74, %s78
      %s81 = sor.u32 %s79, %s80
      %p82 = scmp.eq.s32.totalorder %s81, 0
      %s84 = sadd.s32 %s83, 1
      %s85 = scalar_select %p82, %s83, %s84
      %p88 = pneg %p82
      %p89 = scmp.eq.s32.totalorder %s23, 3
      %p90 = por %p88, %p89
      %p91 = scmp.ne.s32.totalorder %s83, %s86
      %p92 = scmp.eq.s32.totalorder %s23, 0
      %p93 = por %p91, %p92
      %p94 = scmp.ne.s32.totalorder %s83, %s86
      %p95 = scmp.eq.s32.totalorder %s28, 3
      %p96 = por %p94, %p95
      %p97 = scmp.ne.s32.totalorder %s86, %s87
      %p98 = scmp.eq.s32.totalorder %s28, 0
      %p99 = por %p97, %p98
      %p100 = scmp.ne.s32.totalorder %s86, %s87
      %p101 = scmp.eq.s32.totalorder %s29, 3
      %p102 = por %p100, %p101
      %p104 = scmp.ne.s32.totalorder %s87, %s103
      %p105 = scmp.eq.s32.totalorder %s29, 0
      %p106 = por %p104, %p105
      %s107 = sadd.s32 %s31, 1
      %s108 = smul.u32 %s107, 4
      %p109 = scmp.lt.s32.totalorder %s108, 7
      %s110 = scalar_select %p109, %s108, 7
      %s111 = sadd.s32 %s38, 1
      %s112 = smul.u32 %s111, 4
      %p113 = scmp.lt.s32.totalorder %s112, 7
      %s114 = scalar_select %p113, %s112, 7
      %s115 = ssub.s32 %s30, %s42
      %s116 = ssub.s32 %s110, %s114
      %s117 = sor.u32 %s115, %s116
      %p118 = scmp.eq.s32.totalorder %s117, 0
      %s120 = sadd.s32 %s119, 1
      %s121 = scalar_select %p118, %s119, %s120
      %p124 = pneg %p118
      %p125 = scmp.eq.s32.totalorder %s23, 3
      %p126 = por %p124, %p125
      %p127 = scmp.ne.s32.totalorder %s119, %s122
      %p128 = scmp.eq.s32.totalorder %s23, 0
      %p129 = por %p127, %p128
      %p130 = scmp.ne.s32.totalorder %s119, %s122
      %p131 = scmp.eq.s32.totalorder %s28, 3
      %p132 = por %p130, %p131
      %p133 = scmp.ne.s32.totalorder %s122, %s123
      %p134 = scmp.eq.s32.totalorder %s28, 0
      %p135 = por %p133, %p134
      %p136 = scmp.ne.s32.totalorder %s122, %s123
      %p137 = scmp.eq.s32.totalorder %s29, 3
      %p138 = por %p136, %p137
      %p140 = scmp.ne.s32.totalorder %s123, %s139
      %p141 = scmp.eq.s32.totalorder %s29, 0
      %p142 = por %p140, %p141
      %s144 = sadd.s32 %s143, 1
      %p147 = scmp.eq.s32.totalorder %s23, 3
      %p148 = scmp.ne.s32.totalorder %s143, %s145
      %p149 = scmp.eq.s32.totalorder %s23, 0
      %p150 = por %p148, %p149
      %p151 = scmp.ne.s32.totalorder %s143, %s145
      %p152 = scmp.eq.s32.totalorder %s28, 3
      %p153 = por %p151, %p152
      %p154 = scmp.ne.s32.totalorder %s145, %s146
      %p155 = scmp.eq.s32.totalorder %s28, 0
      %p156 = por %p154, %p155
      %p157 = scmp.ne.s32.totalorder %s145, %s146
      %p158 = scmp.eq.s32.totalorder %s29, 3
      %p159 = por %p157, %p158
      %p161 = scmp.ne.s32.totalorder %s146, %s160
      %p162 = scmp.eq.s32.totalorder %s29, 0
      %p163 = por %p161, %p162
      %s165 = sadd.s32 %s164, 1
      %p168 = scmp.eq.s32.totalorder %s23, 3
      %p169 = scmp.ne.s32.totalorder %s164, %s166
      %p170 = scmp.eq.s32.totalorder %s23, 0
      %p171 = por %p169, %p170
      %p172 = scmp.ne.s32.totalorder %s164, %s166
      %p173 = scmp.eq.s32.totalorder %s28, 3
      %p174 = por %p172, %p173
      %p175 = scmp.ne.s32.totalorder %s166, %s167
      %p176 = scmp.eq.s32.totalorder %s28, 0
      %p177 = por %p175, %p176
      %p178 = scmp.ne.s32.totalorder %s166, %s167
      %p179 = scmp.eq.s32.totalorder %s29, 3
      %p180 = por %p178, %p179
      %p182 = scmp.ne.s32.totalorder %s167, %s181
      %p183 = scmp.eq.s32.totalorder %s29, 0
      %p184 = por %p182, %p183
      %s186 = sadd.s32 %s185, 1
      %p189 = scmp.eq.s32.totalorder %s23, 3
      %p190 = scmp.ne.s32.totalorder %s185, %s187
      %p191 = scmp.eq.s32.totalorder %s23, 0
      %p192 = por %p190, %p191
      %p193 = scmp.ne.s32.totalorder %s185, %s187
      %p194 = scmp.eq.s32.totalorder %s28, 3
      %p195 = por %p193, %p194
      %p196 = scmp.ne.s32.totalorder %s187, %s188
      %p197 = scmp.eq.s32.totalorder %s28, 0
      %p198 = por %p196, %p197
      %p199 = scmp.ne.s32.totalorder %s187, %s188
      %p200 = scmp.eq.s32.totalorder %s29, 3
      %p201 = por %p199, %p200
      %p203 = scmp.ne.s32.totalorder %s188, %s202
      %p204 = scmp.eq.s32.totalorder %s29, 0
      %p205 = por %p203, %p204
      %s207 = sadd.s32 %s206, 1
      %p210 = scmp.eq.s32.totalorder %s23, 3
      %p211 = scmp.ne.s32.totalorder %s206, %s208
      %p212 = scmp.eq.s32.totalorder %s23, 0
      %p213 = por %p211, %p212
      %p214 = scmp.ne.s32.totalorder %s206, %s208
      %p215 = scmp.eq.s32.totalorder %s28, 3
      %p216 = por %p214, %p215
      %p217 = scmp.ne.s32.totalorder %s208, %s209
      %p218 = scmp.eq.s32.totalorder %s28, 0
      %p219 = por %p217, %p218
      %p220 = scmp.ne.s32.totalorder %s208, %s209
      %p221 = scmp.eq.s32.totalorder %s29, 3
      %p222 = por %p220, %p221
      %p224 = scmp.ne.s32.totalorder %s209, %s223
      %p225 = scmp.eq.s32.totalorder %s29, 0
      %p226 = por %p224, %p225
      %s227 = ssub.s32 %s30, %s42
      %s228 = ssub.s32 %s31, %s38
      %s229 = sor.u32 %s227, %s228
      %p230 = scmp.eq.s32.totalorder %s229, 0
      %s232 = sadd.s32 %s231, 1
      %s233 = scalar_select %p230, %s231, %s232
      %p236 = pneg %p230
      %p237 = scmp.eq.s32.totalorder %s23, 3
      %p238 = por %p236, %p237
      %p239 = scmp.ne.s32.totalorder %s231, %s234
      %p240 = scmp.eq.s32.totalorder %s23, 0
      %p241 = por %p239, %p240
      %p242 = scmp.ne.s32.totalorder %s231, %s234
      %p243 = scmp.eq.s32.totalorder %s28, 3
      %p244 = por %p242, %p243
      %p245 = scmp.ne.s32.totalorder %s234, %s235
      %p246 = scmp.eq.s32.totalorder %s28, 0
      %p247 = por %p245, %p246
      %p248 = scmp.ne.s32.totalorder %s234, %s235
      %p249 = scmp.eq.s32.totalorder %s29, 3
      %p250 = por %p248, %p249
      %p252 = scmp.ne.s32.totalorder %s235, %s251
      %p253 = scmp.eq.s32.totalorder %s29, 0
      %p254 = por %p252, %p253
      %p255 = scmp.le.s32.totalorder 1, %s23
      %p256 = scmp.lt.s32.totalorder %s23, 5
      %p257 = pnand %p255, %p256
      %p258 = pneg %p257
      // Predicated region
      $region9: #{tpu_custom_call.1} parent=5 // pred_check
        _
      $region10: #{tpu_custom_call.1} parent=5 // pred_check_branch
        %260 = sbr.rel (%p257) target = $region12
      $region11: #{tpu_custom_call.1} parent=5 // pred_region
        %s261 = ssub.s32 %s23, 1
        // Predicated region
        $region13: #{tpu_custom_call.1} parent=11 // pred_check
          %p262 = pneg %p156
        $region14: #{tpu_custom_call.1} parent=11 // pred_check_branch
          %264 = sbr.rel (%p262) target = $region16
        $region15: #{tpu_custom_call.1} parent=11 // pred_region
          %s266 = ssub.s32 1024, 1024
          %267 = vsyncadd [#allocation12], %s266
          %s268 = sshll.u32 [#allocation11], 4
          %s269 = int_to_ptr.vmem [resolvable:$true] %s268
          %274 = dma.hbm_to_vmem [thread:$0]  %s3, 1024, %s269, [#allocation12], 64, 64, 4
        $region16: #{tpu_custom_call.1} parent=11 // pred_fallthru
          _
        // Predicated region
        $region17: #{tpu_custom_call.1} parent=11 // pred_check
          %p275 = pneg %p177
        $region18: #{tpu_custom_call.1} parent=11 // pred_check_branch
          %277 = sbr.rel (%p275) target = $region20
        $region19: #{tpu_custom_call.1} parent=11 // pred_region
          _
        $region20: #{tpu_custom_call.1} parent=11 // pred_fallthru
          _
        // Predicated region
        $region21: #{tpu_custom_call.1} parent=11 // pred_check
          %p278 = pneg %p198
        $region22: #{tpu_custom_call.1} parent=11 // pred_check_branch
          %280 = sbr.rel (%p278) target = $region24
        $region23: #{tpu_custom_call.1} parent=11 // pred_region
          %s282 = ssub.s32 1024, 1024
          %283 = vsyncadd [#allocation12], %s282
          %s284 = sshll.u32 [#allocation13], 4
          %s285 = int_to_ptr.vmem [resolvable:$true] %s284
          %290 = dma.hbm_to_vmem [thread:$0]  %s5, 1024, %s285, [#allocation12], 64, 64, 4
        $region24: #{tpu_custom_call.1} parent=11 // pred_fallthru
          _
        // Predicated region
        $region25: #{tpu_custom_call.1} parent=11 // pred_check
          %p291 = pneg %p219
        $region26: #{tpu_custom_call.1} parent=11 // pred_check_branch
          %293 = sbr.rel (%p291) target = $region28
        $region27: #{tpu_custom_call.1} parent=11 // pred_region
          _
        $region28: #{tpu_custom_call.1} parent=11 // pred_fallthru
          _
      $region12: #{tpu_custom_call.1} parent=5 // pred_fallthru
        _
      %p294 = scmp.lt.s32.totalorder %s23, 4
      // Predicated region
      $region29: #{tpu_custom_call.1} parent=5 // pred_check
        %p295 = pneg %p294
      $region30: #{tpu_custom_call.1} parent=5 // pred_check_branch
        %297 = sbr.rel (%p295) target = $region32
      $region31: #{tpu_custom_call.1} parent=5 // pred_region
        // Predicated region
        $region33: #{tpu_custom_call.1} parent=31 // pred_check
          %p298 = pneg %p57
        $region34: #{tpu_custom_call.1} parent=31 // pred_check_branch
          %300 = sbr.rel (%p298) target = $region36
        $region35: #{tpu_custom_call.1} parent=31 // pred_region
          %s301 = sand.u32 %s47, 1
          %s302 = scalar_lea.sflag [#allocation6], %s301
          %s303 = sand.u32 %s47, 1
          %s304 = smul.addr %s303, 64
          %s305 = scalar_lea.vmem [#allocation5], %s304
          %s306 = smul.u32 8, %s31
          %s308 = ssub.s32 1024, 1024
          %309 = vsyncadd %s302, %s308
          %s310 = smul.addr %s306, 2
          %s311 = smul.addr %s30, 32
          %s312 = sadd.s32 %s310, %s311
          %s313 = smul.addr %s312, 64
          %s314 = scalar_lea.hbm %s0, %s313
          %s315 = sshll.u32 %s305, 4
          %s316 = int_to_ptr.vmem [resolvable:$true] %s315
          %321 = dma.hbm_to_vmem [thread:$0]  %s314, 1024, %s316, %s302, 64, 64, 4
        $region36: #{tpu_custom_call.1} parent=31 // pred_fallthru
          _
        // Predicated region
        $region37: #{tpu_custom_call.1} parent=31 // pred_check
          %p322 = pneg %p93
        $region38: #{tpu_custom_call.1} parent=31 // pred_check_branch
          %324 = sbr.rel (%p322) target = $region40
        $region39: #{tpu_custom_call.1} parent=31 // pred_region
          %s325 = sand.u32 %s23, 1
          %s326 = scalar_lea.sflag [#allocation9], %s325
          %s327 = sand.u32 %s83, 1
          %s328 = smul.addr %s327, 16
          %s329 = scalar_lea.vmem [#allocation8], %s328
          %s330 = smul.u32 %s31, 4
          %s331 = ssub.s32 %s330, 1
          %p332 = scmp.gt.s32.totalorder %s331, 0
          %s333 = scalar_select %p332, %s331, 0
          %s334 = smul.u32 2, %s333
          %s336 = ssub.s32 256, 256
          %337 = vsyncadd %s326, %s336
          %s338 = smul.addr %s334, 2
          %s339 = smul.addr %s30, 32
          %s340 = sadd.s32 %s338, %s339
          %s341 = smul.addr %s340, 64
          %s342 = scalar_lea.hbm %s1, %s341
          %s343 = sshll.u32 %s329, 4
          %s344 = int_to_ptr.vmem [resolvable:$true] %s343
          %349 = dma.hbm_to_vmem [thread:$0]  %s342, 256, %s344, %s326, 64, 64, 4
        $region40: #{tpu_custom_call.1} parent=31 // pred_fallthru
          _
        // Predicated region
        $region41: #{tpu_custom_call.1} parent=31 // pred_check
          %p350 = pneg %p129
        $region42: #{tpu_custom_call.1} parent=31 // pred_check_branch
          %352 = sbr.rel (%p350) target = $region44
        $region43: #{tpu_custom_call.1} parent=31 // pred_region
          %s353 = sand.u32 %s23, 1
          %s354 = scalar_lea.sflag [#allocation9], %s353
          %s355 = sand.u32 %s119, 1
          %s356 = smul.addr %s355, 16
          %s357 = scalar_lea.vmem [#allocation10], %s356
          %s358 = sadd.s32 %s31, 1
          %s359 = smul.u32 %s358, 4
          %p360 = scmp.lt.s32.totalorder %s359, 7
          %s361 = scalar_select %p360, %s359, 7
          %s362 = smul.u32 2, %s361
          %s364 = ssub.s32 256, 256
          %365 = vsyncadd %s354, %s364
          %s366 = smul.addr %s362, 2
          %s367 = smul.addr %s30, 32
          %s368 = sadd.s32 %s366, %s367
          %s369 = smul.addr %s368, 64
          %s370 = scalar_lea.hbm %s2, %s369
          %s371 = sshll.u32 %s357, 4
          %s372 = int_to_ptr.vmem [resolvable:$true] %s371
          %377 = dma.hbm_to_vmem [thread:$0]  %s370, 256, %s372, %s354, 64, 64, 4
        $region44: #{tpu_custom_call.1} parent=31 // pred_fallthru
          _
      $region32: #{tpu_custom_call.1} parent=5 // pred_fallthru
        _
      %p378 = scmp.le.s32.totalorder 1, %s23
      %p379 = scmp.lt.s32.totalorder %s23, 5
      %p380 = pnand %p378, %p379
      %p381 = pneg %p380
      // Predicated region
      $region45: #{tpu_custom_call.1} parent=5 // pred_check
        _
      $region46: #{tpu_custom_call.1} parent=5 // pred_check_branch
        %383 = sbr.rel (%p380) target = $region48
      $region47: #{tpu_custom_call.1} parent=5 // pred_region
        %s384 = ssub.s32 %s23, 1
        %s385 = sand.u32 %s50, 1
        %s386 = scalar_lea.sflag [#allocation6], %s385
        %s387 = sand.u32 %s50, 1
        %s388 = smul.addr %s387, 64
        %s389 = scalar_lea.vmem [#allocation5], %s388
        // Predicated region
        $region49: #{tpu_custom_call.1} parent=47 // pred_check
          %p390 = pneg %p63
        $region50: #{tpu_custom_call.1} parent=47 // pred_check_branch
          %392 = sbr.rel (%p390) target = $region52
        $region51: #{tpu_custom_call.1} parent=47 // pred_region
          %393 = dma.done %s386, 1024
        $region52: #{tpu_custom_call.1} parent=47 // pred_fallthru
          _
        %s394 = sand.u32 %s28, 1
        %s395 = scalar_lea.sflag [#allocation9], %s394
        %s396 = sand.u32 %s86, 1
        %s397 = smul.addr %s396, 16
        %s398 = scalar_lea.vmem [#allocation8], %s397
        // Predicated region
        $region53: #{tpu_custom_call.1} parent=47 // pred_check
          %p399 = pneg %p99
        $region54: #{tpu_custom_call.1} parent=47 // pred_check_branch
          %401 = sbr.rel (%p399) target = $region56
        $region55: #{tpu_custom_call.1} parent=47 // pred_region
          %402 = dma.done %s395, 256
        $region56: #{tpu_custom_call.1} parent=47 // pred_fallthru
          _
        %s403 = sand.u32 %s28, 1
        %s404 = scalar_lea.sflag [#allocation9], %s403
        %s405 = sand.u32 %s122, 1
        %s406 = smul.addr %s405, 16
        %s407 = scalar_lea.vmem [#allocation10], %s406
        // Predicated region
        $region57: #{tpu_custom_call.1} parent=47 // pred_check
          %p408 = pneg %p135
        $region58: #{tpu_custom_call.1} parent=47 // pred_check_branch
          %410 = sbr.rel (%p408) target = $region60
        $region59: #{tpu_custom_call.1} parent=47 // pred_region
          %411 = dma.done %s404, 256
        $region60: #{tpu_custom_call.1} parent=47 // pred_fallthru
          _
        // Predicated region
        $region61: #{tpu_custom_call.1} parent=47 // pred_check
          %p412 = pneg %p156
        $region62: #{tpu_custom_call.1} parent=47 // pred_check_branch
          %414 = sbr.rel (%p412) target = $region64
        $region63: #{tpu_custom_call.1} parent=47 // pred_region
          %415 = dma.done [#allocation12], 1024
        $region64: #{tpu_custom_call.1} parent=47 // pred_fallthru
          _
        // Predicated region
        $region65: #{tpu_custom_call.1} parent=47 // pred_check
          %p416 = pneg %p198
        $region66: #{tpu_custom_call.1} parent=47 // pred_check_branch
          %418 = sbr.rel (%p416) target = $region68
        $region67: #{tpu_custom_call.1} parent=47 // pred_region
          %419 = dma.done [#allocation12], 1024
        $region68: #{tpu_custom_call.1} parent=47 // pred_fallthru
          _
        %s420 = sand.u32 %s50, 1
        %s421 = scalar_lea.sflag [#allocation6], %s420
        %s422 = sand.u32 %s50, 1
        %s423 = smul.addr %s422, 64
        %s424 = scalar_lea.vmem [#allocation5], %s423
        %p425 = pneg %p63
        %p426 = pneg %p60
        %s427 = sand.u32 %s28, 1
        %s428 = scalar_lea.sflag [#allocation9], %s427
        %s429 = sand.u32 %s86, 1
        %s430 = smul.addr %s429, 16
        %s431 = scalar_lea.vmem [#allocation8], %s430
        %p432 = pneg %p99
        %p433 = pneg %p96
        %s434 = sand.u32 %s28, 1
        %s435 = scalar_lea.sflag [#allocation9], %s434
        %s436 = sand.u32 %s122, 1
        %s437 = smul.addr %s436, 16
        %s438 = scalar_lea.vmem [#allocation10], %s437
        %p439 = pneg %p135
        %p440 = pneg %p132
        %p441 = pneg %p156
        %p442 = pneg %p153
        %p443 = pneg %p177
        %p444 = pneg %p174
        %p445 = pneg %p198
        %p446 = pneg %p195
        %p447 = pneg %p219
        %p448 = pneg %p216
        %p449 = pneg %p247
        %p450 = pneg %p244
        %s451 = sand.u32 %s234, 1
        %s452 = scalar_lea.sflag [#allocation7], %s451
        %s453 = sand.u32 %s234, 1
        %s454 = smul.addr %s453, 64
        %s455 = scalar_lea.vmem [#allocation14], %s454
        %s456 = smul.u32 8, %s33
        %s457 = smul.u32 %s33, 4
        %s458 = ssub.s32 %s457, 1
        %p459 = scmp.gt.s32.totalorder %s458, 0
        %s460 = scalar_select %p459, %s458, 0
        %s461 = smul.u32 2, %s460
        %s462 = sadd.s32 %s33, 1
        %s463 = smul.u32 %s462, 4
        %p464 = scmp.lt.s32.totalorder %s463, 7
        %s465 = scalar_select %p464, %s463, 7
        %s466 = smul.u32 2, %s465
        %s467 = smul.u32 8, %s33
        %p469 = scmp.gt.s32.totalorder %s33, 0
        %s470 = scalar_select %p469, 1.0, 0.0
        %p472 = scmp.ne.f32.partialorder %s470, %s470
        %s473 = sshrl.u32 %s470, 16
        %s474 = sand.u32 %s473, 1
        %s475 = sadd.s32 32767, %s474
        %s476 = sadd.s32 %s470, %s475
        %s477 = sand.u32 %s476, 4294901760
        %s478 = scalar_select %p472, 2143289344, %s477
        %s480 = sshrl.u32 %s478, 16
        %p481 = scmp.lt.s32.totalorder %s33, 1
        %s482 = scalar_select %p481, 1.0, 0.0
        %p484 = scmp.ne.f32.partialorder %s482, %s482
        %s485 = sshrl.u32 %s482, 16
        %s486 = sand.u32 %s485, 1
        %s487 = sadd.s32 32767, %s486
        %s488 = sadd.s32 %s482, %s487
        %s489 = sand.u32 %s488, 4294901760
        %s490 = scalar_select %p484, 2143289344, %s489
        %s492 = sshrl.u32 %s490, 16
        %v493 = vld [vmem:[%s398] sm:$0xf]
        %v494 = vld [vmem:[%s398 + $0x4] sm:$0xf]
        %v495 = vld [vmem:[%s398 + $0x8] sm:$0xf]
        %v496 = vld [vmem:[%s398 + $0xc] sm:$0xf]
        %s497 = sshll.u32 %s480, 16
        %s498 = sor.u32 %s480, %s497
        %v499 = vstv %s498
        %v501 = vmul.bf16 %v493, %v499
        %v502 = vmul.bf16 %v494, %v499
        %v503 = vmul.bf16 %v495, %v499
        %v504 = vmul.bf16 %v496, %v499
        %v509 = vunpack.c.l.b16 %v501
        %v510 = vunpack.c.l.b16 %v502
        %v511 = vunpack.c.l.b16 %v503
        %v512 = vunpack.c.l.b16 %v504
        %v513 = vpack.c.b16 %v510, %v509
        %v514 = vpack.c.b16 %v512, %v511
        %v516 = vshrl.u32 %v513, 16
        %v518 = vrot.slane %v516, 7
        %v519 = vshll.u32 %v513, 16
        %v521 = vor.u32 %v518, %v519
        %v523 = vshrl.u32 %v514, 16
        %v525 = vrot.slane %v523, 7
        %v526 = vshll.u32 %v514, 16
        %v528 = vor.u32 %v525, %v526
        %vm533 = vcmask 1040384
        %vm534 = vsmask.f32 256
        %vm535 = vmand %vm533, %vm534
        %v536 = vsel %vm535, 0, %v521
        %v537 = vsel %vm535, 0, %v528
        %v538 = vsel %vm535, %v518, 0
        %v539 = vsel %vm535, %v525, 0
        %v544 = vunpack.c.l.b16 %v536
        %v545 = vunpack.c.h.b16 %v536
        %v546 = vunpack.c.l.b16 %v538
        %v547 = vunpack.c.l.b16 %v537
        %v548 = vunpack.c.h.b16 %v537
        %v549 = vunpack.c.l.b16 %v539
        %v550 = vpack.c.b16 %v544, %v544
        %v551 = vpack.c.b16 %v545, %v545
        %v552 = vpack.c.b16 %v546, %v546
        %v553 = vpack.c.b16 %v547, %v547
        %v554 = vpack.c.b16 %v548, %v548
        %v555 = vpack.c.b16 %v549, %v549
        %vm562 = vcmask 27648
        %563 = vst.msk [vmem:[#allocation2] sm:$0xf] %vm562, %v550
        %564 = vst.msk [vmem:[#allocation2 + $0x4] sm:$0xf] %vm562, %v551
        %vm565 = vcmask 24576
        %566 = vst.msk [vmem:[#allocation2 + $0x8] sm:$0x1] %vm565, %v552
        %567 = vst.msk [vmem:[#allocation2 + $0xc] sm:$0xf] %vm562, %v553
        %568 = vst.msk [vmem:[#allocation2 + $0x10] sm:$0xf] %vm562, %v554
        %569 = vst.msk [vmem:[#allocation2 + $0x14] sm:$0x1] %vm565, %v555
        %v570 = vld [vmem:[%s389] sm:$0xf]
        %v571 = vld [vmem:[%s389 + $0x4] sm:$0xf]
        %v572 = vld [vmem:[%s389 + $0x8] sm:$0xf]
        %v573 = vld [vmem:[%s389 + $0xc] sm:$0xf]
        %v574 = vld [vmem:[%s389 + $0x10] sm:$0xf]
        %v575 = vld [vmem:[%s389 + $0x14] sm:$0xf]
        %v576 = vld [vmem:[%s389 + $0x18] sm:$0xf]
        %v577 = vld [vmem:[%s389 + $0x1c] sm:$0xf]
        %v578 = vld [vmem:[%s389 + $0x20] sm:$0xf]
        %v579 = vld [vmem:[%s389 + $0x24] sm:$0xf]
        %v580 = vld [vmem:[%s389 + $0x28] sm:$0xf]
        %v581 = vld [vmem:[%s389 + $0x2c] sm:$0xf]
        %v582 = vld [vmem:[%s389 + $0x30] sm:$0xf]
        %v583 = vld [vmem:[%s389 + $0x34] sm:$0xf]
        %v584 = vld [vmem:[%s389 + $0x38] sm:$0xf]
        %v585 = vld [vmem:[%s389 + $0x3c] sm:$0xf]
        %v602 = vunpack.c.l.b16 %v570
        %v603 = vunpack.c.l.b16 %v571
        %v604 = vunpack.c.l.b16 %v572
        %v605 = vunpack.c.l.b16 %v573
        %v606 = vunpack.c.l.b16 %v574
        %v607 = vunpack.c.l.b16 %v575
        %v608 = vunpack.c.l.b16 %v576
        %v609 = vunpack.c.l.b16 %v577
        %v610 = vunpack.c.l.b16 %v578
        %v611 = vunpack.c.l.b16 %v579
        %v612 = vunpack.c.l.b16 %v580
        %v613 = vunpack.c.l.b16 %v581
        %v614 = vunpack.c.l.b16 %v582
        %v615 = vunpack.c.l.b16 %v583
        %v616 = vunpack.c.l.b16 %v584
        %v617 = vunpack.c.l.b16 %v585
        %v618 = vpack.c.b16 %v603, %v602
        %v619 = vpack.c.b16 %v605, %v604
        %v620 = vpack.c.b16 %v607, %v606
        %v621 = vpack.c.b16 %v609, %v608
        %v622 = vpack.c.b16 %v611, %v610
        %v623 = vpack.c.b16 %v613, %v612
        %v624 = vpack.c.b16 %v615, %v614
        %v625 = vpack.c.b16 %v617, %v616
        %v627 = vshrl.u32 %v618, 16
        %v629 = vrot.slane %v627, 7
        %v630 = vshll.u32 %v618, 16
        %v632 = vor.u32 %v629, %v630
        %v634 = vshrl.u32 %v619, 16
        %v636 = vrot.slane %v634, 7
        %v637 = vshll.u32 %v619, 16
        %v639 = vor.u32 %v636, %v637
        %v641 = vshrl.u32 %v620, 16
        %v643 = vrot.slane %v641, 7
        %v644 = vshll.u32 %v620, 16
        %v646 = vor.u32 %v643, %v644
        %v648 = vshrl.u32 %v621, 16
        %v650 = vrot.slane %v648, 7
        %v651 = vshll.u32 %v621, 16
        %v653 = vor.u32 %v650, %v651
        %v655 = vshrl.u32 %v622, 16
        %v657 = vrot.slane %v655, 7
        %v658 = vshll.u32 %v622, 16
        %v660 = vor.u32 %v657, %v658
        %v662 = vshrl.u32 %v623, 16
        %v664 = vrot.slane %v662, 7
        %v665 = vshll.u32 %v623, 16
        %v667 = vor.u32 %v664, %v665
        %v669 = vshrl.u32 %v624, 16
        %v671 = vrot.slane %v669, 7
        %v672 = vshll.u32 %v624, 16
        %v674 = vor.u32 %v671, %v672
        %v676 = vshrl.u32 %v625, 16
        %v678 = vrot.slane %v676, 7
        %v679 = vshll.u32 %v625, 16
        %v681 = vor.u32 %v678, %v679
        %v698 = vsel %vm535, 0, %v632
        %v699 = vsel %vm535, 0, %v639
        %v700 = vsel %vm535, 0, %v646
        %v701 = vsel %vm535, 0, %v653
        %v702 = vsel %vm535, 0, %v660
        %v703 = vsel %vm535, 0, %v667
        %v704 = vsel %vm535, 0, %v674
        %v705 = vsel %vm535, 0, %v681
        %v706 = vsel %vm535, %v629, 0
        %v707 = vsel %vm535, %v636, 0
        %v708 = vsel %vm535, %v643, 0
        %v709 = vsel %vm535, %v650, 0
        %v710 = vsel %vm535, %v657, 0
        %v711 = vsel %vm535, %v664, 0
        %v712 = vsel %vm535, %v671, 0
        %v713 = vsel %vm535, %v678, 0
        %v730 = vunpack.c.l.b16 %v698
        %v731 = vunpack.c.h.b16 %v698
        %v732 = vunpack.c.l.b16 %v706
        %v733 = vunpack.c.l.b16 %v699
        %v734 = vunpack.c.h.b16 %v699
        %v735 = vunpack.c.l.b16 %v707
        %v736 = vunpack.c.l.b16 %v700
        %v737 = vunpack.c.h.b16 %v700
        %v738 = vunpack.c.l.b16 %v708
        %v739 = vunpack.c.l.b16 %v701
        %v740 = vunpack.c.h.b16 %v701
        %v741 = vunpack.c.l.b16 %v709
        %v742 = vunpack.c.l.b16 %v702
        %v743 = vunpack.c.h.b16 %v702
        %v744 = vunpack.c.l.b16 %v710
        %v745 = vunpack.c.l.b16 %v703
        %v746 = vunpack.c.h.b16 %v703
        %v747 = vunpack.c.l.b16 %v711
        %v748 = vunpack.c.l.b16 %v704
        %v749 = vunpack.c.h.b16 %v704
        %v750 = vunpack.c.l.b16 %v712
        %v751 = vunpack.c.l.b16 %v705
        %v752 = vunpack.c.h.b16 %v705
        %v753 = vunpack.c.l.b16 %v713
        %v754 = vpack.c.b16 %v730, %v730
        %v755 = vpack.c.b16 %v731, %v731
        %v756 = vpack.c.b16 %v732, %v732
        %v757 = vpack.c.b16 %v733, %v733
        %v758 = vpack.c.b16 %v734, %v734
        %v759 = vpack.c.b16 %v735, %v735
        %v760 = vpack.c.b16 %v736, %v736
        %v761 = vpack.c.b16 %v737, %v737
        %v762 = vpack.c.b16 %v738, %v738
        %v763 = vpack.c.b16 %v739, %v739
        %v764 = vpack.c.b16 %v740, %v740
        %v765 = vpack.c.b16 %v741, %v741
        %v766 = vpack.c.b16 %v742, %v742
        %v767 = vpack.c.b16 %v743, %v743
        %v768 = vpack.c.b16 %v744, %v744
        %v769 = vpack.c.b16 %v745, %v745
        %v770 = vpack.c.b16 %v746, %v746
        %v771 = vpack.c.b16 %v747, %v747
        %v772 = vpack.c.b16 %v748, %v748
        %v773 = vpack.c.b16 %v749, %v749
        %v774 = vpack.c.b16 %v750, %v750
        %v775 = vpack.c.b16 %v751, %v751
        %v776 = vpack.c.b16 %v752, %v752
        %v777 = vpack.c.b16 %v753, %v753
        %s802 = scalar_lea.vmem [#allocation2], 24
        %803 = vst.msk [vmem:[%s802] sm:$0xf] %vm562, %v754
        %804 = vst.msk [vmem:[%s802 + $0x4] sm:$0xf] %vm562, %v755
        %805 = vst.msk [vmem:[%s802 + $0x8] sm:$0x1] %vm565, %v756
        %806 = vst.msk [vmem:[%s802 + $0xc] sm:$0xf] %vm562, %v757
        %807 = vst.msk [vmem:[%s802 + $0x10] sm:$0xf] %vm562, %v758
        %808 = vst.msk [vmem:[%s802 + $0x14] sm:$0x1] %vm565, %v759
        %809 = vst.msk [vmem:[%s802 + $0x18] sm:$0xf] %vm562, %v760
        %810 = vst.msk [vmem:[%s802 + $0x1c] sm:$0xf] %vm562, %v761
        %811 = vst.msk [vmem:[%s802 + $0x20] sm:$0x1] %vm565, %v762
        %812 = vst.msk [vmem:[%s802 + $0x24] sm:$0xf] %vm562, %v763
        %813 = vst.msk [vmem:[%s802 + $0x28] sm:$0xf] %vm562, %v764
        %814 = vst.msk [vmem:[%s802 + $0x2c] sm:$0x1] %vm565, %v765
        %815 = vst.msk [vmem:[%s802 + $0x30] sm:$0xf] %vm562, %v766
        %816 = vst.msk [vmem:[%s802 + $0x34] sm:$0xf] %vm562, %v767
        %817 = vst.msk [vmem:[%s802 + $0x38] sm:$0x1] %vm565, %v768
        %818 = vst.msk [vmem:[%s802 + $0x3c] sm:$0xf] %vm562, %v769
        %819 = vst.msk [vmem:[%s802 + $0x40] sm:$0xf] %vm562, %v770
        %820 = vst.msk [vmem:[%s802 + $0x44] sm:$0x1] %vm565, %v771
        %821 = vst.msk [vmem:[%s802 + $0x48] sm:$0xf] %vm562, %v772
        %822 = vst.msk [vmem:[%s802 + $0x4c] sm:$0xf] %vm562, %v773
        %823 = vst.msk [vmem:[%s802 + $0x50] sm:$0x1] %vm565, %v774
        %824 = vst.msk [vmem:[%s802 + $0x54] sm:$0xf] %vm562, %v775
        %825 = vst.msk [vmem:[%s802 + $0x58] sm:$0xf] %vm562, %v776
        %826 = vst.msk [vmem:[%s802 + $0x5c] sm:$0x1] %vm565, %v777
        %v827 = vld [vmem:[%s407] sm:$0xf]
        %v828 = vld [vmem:[%s407 + $0x4] sm:$0xf]
        %v829 = vld [vmem:[%s407 + $0x8] sm:$0xf]
        %v830 = vld [vmem:[%s407 + $0xc] sm:$0xf]
        %s831 = sshll.u32 %s492, 16
        %s832 = sor.u32 %s492, %s831
        %v833 = vstv %s832
        %v835 = vmul.bf16 %v827, %v833
        %v836 = vmul.bf16 %v828, %v833
        %v837 = vmul.bf16 %v829, %v833
        %v838 = vmul.bf16 %v830, %v833
        %v843 = vunpack.c.l.b16 %v835
        %v844 = vunpack.c.l.b16 %v836
        %v845 = vunpack.c.l.b16 %v837
        %v846 = vunpack.c.l.b16 %v838
        %v847 = vpack.c.b16 %v844, %v843
        %v848 = vpack.c.b16 %v846, %v845
        %v850 = vshrl.u32 %v847, 16
        %v852 = vrot.slane %v850, 7
        %v853 = vshll.u32 %v847, 16
        %v855 = vor.u32 %v852, %v853
        %v857 = vshrl.u32 %v848, 16
        %v859 = vrot.slane %v857, 7
        %v860 = vshll.u32 %v848, 16
        %v862 = vor.u32 %v859, %v860
        %v867 = vsel %vm535, 0, %v855
        %v868 = vsel %vm535, 0, %v862
        %v869 = vsel %vm535, %v852, 0
        %v870 = vsel %vm535, %v859, 0
        %v875 = vunpack.c.l.b16 %v867
        %v876 = vunpack.c.h.b16 %v867
        %v877 = vunpack.c.l.b16 %v869
        %v878 = vunpack.c.l.b16 %v868
        %v879 = vunpack.c.h.b16 %v868
        %v880 = vunpack.c.l.b16 %v870
        %v881 = vpack.c.b16 %v875, %v875
        %v882 = vpack.c.b16 %v876, %v876
        %v883 = vpack.c.b16 %v877, %v877
        %v884 = vpack.c.b16 %v878, %v878
        %v885 = vpack.c.b16 %v879, %v879
        %v886 = vpack.c.b16 %v880, %v880
        %s893 = scalar_lea.vmem [#allocation2], 120
        %894 = vst.msk [vmem:[%s893] sm:$0xf] %vm562, %v881
        %895 = vst.msk [vmem:[%s893 + $0x4] sm:$0xf] %vm562, %v882
        %896 = vst.msk [vmem:[%s893 + $0x8] sm:$0x1] %vm565, %v883
        %897 = vst.msk [vmem:[%s893 + $0xc] sm:$0xf] %vm562, %v884
        %898 = vst.msk [vmem:[%s893 + $0x10] sm:$0xf] %vm562, %v885
        %899 = vst.msk [vmem:[%s893 + $0x14] sm:$0x1] %vm565, %v886
        %v900 = vld [vmem:[#allocation2] sm:$0xf]
        %v901 = vld [vmem:[#allocation2 + $0x4] sm:$0xf]
        %v902 = vld [vmem:[#allocation2 + $0xc] sm:$0xf]
        %v903 = vld [vmem:[#allocation2 + $0x10] sm:$0xf]
        %v904 = vld [vmem:[#allocation2 + $0x18] sm:$0xf]
        %v905 = vld [vmem:[#allocation2 + $0x1c] sm:$0xf]
        %v906 = vld [vmem:[#allocation2 + $0x24] sm:$0xf]
        %v907 = vld [vmem:[#allocation2 + $0x28] sm:$0xf]
        %v908 = vld [vmem:[#allocation2 + $0x30] sm:$0xf]
        %v909 = vld [vmem:[#allocation2 + $0x34] sm:$0xf]
        %v910 = vld [vmem:[#allocation2 + $0x8] sm:$0x1]
        %v911 = vld [vmem:[#allocation2 + $0x14] sm:$0x1]
        %v912 = vld [vmem:[#allocation2 + $0x20] sm:$0x1]
        %v913 = vld [vmem:[#allocation2 + $0x2c] sm:$0x1]
        %v914 = vld [vmem:[#allocation2 + $0x38] sm:$0x1]
        %vm915 = vsmask.f32 3328
        %vm916 = vsmask.f32 7440
        %vm917 = vmor %vm915, %vm916
        %v919 = vshrl.u32 %v900, 16
        %v921 = vrot.slane %v919, 4
        %v922 = vshll.u32 %v900, 16
        %v924 = vrot.slane %v922, 5
        %v925 = vor.u32 %v921, %v924
        %v926 = vrot.slane %v925, 4
        %v928 = vshll.u32 %v901, 16
        %v930 = vrot.slane %v928, 5
        %v931 = vsel %vm917, %v926, %v930
        %v932 = vshrl.u32 %v901, 16
        %v934 = vrot.slane %v932, 4
        %v935 = vor.u32 %v934, %v930
        %v936 = vrot.slane %v935, 4
        %v938 = vshll.u32 %v910, 16
        %v940 = vrot.slane %v938, 5
        %v941 = vsel %vm917, %v936, %v940
        %v943 = vshrl.u32 %v902, 16
        %v945 = vrot.slane %v943, 4
        %v946 = vshll.u32 %v902, 16
        %v948 = vrot.slane %v946, 5
        %v949 = vor.u32 %v945, %v948
        %v950 = vrot.slane %v949, 4
        %v952 = vshll.u32 %v903, 16
        %v954 = vrot.slane %v952, 5
        %v955 = vsel %vm917, %v950, %v954
        %v956 = vshrl.u32 %v903, 16
        %v958 = vrot.slane %v956, 4
        %v959 = vor.u32 %v958, %v954
        %v960 = vrot.slane %v959, 4
        %v962 = vshll.u32 %v911, 16
        %v964 = vrot.slane %v962, 5
        %v965 = vsel %vm917, %v960, %v964
        %v967 = vshrl.u32 %v904, 16
        %v969 = vrot.slane %v967, 4
        %v970 = vshll.u32 %v904, 16
        %v972 = vrot.slane %v970, 5
        %v973 = vor.u32 %v969, %v972
        %v974 = vrot.slane %v973, 4
        %v976 = vshll.u32 %v905, 16
        %v978 = vrot.slane %v976, 5
        %v979 = vsel %vm917, %v974, %v978
        %v980 = vshrl.u32 %v905, 16
        %v982 = vrot.slane %v980, 4
        %v983 = vor.u32 %v982, %v978
        %v984 = vrot.slane %v983, 4
        %v986 = vshll.u32 %v912, 16
        %v988 = vrot.slane %v986, 5
        %v989 = vsel %vm917, %v984, %v988
        %v991 = vshrl.u32 %v906, 16
        %v993 = vrot.slane %v991, 4
        %v994 = vshll.u32 %v906, 16
        %v996 = vrot.slane %v994, 5
        %v997 = vor.u32 %v993, %v996
        %v998 = vrot.slane %v997, 4
        %v1000 = vshll.u32 %v907, 16
        %v1002 = vrot.slane %v1000, 5
        %v1003 = vsel %vm917, %v998, %v1002
        %v1004 = vshrl.u32 %v907, 16
        %v1006 = vrot.slane %v1004, 4
        %v1007 = vor.u32 %v1006, %v1002
        %v1008 = vrot.slane %v1007, 4
        %v1010 = vshll.u32 %v913, 16
        %v1012 = vrot.slane %v1010, 5
        %v1013 = vsel %vm917, %v1008, %v1012
        %v1015 = vshrl.u32 %v908, 16
        %v1017 = vrot.slane %v1015, 4
        %v1018 = vshll.u32 %v908, 16
        %v1020 = vrot.slane %v1018, 5
        %v1021 = vor.u32 %v1017, %v1020
        %v1022 = vrot.slane %v1021, 4
        %v1024 = vshll.u32 %v909, 16
        %v1026 = vrot.slane %v1024, 5
        %v1027 = vsel %vm917, %v1022, %v1026
        %v1028 = vshrl.u32 %v909, 16
        %v1030 = vrot.slane %v1028, 4
        %v1031 = vor.u32 %v1030, %v1026
        %v1032 = vrot.slane %v1031, 4
        %v1034 = vshll.u32 %v914, 16
        %v1036 = vrot.slane %v1034, 5
        %v1037 = vsel %vm917, %v1032, %v1036
        %v1038 = vld [vmem:[#allocation2] sm:$0xe]
        %v1039 = vld [vmem:[#allocation2 + $0xc] sm:$0xe]
        %v1040 = vld [vmem:[#allocation2 + $0x18] sm:$0xe]
        %v1041 = vld [vmem:[#allocation2 + $0x24] sm:$0xe]
        %v1042 = vld [vmem:[#allocation2 + $0x30] sm:$0xe]
        %vm1058 = vcmask 1042432
        %vm1059 = vcmask 1046532
        %vm1060 = vmor %vm1058, %vm1059
        %v1061 = vrot.slane %v1038, 5
        %v1062 = vrot.slane %v1061, 4
        %v1063 = vrot.slane %v901, 5
        %v1064 = vsel %vm1060, %v1062, %v1063
        %v1065 = vrot.slane %v1063, 4
        %v1066 = vrot.slane %v910, 5
        %v1067 = vsel %vm1060, %v1065, %v1066
        %v1068 = vrot.slane %v1039, 5
        %v1069 = vrot.slane %v1068, 4
        %v1070 = vrot.slane %v903, 5
        %v1071 = vsel %vm1060, %v1069, %v1070
        %v1072 = vrot.slane %v1070, 4
        %v1073 = vrot.slane %v911, 5
        %v1074 = vsel %vm1060, %v1072, %v1073
        %v1075 = vrot.slane %v1040, 5
        %v1076 = vrot.slane %v1075, 4
        %v1077 = vrot.slane %v905, 5
        %v1078 = vsel %vm1060, %v1076, %v1077
        %v1079 = vrot.slane %v1077, 4
        %v1080 = vrot.slane %v912, 5
        %v1081 = vsel %vm1060, %v1079, %v1080
        %v1082 = vrot.slane %v1041, 5
        %v1083 = vrot.slane %v1082, 4
        %v1084 = vrot.slane %v907, 5
        %v1085 = vsel %vm1060, %v1083, %v1084
        %v1086 = vrot.slane %v1084, 4
        %v1087 = vrot.slane %v913, 5
        %v1088 = vsel %vm1060, %v1086, %v1087
        %v1089 = vrot.slane %v1042, 5
        %v1090 = vrot.slane %v1089, 4
        %v1091 = vrot.slane %v909, 5
        %v1092 = vsel %vm1060, %v1090, %v1091
        %v1093 = vrot.slane %v1091, 4
        %v1094 = vrot.slane %v914, 5
        %v1095 = vsel %vm1060, %v1093, %v1094
        %s1096 = scalar_lea.vmem [#allocation2], 12
        %v1097 = vld [vmem:[%s1096] sm:$0xf]
        %v1098 = vld [vmem:[%s1096 + $0x4] sm:$0xf]
        %v1099 = vld [vmem:[%s1096 + $0xc] sm:$0xf]
        %v1100 = vld [vmem:[%s1096 + $0x10] sm:$0xf]
        %v1101 = vld [vmem:[%s1096 + $0x18] sm:$0xf]
        %v1102 = vld [vmem:[%s1096 + $0x1c] sm:$0xf]
        %v1103 = vld [vmem:[%s1096 + $0x24] sm:$0xf]
        %v1104 = vld [vmem:[%s1096 + $0x28] sm:$0xf]
        %v1105 = vld [vmem:[%s1096 + $0x30] sm:$0xf]
        %v1106 = vld [vmem:[%s1096 + $0x34] sm:$0xf]
        %v1107 = vld [vmem:[%s1096 + $0x8] sm:$0x1]
        %v1108 = vld [vmem:[%s1096 + $0x14] sm:$0x1]
        %v1109 = vld [vmem:[%s1096 + $0x20] sm:$0x1]
        %v1110 = vld [vmem:[%s1096 + $0x2c] sm:$0x1]
        %v1111 = vld [vmem:[%s1096 + $0x38] sm:$0x1]
        %v1113 = vshrl.u32 %v1097, 16
        %v1115 = vrot.slane %v1113, 4
        %v1116 = vshll.u32 %v1097, 16
        %v1118 = vrot.slane %v1116, 5
        %v1119 = vor.u32 %v1115, %v1118
        %v1120 = vrot.slane %v1119, 4
        %v1122 = vshll.u32 %v1098, 16
        %v1124 = vrot.slane %v1122, 5
        %v1125 = vsel %vm917, %v1120, %v1124
        %v1126 = vshrl.u32 %v1098, 16
        %v1128 = vrot.slane %v1126, 4
        %v1129 = vor.u32 %v1128, %v1124
        %v1130 = vrot.slane %v1129, 4
        %v1132 = vshll.u32 %v1107, 16
        %v1134 = vrot.slane %v1132, 5
        %v1135 = vsel %vm917, %v1130, %v1134
        %v1137 = vshrl.u32 %v1099, 16
        %v1139 = vrot.slane %v1137, 4
        %v1140 = vshll.u32 %v1099, 16
        %v1142 = vrot.slane %v1140, 5
        %v1143 = vor.u32 %v1139, %v1142
        %v1144 = vrot.slane %v1143, 4
        %v1146 = vshll.u32 %v1100, 16
        %v1148 = vrot.slane %v1146, 5
        %v1149 = vsel %vm917, %v1144, %v1148
        %v1150 = vshrl.u32 %v1100, 16
        %v1152 = vrot.slane %v1150, 4
        %v1153 = vor.u32 %v1152, %v1148
        %v1154 = vrot.slane %v1153, 4
        %v1156 = vshll.u32 %v1108, 16
        %v1158 = vrot.slane %v1156, 5
        %v1159 = vsel %vm917, %v1154, %v1158
        %v1161 = vshrl.u32 %v1101, 16
        %v1163 = vrot.slane %v1161, 4
        %v1164 = vshll.u32 %v1101, 16
        %v1166 = vrot.slane %v1164, 5
        %v1167 = vor.u32 %v1163, %v1166
        %v1168 = vrot.slane %v1167, 4
        %v1170 = vshll.u32 %v1102, 16
        %v1172 = vrot.slane %v1170, 5
        %v1173 = vsel %vm917, %v1168, %v1172
        %v1174 = vshrl.u32 %v1102, 16
        %v1176 = vrot.slane %v1174, 4
        %v1177 = vor.u32 %v1176, %v1172
        %v1178 = vrot.slane %v1177, 4
        %v1180 = vshll.u32 %v1109, 16
        %v1182 = vrot.slane %v1180, 5
        %v1183 = vsel %vm917, %v1178, %v1182
        %v1185 = vshrl.u32 %v1103, 16
        %v1187 = vrot.slane %v1185, 4
        %v1188 = vshll.u32 %v1103, 16
        %v1190 = vrot.slane %v1188, 5
        %v1191 = vor.u32 %v1187, %v1190
        %v1192 = vrot.slane %v1191, 4
        %v1194 = vshll.u32 %v1104, 16
        %v1196 = vrot.slane %v1194, 5
        %v1197 = vsel %vm917, %v1192, %v1196
        %v1198 = vshrl.u32 %v1104, 16
        %v1200 = vrot.slane %v1198, 4
        %v1201 = vor.u32 %v1200, %v1196
        %v1202 = vrot.slane %v1201, 4
        %v1204 = vshll.u32 %v1110, 16
        %v1206 = vrot.slane %v1204, 5
        %v1207 = vsel %vm917, %v1202, %v1206
        %v1209 = vshrl.u32 %v1105, 16
        %v1211 = vrot.slane %v1209, 4
        %v1212 = vshll.u32 %v1105, 16
        %v1214 = vrot.slane %v1212, 5
        %v1215 = vor.u32 %v1211, %v1214
        %v1216 = vrot.slane %v1215, 4
        %v1218 = vshll.u32 %v1106, 16
        %v1220 = vrot.slane %v1218, 5
        %v1221 = vsel %vm917, %v1216, %v1220
        %v1222 = vshrl.u32 %v1106, 16
        %v1224 = vrot.slane %v1222, 4
        %v1225 = vor.u32 %v1224, %v1220
        %v1226 = vrot.slane %v1225, 4
        %v1228 = vshll.u32 %v1111, 16
        %v1230 = vrot.slane %v1228, 5
        %v1231 = vsel %vm917, %v1226, %v1230
        %v1232 = vld [vmem:[%s1096] sm:$0xe]
        %v1233 = vld [vmem:[%s1096 + $0xc] sm:$0xe]
        %v1234 = vld [vmem:[%s1096 + $0x18] sm:$0xe]
        %v1235 = vld [vmem:[%s1096 + $0x24] sm:$0xe]
        %v1236 = vld [vmem:[%s1096 + $0x30] sm:$0xe]
        %v1252 = vrot.slane %v1232, 5
        %v1253 = vrot.slane %v1252, 4
        %v1254 = vrot.slane %v1098, 5
        %v1255 = vsel %vm1060, %v1253, %v1254
        %v1256 = vrot.slane %v1254, 4
        %v1257 = vrot.slane %v1107, 5
        %v1258 = vsel %vm1060, %v1256, %v1257
        %v1259 = vrot.slane %v1233, 5
        %v1260 = vrot.slane %v1259, 4
        %v1261 = vrot.slane %v1100, 5
        %v1262 = vsel %vm1060, %v1260, %v1261
        %v1263 = vrot.slane %v1261, 4
        %v1264 = vrot.slane %v1108, 5
        %v1265 = vsel %vm1060, %v1263, %v1264
        %v1266 = vrot.slane %v1234, 5
        %v1267 = vrot.slane %v1266, 4
        %v1268 = vrot.slane %v1102, 5
        %v1269 = vsel %vm1060, %v1267, %v1268
        %v1270 = vrot.slane %v1268, 4
        %v1271 = vrot.slane %v1109, 5
        %v1272 = vsel %vm1060, %v1270, %v1271
        %v1273 = vrot.slane %v1235, 5
        %v1274 = vrot.slane %v1273, 4
        %v1275 = vrot.slane %v1104, 5
        %v1276 = vsel %vm1060, %v1274, %v1275
        %v1277 = vrot.slane %v1275, 4
        %v1278 = vrot.slane %v1110, 5
        %v1279 = vsel %vm1060, %v1277, %v1278
        %v1280 = vrot.slane %v1236, 5
        %v1281 = vrot.slane %v1280, 4
        %v1282 = vrot.slane %v1106, 5
        %v1283 = vsel %vm1060, %v1281, %v1282
        %v1284 = vrot.slane %v1282, 4
        %v1285 = vrot.slane %v1111, 5
        %v1286 = vsel %vm1060, %v1284, %v1285
        %v1287 = vld [vmem:[%s802] sm:$0xf]
        %v1288 = vld [vmem:[%s802 + $0x4] sm:$0xf]
        %v1289 = vld [vmem:[%s802 + $0xc] sm:$0xf]
        %v1290 = vld [vmem:[%s802 + $0x10] sm:$0xf]
        %v1291 = vld [vmem:[%s802 + $0x18] sm:$0xf]
        %v1292 = vld [vmem:[%s802 + $0x1c] sm:$0xf]
        %v1293 = vld [vmem:[%s802 + $0x24] sm:$0xf]
        %v1294 = vld [vmem:[%s802 + $0x28] sm:$0xf]
        %v1295 = vld [vmem:[%s802 + $0x30] sm:$0xf]
        %v1296 = vld [vmem:[%s802 + $0x34] sm:$0xf]
        %v1297 = vld [vmem:[%s802 + $0x8] sm:$0x1]
        %v1298 = vld [vmem:[%s802 + $0x14] sm:$0x1]
        %v1299 = vld [vmem:[%s802 + $0x20] sm:$0x1]
        %v1300 = vld [vmem:[%s802 + $0x2c] sm:$0x1]
        %v1301 = vld [vmem:[%s802 + $0x38] sm:$0x1]
        %v1303 = vshrl.u32 %v1287, 16
        %v1305 = vrot.slane %v1303, 4
        %v1306 = vshll.u32 %v1287, 16
        %v1308 = vrot.slane %v1306, 5
        %v1309 = vor.u32 %v1305, %v1308
        %v1310 = vrot.slane %v1309, 4
        %v1312 = vshll.u32 %v1288, 16
        %v1314 = vrot.slane %v1312, 5
        %v1315 = vsel %vm917, %v1310, %v1314
        %v1316 = vshrl.u32 %v1288, 16
        %v1318 = vrot.slane %v1316, 4
        %v1319 = vor.u32 %v1318, %v1314
        %v1320 = vrot.slane %v1319, 4
        %v1322 = vshll.u32 %v1297, 16
        %v1324 = vrot.slane %v1322, 5
        %v1325 = vsel %vm917, %v1320, %v1324
        %v1327 = vshrl.u32 %v1289, 16
        %v1329 = vrot.slane %v1327, 4
        %v1330 = vshll.u32 %v1289, 16
        %v1332 = vrot.slane %v1330, 5
        %v1333 = vor.u32 %v1329, %v1332
        %v1334 = vrot.slane %v1333, 4
        %v1336 = vshll.u32 %v1290, 16
        %v1338 = vrot.slane %v1336, 5
        %v1339 = vsel %vm917, %v1334, %v1338
        %v1340 = vshrl.u32 %v1290, 16
        %v1342 = vrot.slane %v1340, 4
        %v1343 = vor.u32 %v1342, %v1338
        %v1344 = vrot.slane %v1343, 4
        %v1346 = vshll.u32 %v1298, 16
        %v1348 = vrot.slane %v1346, 5
        %v1349 = vsel %vm917, %v1344, %v1348
        %v1351 = vshrl.u32 %v1291, 16
        %v1353 = vrot.slane %v1351, 4
        %v1354 = vshll.u32 %v1291, 16
        %v1356 = vrot.slane %v1354, 5
        %v1357 = vor.u32 %v1353, %v1356
        %v1358 = vrot.slane %v1357, 4
        %v1360 = vshll.u32 %v1292, 16
        %v1362 = vrot.slane %v1360, 5
        %v1363 = vsel %vm917, %v1358, %v1362
        %v1364 = vshrl.u32 %v1292, 16
        %v1366 = vrot.slane %v1364, 4
        %v1367 = vor.u32 %v1366, %v1362
        %v1368 = vrot.slane %v1367, 4
        %v1370 = vshll.u32 %v1299, 16
        %v1372 = vrot.slane %v1370, 5
        %v1373 = vsel %vm917, %v1368, %v1372
        %v1375 = vshrl.u32 %v1293, 16
        %v1377 = vrot.slane %v1375, 4
        %v1378 = vshll.u32 %v1293, 16
        %v1380 = vrot.slane %v1378, 5
        %v1381 = vor.u32 %v1377, %v1380
        %v1382 = vrot.slane %v1381, 4
        %v1384 = vshll.u32 %v1294, 16
        %v1386 = vrot.slane %v1384, 5
        %v1387 = vsel %vm917, %v1382, %v1386
        %v1388 = vshrl.u32 %v1294, 16
        %v1390 = vrot.slane %v1388, 4
        %v1391 = vor.u32 %v1390, %v1386
        %v1392 = vrot.slane %v1391, 4
        %v1394 = vshll.u32 %v1300, 16
        %v1396 = vrot.slane %v1394, 5
        %v1397 = vsel %vm917, %v1392, %v1396
        %v1399 = vshrl.u32 %v1295, 16
        %v1401 = vrot.slane %v1399, 4
        %v1402 = vshll.u32 %v1295, 16
        %v1404 = vrot.slane %v1402, 5
        %v1405 = vor.u32 %v1401, %v1404
        %v1406 = vrot.slane %v1405, 4
        %v1408 = vshll.u32 %v1296, 16
        %v1410 = vrot.slane %v1408, 5
        %v1411 = vsel %vm917, %v1406, %v1410
        %v1412 = vshrl.u32 %v1296, 16
        %v1414 = vrot.slane %v1412, 4
        %v1415 = vor.u32 %v1414, %v1410
        %v1416 = vrot.slane %v1415, 4
        %v1418 = vshll.u32 %v1301, 16
        %v1420 = vrot.slane %v1418, 5
        %v1421 = vsel %vm917, %v1416, %v1420
        %v1422 = vld [vmem:[%s802] sm:$0xe]
        %v1423 = vld [vmem:[%s802 + $0xc] sm:$0xe]
        %v1424 = vld [vmem:[%s802 + $0x18] sm:$0xe]
        %v1425 = vld [vmem:[%s802 + $0x24] sm:$0xe]
        %v1426 = vld [vmem:[%s802 + $0x30] sm:$0xe]
        %v1442 = vrot.slane %v1422, 5
        %v1443 = vrot.slane %v1442, 4
        %v1444 = vrot.slane %v1288, 5
        %v1445 = vsel %vm1060, %v1443, %v1444
        %v1446 = vrot.slane %v1444, 4
        %v1447 = vrot.slane %v1297, 5
        %v1448 = vsel %vm1060, %v1446, %v1447
        %v1449 = vrot.slane %v1423, 5
        %v1450 = vrot.slane %v1449, 4
        %v1451 = vrot.slane %v1290, 5
        %v1452 = vsel %vm1060, %v1450, %v1451
        %v1453 = vrot.slane %v1451, 4
        %v1454 = vrot.slane %v1298, 5
        %v1455 = vsel %vm1060, %v1453, %v1454
        %v1456 = vrot.slane %v1424, 5
        %v1457 = vrot.slane %v1456, 4
        %v1458 = vrot.slane %v1292, 5
        %v1459 = vsel %vm1060, %v1457, %v1458
        %v1460 = vrot.slane %v1458, 4
        %v1461 = vrot.slane %v1299, 5
        %v1462 = vsel %vm1060, %v1460, %v1461
        %v1463 = vrot.slane %v1425, 5
        %v1464 = vrot.slane %v1463, 4
        %v1465 = vrot.slane %v1294, 5
        %v1466 = vsel %vm1060, %v1464, %v1465
        %v1467 = vrot.slane %v1465, 4
        %v1468 = vrot.slane %v1300, 5
        %v1469 = vsel %vm1060, %v1467, %v1468
        %v1470 = vrot.slane %v1426, 5
        %v1471 = vrot.slane %v1470, 4
        %v1472 = vrot.slane %v1296, 5
        %v1473 = vsel %vm1060, %v1471, %v1472
        %v1474 = vrot.slane %v1472, 4
        %v1475 = vrot.slane %v1301, 5
        %v1476 = vsel %vm1060, %v1474, %v1475
        %v1482 = vunpack.c.l.b16 %v900
        %v1483 = vunpack.c.l.b16 %v901
        %v1484 = vunpack.c.l.b16 %v902
        %v1485 = vunpack.c.l.b16 %v903
        %v1486 = vunpack.c.l.b16 %v904
        %v1487 = vunpack.c.l.b16 %v905
        %v1488 = vunpack.c.l.b16 %v906
        %v1489 = vunpack.c.l.b16 %v907
        %v1490 = vunpack.c.l.b16 %v908
        %v1491 = vunpack.c.l.b16 %v909
        %v1492 = vpack.c.b16 %v1483, %v1482
        %v1493 = vpack.c.b16 %v1485, %v1484
        %v1494 = vpack.c.b16 %v1487, %v1486
        %v1495 = vpack.c.b16 %v1489, %v1488
        %v1496 = vpack.c.b16 %v1491, %v1490
        %v1497 = vunpack.c.l.b16 %v931
        %v1498 = vunpack.c.l.b16 %v941
        %v1499 = vunpack.c.l.b16 %v955
        %v1500 = vunpack.c.l.b16 %v965
        %v1501 = vunpack.c.l.b16 %v979
        %v1502 = vunpack.c.l.b16 %v989
        %v1503 = vunpack.c.l.b16 %v1003
        %v1504 = vunpack.c.l.b16 %v1013
        %v1505 = vunpack.c.l.b16 %v1027
        %v1506 = vunpack.c.l.b16 %v1037
        %v1507 = vpack.c.b16 %v1498, %v1497
        %v1508 = vpack.c.b16 %v1500, %v1499
        %v1509 = vpack.c.b16 %v1502, %v1501
        %v1510 = vpack.c.b16 %v1504, %v1503
        %v1511 = vpack.c.b16 %v1506, %v1505
        %1512 = vrot.lane.b32.xlu0 %v1507, 4
        %v1513 = vpop.permute.xlu0 %1512
        %1514 = vrot.lane.b32.xlu0 %v1508, 4
        %v1515 = vpop.permute.xlu0 %1514
        %1516 = vrot.lane.b32.xlu0 %v1509, 4
        %v1517 = vpop.permute.xlu0 %1516
        %1518 = vrot.lane.b32.xlu0 %v1510, 4
        %v1519 = vpop.permute.xlu0 %1518
        %1520 = vrot.lane.b32.xlu0 %v1511, 4
        %v1521 = vpop.permute.xlu0 %1520
        %v1522 = vunpack.c.l.b16 %v1064
        %v1523 = vunpack.c.l.b16 %v1067
        %v1524 = vunpack.c.l.b16 %v1071
        %v1525 = vunpack.c.l.b16 %v1074
        %v1526 = vunpack.c.l.b16 %v1078
        %v1527 = vunpack.c.l.b16 %v1081
        %v1528 = vunpack.c.l.b16 %v1085
        %v1529 = vunpack.c.l.b16 %v1088
        %v1530 = vunpack.c.l.b16 %v1092
        %v1531 = vunpack.c.l.b16 %v1095
        %v1532 = vpack.c.b16 %v1523, %v1522
        %v1533 = vpack.c.b16 %v1525, %v1524
        %v1534 = vpack.c.b16 %v1527, %v1526
        %v1535 = vpack.c.b16 %v1529, %v1528
        %v1536 = vpack.c.b16 %v1531, %v1530
        %1537 = vrot.lane.b32.xlu0 %v1532, 8
        %v1538 = vpop.permute.xlu0 %1537
        %1539 = vrot.lane.b32.xlu0 %v1533, 8
        %v1540 = vpop.permute.xlu0 %1539
        %1541 = vrot.lane.b32.xlu0 %v1534, 8
        %v1542 = vpop.permute.xlu0 %1541
        %1543 = vrot.lane.b32.xlu0 %v1535, 8
        %v1544 = vpop.permute.xlu0 %1543
        %1545 = vrot.lane.b32.xlu0 %v1536, 8
        %v1546 = vpop.permute.xlu0 %1545
        %v1552 = vunpack.c.l.b16 %v1097
        %v1553 = vunpack.c.l.b16 %v1098
        %v1554 = vunpack.c.l.b16 %v1099
        %v1555 = vunpack.c.l.b16 %v1100
        %v1556 = vunpack.c.l.b16 %v1101
        %v1557 = vunpack.c.l.b16 %v1102
        %v1558 = vunpack.c.l.b16 %v1103
        %v1559 = vunpack.c.l.b16 %v1104
        %v1560 = vunpack.c.l.b16 %v1105
        %v1561 = vunpack.c.l.b16 %v1106
        %v1562 = vpack.c.b16 %v1553, %v1552
        %v1563 = vpack.c.b16 %v1555, %v1554
        %v1564 = vpack.c.b16 %v1557, %v1556
        %v1565 = vpack.c.b16 %v1559, %v1558
        %v1566 = vpack.c.b16 %v1561, %v1560
        %1567 = vrot.lane.b32.xlu0 %v1562, 12
        %v1568 = vpop.permute.xlu0 %1567
        %1569 = vrot.lane.b32.xlu0 %v1563, 12
        %v1570 = vpop.permute.xlu0 %1569
        %1571 = vrot.lane.b32.xlu0 %v1564, 12
        %v1572 = vpop.permute.xlu0 %1571
        %1573 = vrot.lane.b32.xlu0 %v1565, 12
        %v1574 = vpop.permute.xlu0 %1573
        %1575 = vrot.lane.b32.xlu0 %v1566, 12
        %v1576 = vpop.permute.xlu0 %1575
        %v1577 = vunpack.c.l.b16 %v1125
        %v1578 = vunpack.c.l.b16 %v1135
        %v1579 = vunpack.c.l.b16 %v1149
        %v1580 = vunpack.c.l.b16 %v1159
        %v1581 = vunpack.c.l.b16 %v1173
        %v1582 = vunpack.c.l.b16 %v1183
        %v1583 = vunpack.c.l.b16 %v1197
        %v1584 = vunpack.c.l.b16 %v1207
        %v1585 = vunpack.c.l.b16 %v1221
        %v1586 = vunpack.c.l.b16 %v1231
        %v1587 = vpack.c.b16 %v1578, %v1577
        %v1588 = vpack.c.b16 %v1580, %v1579
        %v1589 = vpack.c.b16 %v1582, %v1581
        %v1590 = vpack.c.b16 %v1584, %v1583
        %v1591 = vpack.c.b16 %v1586, %v1585
        %1592 = vrot.lane.b32.xlu0 %v1587, 16
        %v1593 = vpop.permute.xlu0 %1592
        %1594 = vrot.lane.b32.xlu0 %v1588, 16
        %v1595 = vpop.permute.xlu0 %1594
        %1596 = vrot.lane.b32.xlu0 %v1589, 16
        %v1597 = vpop.permute.xlu0 %1596
        %1598 = vrot.lane.b32.xlu0 %v1590, 16
        %v1599 = vpop.permute.xlu0 %1598
        %1600 = vrot.lane.b32.xlu0 %v1591, 16
        %v1601 = vpop.permute.xlu0 %1600
        %v1602 = vunpack.c.l.b16 %v1255
        %v1603 = vunpack.c.l.b16 %v1258
        %v1604 = vunpack.c.l.b16 %v1262
        %v1605 = vunpack.c.l.b16 %v1265
        %v1606 = vunpack.c.l.b16 %v1269
        %v1607 = vunpack.c.l.b16 %v1272
        %v1608 = vunpack.c.l.b16 %v1276
        %v1609 = vunpack.c.l.b16 %v1279
        %v1610 = vunpack.c.l.b16 %v1283
        %v1611 = vunpack.c.l.b16 %v1286
        %v1612 = vpack.c.b16 %v1603, %v1602
        %v1613 = vpack.c.b16 %v1605, %v1604
        %v1614 = vpack.c.b16 %v1607, %v1606
        %v1615 = vpack.c.b16 %v1609, %v1608
        %v1616 = vpack.c.b16 %v1611, %v1610
        %1617 = vrot.lane.b32.xlu0 %v1612, 20
        %v1618 = vpop.permute.xlu0 %1617
        %1619 = vrot.lane.b32.xlu0 %v1613, 20
        %v1620 = vpop.permute.xlu0 %1619
        %1621 = vrot.lane.b32.xlu0 %v1614, 20
        %v1622 = vpop.permute.xlu0 %1621
        %1623 = vrot.lane.b32.xlu0 %v1615, 20
        %v1624 = vpop.permute.xlu0 %1623
        %1625 = vrot.lane.b32.xlu0 %v1616, 20
        %v1626 = vpop.permute.xlu0 %1625
        %v1632 = vunpack.c.l.b16 %v1287
        %v1633 = vunpack.c.l.b16 %v1288
        %v1634 = vunpack.c.l.b16 %v1289
        %v1635 = vunpack.c.l.b16 %v1290
        %v1636 = vunpack.c.l.b16 %v1291
        %v1637 = vunpack.c.l.b16 %v1292
        %v1638 = vunpack.c.l.b16 %v1293
        %v1639 = vunpack.c.l.b16 %v1294
        %v1640 = vunpack.c.l.b16 %v1295
        %v1641 = vunpack.c.l.b16 %v1296
        %v1642 = vpack.c.b16 %v1633, %v1632
        %v1643 = vpack.c.b16 %v1635, %v1634
        %v1644 = vpack.c.b16 %v1637, %v1636
        %v1645 = vpack.c.b16 %v1639, %v1638
        %v1646 = vpack.c.b16 %v1641, %v1640
        %1647 = vrot.lane.b32.xlu0 %v1642, 24
        %v1648 = vpop.permute.xlu0 %1647
        %1649 = vrot.lane.b32.xlu0 %v1643, 24
        %v1650 = vpop.permute.xlu0 %1649
        %1651 = vrot.lane.b32.xlu0 %v1644, 24
        %v1652 = vpop.permute.xlu0 %1651
        %1653 = vrot.lane.b32.xlu0 %v1645, 24
        %v1654 = vpop.permute.xlu0 %1653
        %1655 = vrot.lane.b32.xlu0 %v1646, 24
        %v1656 = vpop.permute.xlu0 %1655
        %v1657 = vunpack.c.l.b16 %v1315
        %v1658 = vunpack.c.l.b16 %v1325
        %v1659 = vunpack.c.l.b16 %v1339
        %v1660 = vunpack.c.l.b16 %v1349
        %v1661 = vunpack.c.l.b16 %v1363
        %v1662 = vunpack.c.l.b16 %v1373
        %v1663 = vunpack.c.l.b16 %v1387
        %v1664 = vunpack.c.l.b16 %v1397
        %v1665 = vunpack.c.l.b16 %v1411
        %v1666 = vunpack.c.l.b16 %v1421
        %v1667 = vpack.c.b16 %v1658, %v1657
        %v1668 = vpack.c.b16 %v1660, %v1659
        %v1669 = vpack.c.b16 %v1662, %v1661
        %v1670 = vpack.c.b16 %v1664, %v1663
        %v1671 = vpack.c.b16 %v1666, %v1665
        %1672 = vrot.lane.b32.xlu0 %v1667, 28
        %v1673 = vpop.permute.xlu0 %1672
        %1674 = vrot.lane.b32.xlu0 %v1668, 28
        %v1675 = vpop.permute.xlu0 %1674
        %1676 = vrot.lane.b32.xlu0 %v1669, 28
        %v1677 = vpop.permute.xlu0 %1676
        %1678 = vrot.lane.b32.xlu0 %v1670, 28
        %v1679 = vpop.permute.xlu0 %1678
        %1680 = vrot.lane.b32.xlu0 %v1671, 28
        %v1681 = vpop.permute.xlu0 %1680
        %v1682 = vunpack.c.l.b16 %v1445
        %v1683 = vunpack.c.l.b16 %v1448
        %v1684 = vunpack.c.l.b16 %v1452
        %v1685 = vunpack.c.l.b16 %v1455
        %v1686 = vunpack.c.l.b16 %v1459
        %v1687 = vunpack.c.l.b16 %v1462
        %v1688 = vunpack.c.l.b16 %v1466
        %v1689 = vunpack.c.l.b16 %v1469
        %v1690 = vunpack.c.l.b16 %v1473
        %v1691 = vunpack.c.l.b16 %v1476
        %v1692 = vpack.c.b16 %v1683, %v1682
        %v1693 = vpack.c.b16 %v1685, %v1684
        %v1694 = vpack.c.b16 %v1687, %v1686
        %v1695 = vpack.c.b16 %v1689, %v1688
        %v1696 = vpack.c.b16 %v1691, %v1690
        %1697 = vrot.lane.b32.xlu0 %v1692, 32
        %v1698 = vpop.permute.xlu0 %1697
        %1699 = vrot.lane.b32.xlu0 %v1693, 32
        %v1700 = vpop.permute.xlu0 %1699
        %1701 = vrot.lane.b32.xlu0 %v1694, 32
        %v1702 = vpop.permute.xlu0 %1701
        %1703 = vrot.lane.b32.xlu0 %v1695, 32
        %v1704 = vpop.permute.xlu0 %1703
        %1705 = vrot.lane.b32.xlu0 %v1696, 32
        %v1706 = vpop.permute.xlu0 %1705
        %vm1707 = vcmask 31744
        %v1710 = vsel %vm1707, %v1492, %v1513
        %v1713 = vsel %vm1707, %v1493, %v1515
        %v1716 = vsel %vm1707, %v1494, %v1517
        %v1719 = vsel %vm1707, %v1495, %v1519
        %v1722 = vsel %vm1707, %v1496, %v1521
        %vm1723 = vcmask 64512
        %v1725 = vsel %vm1723, %v1710, %v1538
        %v1727 = vsel %vm1723, %v1713, %v1540
        %v1729 = vsel %vm1723, %v1716, %v1542
        %v1731 = vsel %vm1723, %v1719, %v1544
        %v1733 = vsel %vm1723, %v1722, %v1546
        %vm1734 = vcmask 97280
        %v1736 = vsel %vm1734, %v1725, %v1568
        %v1738 = vsel %vm1734, %v1727, %v1570
        %v1740 = vsel %vm1734, %v1729, %v1572
        %v1742 = vsel %vm1734, %v1731, %v1574
        %v1744 = vsel %vm1734, %v1733, %v1576
        %vm1745 = vcmask 130048
        %v1747 = vsel %vm1745, %v1736, %v1593
        %v1749 = vsel %vm1745, %v1738, %v1595
        %v1751 = vsel %vm1745, %v1740, %v1597
        %v1753 = vsel %vm1745, %v1742, %v1599
        %v1755 = vsel %vm1745, %v1744, %v1601
        %vm1756 = vcmask 162816
        %v1758 = vsel %vm1756, %v1747, %v1618
        %v1760 = vsel %vm1756, %v1749, %v1620
        %v1762 = vsel %vm1756, %v1751, %v1622
        %v1764 = vsel %vm1756, %v1753, %v1624
        %v1766 = vsel %vm1756, %v1755, %v1626
        %vm1767 = vcmask 195584
        %v1769 = vsel %vm1767, %v1758, %v1648
        %v1771 = vsel %vm1767, %v1760, %v1650
        %v1773 = vsel %vm1767, %v1762, %v1652
        %v1775 = vsel %vm1767, %v1764, %v1654
        %v1777 = vsel %vm1767, %v1766, %v1656
        %vm1778 = vcmask 228352
        %v1780 = vsel %vm1778, %v1769, %v1673
        %v1782 = vsel %vm1778, %v1771, %v1675
        %v1784 = vsel %vm1778, %v1773, %v1677
        %v1786 = vsel %vm1778, %v1775, %v1679
        %v1788 = vsel %vm1778, %v1777, %v1681
        %vm1789 = vcmask 261120
        %v1791 = vsel %vm1789, %v1780, %v1698
        %v1793 = vsel %vm1789, %v1782, %v1700
        %v1795 = vsel %vm1789, %v1784, %v1702
        %v1797 = vsel %vm1789, %v1786, %v1704
        %v1799 = vsel %vm1789, %v1788, %v1706
        %vm1800 = vcmask 293888
        %v1802 = vsel %vm1800, %v1791, 0
        %v1804 = vsel %vm1800, %v1793, 0
        %v1806 = vsel %vm1800, %v1795, 0
        %v1808 = vsel %vm1800, %v1797, 0
        %v1810 = vsel %vm1800, %v1799, 0
        %1812 = vst [vmem:[#allocation4] sm:$0xff] %v1802
        %1813 = vst [vmem:[#allocation4 + $0x8] sm:$0xff] %v1804
        %1814 = vst [vmem:[#allocation4 + $0x10] sm:$0xff] %v1806
        %1815 = vst [vmem:[#allocation4 + $0x18] sm:$0xff] %v1808
        %1816 = vst [vmem:[#allocation4 + $0x20] sm:$0xff] %v1810
        %v1817 = vld [vmem:[#allocation4] sm:$0xff]
        %v1818 = vld [vmem:[#allocation4 + $0x8] sm:$0xff]
        %v1819 = vld [vmem:[#allocation4 + $0x10] sm:$0xff]
        %v1820 = vld [vmem:[#allocation4 + $0x18] sm:$0xff]
        %v1821 = vld [vmem:[#allocation4 + $0x20] sm:$0xff]
        %v1822 = vld [vmem:[#allocation11] sm:$0xf]
        %v1823 = vld [vmem:[#allocation11 + $0x4] sm:$0xf]
        %v1824 = vld [vmem:[#allocation11 + $0x8] sm:$0xf]
        %v1825 = vld [vmem:[#allocation11 + $0xc] sm:$0xf]
        %v1826 = vld [vmem:[#allocation11 + $0x10] sm:$0xf]
        %v1827 = vld [vmem:[#allocation11 + $0x14] sm:$0xf]
        %v1828 = vld [vmem:[#allocation11 + $0x18] sm:$0xf]
        %v1829 = vld [vmem:[#allocation11 + $0x1c] sm:$0xf]
        %v1830 = vld [vmem:[#allocation11 + $0x20] sm:$0xf]
        %v1831 = vld [vmem:[#allocation11 + $0x24] sm:$0xf]
        %v1832 = vld [vmem:[#allocation11 + $0x28] sm:$0xf]
        %v1833 = vld [vmem:[#allocation11 + $0x2c] sm:$0xf]
        %v1834 = vld [vmem:[#allocation11 + $0x30] sm:$0xf]
        %v1835 = vld [vmem:[#allocation11 + $0x34] sm:$0xf]
        %v1836 = vld [vmem:[#allocation11 + $0x38] sm:$0xf]
        %v1837 = vld [vmem:[#allocation11 + $0x3c] sm:$0xf]
        %v1838 = vld [vmem:[%s4] sm:$0x1]
        %v1840 = vlaneseq
        %v1841 = vshrl.u32 %v1840, 7
        %v1842 = vsub.s32 0, %v1841
        %v1843 = vrot.slane %v1838, %v1842
        %v1861 = vunpack.c.l.b16 %v1822
        %v1862 = vunpack.c.l.b16 %v1823
        %v1863 = vunpack.c.l.b16 %v1824
        %v1864 = vunpack.c.l.b16 %v1825
        %v1865 = vunpack.c.l.b16 %v1826
        %v1866 = vunpack.c.l.b16 %v1827
        %v1867 = vunpack.c.l.b16 %v1828
        %v1868 = vunpack.c.l.b16 %v1829
        %v1869 = vunpack.c.l.b16 %v1830
        %v1870 = vunpack.c.l.b16 %v1831
        %v1871 = vunpack.c.l.b16 %v1832
        %v1872 = vunpack.c.l.b16 %v1833
        %v1873 = vunpack.c.l.b16 %v1834
        %v1874 = vunpack.c.l.b16 %v1835
        %v1875 = vunpack.c.l.b16 %v1836
        %v1876 = vunpack.c.l.b16 %v1837
        %v1877 = vpack.c.b16 %v1862, %v1861
        %v1878 = vpack.c.b16 %v1864, %v1863
        %v1879 = vpack.c.b16 %v1866, %v1865
        %v1880 = vpack.c.b16 %v1868, %v1867
        %v1881 = vpack.c.b16 %v1870, %v1869
        %v1882 = vpack.c.b16 %v1872, %v1871
        %v1883 = vpack.c.b16 %v1874, %v1873
        %v1884 = vpack.c.b16 %v1876, %v1875
        %1893 = vmatprep.subr.bf16.mxu0 0
        %1894 = vmatpush1.bf16.msra.mxu0 %v1877
        %1895 = vmatprep.subr.bf16.mxu0 0
        %1896 = vmatpush1.bf16.msra.mxu0 %v1878
        %1897 = vmatprep.subr.bf16.mxu0 0
        %1898 = vmatpush1.bf16.msra.mxu0 %v1879
        %1899 = vmatprep.subr.bf16.mxu0 0
        %1900 = vmatpush1.bf16.msra.mxu0 %v1880
        %1901 = vmatprep.subr.bf16.mxu0 0
        %1902 = vmatpush1.bf16.msra.mxu0 %v1881
        %1903 = vmatprep.subr.bf16.mxu0 0
        %1904 = vmatpush1.bf16.msra.mxu0 %v1882
        %1905 = vmatprep.subr.bf16.mxu0 0
        %1906 = vmatpush1.bf16.msra.mxu0 %v1883
        %1907 = vmatprep.subr.bf16.mxu0 0
        %1908 = vmatpush1.bf16.msra.mxu0 %v1884
        %1909 = vmatprep.subr.bf16.mxu0 0
        %1910 = vmatpush1.bf16.msra.mxu0 0
        %1911 = vmatprep.subr.bf16.mxu0 0
        %1912 = vmatpush1.bf16.msra.mxu0 0
        %1913 = vmatprep.subr.bf16.mxu0 0
        %1914 = vmatpush1.bf16.msra.mxu0 0
        %1915 = vmatprep.subr.bf16.mxu0 0
        %1916 = vmatpush1.bf16.msra.mxu0 0
        %1917 = vmatprep.subr.bf16.mxu0 0
        %1918 = vmatpush1.bf16.msra.mxu0 0
        %1919 = vmatprep.subr.bf16.mxu0 0
        %1920 = vmatpush1.bf16.msra.mxu0 0
        %1921 = vmatprep.subr.bf16.mxu0 0
        %1922 = vmatpush1.bf16.msra.mxu0 0
        %1923 = vmatprep.subr.bf16.mxu0 0
        %1924 = vmatpush1.bf16.msra.mxu0 0
        %1925 = vmatprep.mubr.bf16.mxu0 0
        %1926 = vmatmul.mubr.bf16.gmra.mrb[0].mxu0 %v1817
        %v1927 = vpop.f32.mrb[0].mxu0
        %v1928 = vadd.f32 %v1843, %v1927
        %v1929 = vpop.f32.mrb[0].mxu0
        %v1930 = vpop.f32.mrb[0].mxu0
        %v1931 = vadd.f32 %v1843, %v1930
        %v1932 = vpop.f32.mrb[0].mxu0
        %1933 = vmatprep.mubr.bf16.mxu0 0
        %1934 = vmatmul.mubr.bf16.gmra.mrb[0].mxu0 %v1818
        %v1935 = vpop.f32.mrb[0].mxu0
        %v1936 = vadd.f32 %v1843, %v1935
        %v1937 = vpop.f32.mrb[0].mxu0
        %v1938 = vpop.f32.mrb[0].mxu0
        %v1939 = vadd.f32 %v1843, %v1938
        %v1940 = vpop.f32.mrb[0].mxu0
        %1941 = vmatprep.mubr.bf16.mxu0 0
        %1942 = vmatmul.mubr.bf16.gmra.mrb[0].mxu0 %v1819
        %v1943 = vpop.f32.mrb[0].mxu0
        %v1944 = vadd.f32 %v1843, %v1943
        %v1945 = vpop.f32.mrb[0].mxu0
        %v1946 = vpop.f32.mrb[0].mxu0
        %v1947 = vadd.f32 %v1843, %v1946
        %v1948 = vpop.f32.mrb[0].mxu0
        %1949 = vmatprep.mubr.bf16.mxu0 0
        %1950 = vmatmul.mubr.bf16.gmra.mrb[0].mxu0 %v1820
        %v1951 = vpop.f32.mrb[0].mxu0
        %v1952 = vadd.f32 %v1843, %v1951
        %v1953 = vpop.f32.mrb[0].mxu0
        %v1954 = vpop.f32.mrb[0].mxu0
        %v1955 = vadd.f32 %v1843, %v1954
        %v1956 = vpop.f32.mrb[0].mxu0
        %1957 = vmatprep.mubr.bf16.mxu0 0
        %1958 = vmatmul.mubr.bf16.gmra.mrb[0].mxu0 %v1821
        %v1959 = vpop.f32.mrb[0].mxu0
        %v1960 = vadd.f32 %v1843, %v1959
        %v1961 = vpop.f32.mrb[0].mxu0
        %v1962 = vpop.f32.mrb[0].mxu0
        %v1963 = vadd.f32 %v1843, %v1962
        %v1964 = vpop.f32.mrb[0].mxu0
        %1965 = vdwg.mxu0
        %v1966 = vmax.f32 %v1928, 0.0
        %v1967 = vmax.f32 %v1931, 0.0
        %v1968 = vmax.f32 %v1936, 0.0
        %v1969 = vmax.f32 %v1939, 0.0
        %v1970 = vmax.f32 %v1944, 0.0
        %v1971 = vmax.f32 %v1947, 0.0
        %v1972 = vmax.f32 %v1952, 0.0
        %v1973 = vmax.f32 %v1955, 0.0
        %v1974 = vmax.f32 %v1960, 0.0
        %v1975 = vmax.f32 %v1963, 0.0
        %v1976 = vpack.c.bf16 %v1967, %v1966
        %v1977 = vpack.c.bf16 %v1969, %v1968
        %v1978 = vpack.c.bf16 %v1971, %v1970
        %v1979 = vpack.c.bf16 %v1973, %v1972
        %v1980 = vpack.c.bf16 %v1975, %v1974
        %v1982 = vshrl.u32 %v1976, 16
        %v1984 = vrot.slane %v1982, 7
        %v1985 = vshll.u32 %v1976, 16
        %v1987 = vor.u32 %v1984, %v1985
        %v1989 = vshrl.u32 %v1977, 16
        %v1991 = vrot.slane %v1989, 7
        %v1992 = vshll.u32 %v1977, 16
        %v1994 = vor.u32 %v1991, %v1992
        %v1996 = vshrl.u32 %v1978, 16
        %v1998 = vrot.slane %v1996, 7
        %v1999 = vshll.u32 %v1978, 16
        %v2001 = vor.u32 %v1998, %v1999
        %v2003 = vshrl.u32 %v1979, 16
        %v2005 = vrot.slane %v2003, 7
        %v2006 = vshll.u32 %v1979, 16
        %v2008 = vor.u32 %v2005, %v2006
        %v2010 = vshrl.u32 %v1980, 16
        %v2012 = vrot.slane %v2010, 7
        %v2013 = vshll.u32 %v1980, 16
        %v2015 = vor.u32 %v2012, %v2013
        %v2026 = vsel %vm535, 0, %v1987
        %v2027 = vsel %vm535, 0, %v1994
        %v2028 = vsel %vm535, 0, %v2001
        %v2029 = vsel %vm535, 0, %v2008
        %v2030 = vsel %vm535, 0, %v2015
        %v2031 = vsel %vm535, %v1984, 0
        %v2032 = vsel %vm535, %v1991, 0
        %v2033 = vsel %vm535, %v1998, 0
        %v2034 = vsel %vm535, %v2005, 0
        %v2035 = vsel %vm535, %v2012, 0
        %v2046 = vunpack.c.l.b16 %v2026
        %v2047 = vunpack.c.h.b16 %v2026
        %v2048 = vunpack.c.l.b16 %v2031
        %v2049 = vunpack.c.l.b16 %v2027
        %v2050 = vunpack.c.h.b16 %v2027
        %v2051 = vunpack.c.l.b16 %v2032
        %v2052 = vunpack.c.l.b16 %v2028
        %v2053 = vunpack.c.h.b16 %v2028
        %v2054 = vunpack.c.l.b16 %v2033
        %v2055 = vunpack.c.l.b16 %v2029
        %v2056 = vunpack.c.h.b16 %v2029
        %v2057 = vunpack.c.l.b16 %v2034
        %v2058 = vunpack.c.l.b16 %v2030
        %v2059 = vunpack.c.h.b16 %v2030
        %v2060 = vunpack.c.l.b16 %v2035
        %v2061 = vpack.c.b16 %v2046, %v2046
        %v2062 = vpack.c.b16 %v2047, %v2047
        %v2063 = vpack.c.b16 %v2048, %v2048
        %v2064 = vpack.c.b16 %v2049, %v2049
        %v2065 = vpack.c.b16 %v2050, %v2050
        %v2066 = vpack.c.b16 %v2051, %v2051
        %v2067 = vpack.c.b16 %v2052, %v2052
        %v2068 = vpack.c.b16 %v2053, %v2053
        %v2069 = vpack.c.b16 %v2054, %v2054
        %v2070 = vpack.c.b16 %v2055, %v2055
        %v2071 = vpack.c.b16 %v2056, %v2056
        %v2072 = vpack.c.b16 %v2057, %v2057
        %v2073 = vpack.c.b16 %v2058, %v2058
        %v2074 = vpack.c.b16 %v2059, %v2059
        %v2075 = vpack.c.b16 %v2060, %v2060
        %2091 = vst.msk [vmem:[#allocation3] sm:$0xf] %vm562, %v2061
        %2092 = vst.msk [vmem:[#allocation3 + $0x4] sm:$0xf] %vm562, %v2062
        %2093 = vst.msk [vmem:[#allocation3 + $0x8] sm:$0x1] %vm565, %v2063
        %2094 = vst.msk [vmem:[#allocation3 + $0xc] sm:$0xf] %vm562, %v2064
        %2095 = vst.msk [vmem:[#allocation3 + $0x10] sm:$0xf] %vm562, %v2065
        %2096 = vst.msk [vmem:[#allocation3 + $0x14] sm:$0x1] %vm565, %v2066
        %2097 = vst.msk [vmem:[#allocation3 + $0x18] sm:$0xf] %vm562, %v2067
        %2098 = vst.msk [vmem:[#allocation3 + $0x1c] sm:$0xf] %vm562, %v2068
        %2099 = vst.msk [vmem:[#allocation3 + $0x20] sm:$0x1] %vm565, %v2069
        %2100 = vst.msk [vmem:[#allocation3 + $0x24] sm:$0xf] %vm562, %v2070
        %2101 = vst.msk [vmem:[#allocation3 + $0x28] sm:$0xf] %vm562, %v2071
        %2102 = vst.msk [vmem:[#allocation3 + $0x2c] sm:$0x1] %vm565, %v2072
        %2103 = vst.msk [vmem:[#allocation3 + $0x30] sm:$0xf] %vm562, %v2073
        %2104 = vst.msk [vmem:[#allocation3 + $0x34] sm:$0xf] %vm562, %v2074
        %2105 = vst.msk [vmem:[#allocation3 + $0x38] sm:$0x1] %vm565, %v2075
        %s2106 = scalar_lea.vmem [#allocation2], 60
        %v2107 = vld [vmem:[%s2106] sm:$0xf]
        %v2108 = vld [vmem:[%s2106 + $0x4] sm:$0xf]
        %v2109 = vld [vmem:[%s2106 + $0xc] sm:$0xf]
        %v2110 = vld [vmem:[%s2106 + $0x10] sm:$0xf]
        %v2111 = vld [vmem:[%s2106 + $0x18] sm:$0xf]
        %v2112 = vld [vmem:[%s2106 + $0x1c] sm:$0xf]
        %v2113 = vld [vmem:[%s2106 + $0x24] sm:$0xf]
        %v2114 = vld [vmem:[%s2106 + $0x28] sm:$0xf]
        %v2115 = vld [vmem:[%s2106 + $0x30] sm:$0xf]
        %v2116 = vld [vmem:[%s2106 + $0x34] sm:$0xf]
        %v2117 = vld [vmem:[%s2106 + $0x8] sm:$0x1]
        %v2118 = vld [vmem:[%s2106 + $0x14] sm:$0x1]
        %v2119 = vld [vmem:[%s2106 + $0x20] sm:$0x1]
        %v2120 = vld [vmem:[%s2106 + $0x2c] sm:$0x1]
        %v2121 = vld [vmem:[%s2106 + $0x38] sm:$0x1]
        %v2123 = vshrl.u32 %v2107, 16
        %v2125 = vrot.slane %v2123, 4
        %v2126 = vshll.u32 %v2107, 16
        %v2128 = vrot.slane %v2126, 5
        %v2129 = vor.u32 %v2125, %v2128
        %v2130 = vrot.slane %v2129, 4
        %v2132 = vshll.u32 %v2108, 16
        %v2134 = vrot.slane %v2132, 5
        %v2135 = vsel %vm917, %v2130, %v2134
        %v2136 = vshrl.u32 %v2108, 16
        %v2138 = vrot.slane %v2136, 4
        %v2139 = vor.u32 %v2138, %v2134
        %v2140 = vrot.slane %v2139, 4
        %v2142 = vshll.u32 %v2117, 16
        %v2144 = vrot.slane %v2142, 5
        %v2145 = vsel %vm917, %v2140, %v2144
        %v2147 = vshrl.u32 %v2109, 16
        %v2149 = vrot.slane %v2147, 4
        %v2150 = vshll.u32 %v2109, 16
        %v2152 = vrot.slane %v2150, 5
        %v2153 = vor.u32 %v2149, %v2152
        %v2154 = vrot.slane %v2153, 4
        %v2156 = vshll.u32 %v2110, 16
        %v2158 = vrot.slane %v2156, 5
        %v2159 = vsel %vm917, %v2154, %v2158
        %v2160 = vshrl.u32 %v2110, 16
        %v2162 = vrot.slane %v2160, 4
        %v2163 = vor.u32 %v2162, %v2158
        %v2164 = vrot.slane %v2163, 4
        %v2166 = vshll.u32 %v2118, 16
        %v2168 = vrot.slane %v2166, 5
        %v2169 = vsel %vm917, %v2164, %v2168
        %v2171 = vshrl.u32 %v2111, 16
        %v2173 = vrot.slane %v2171, 4
        %v2174 = vshll.u32 %v2111, 16
        %v2176 = vrot.slane %v2174, 5
        %v2177 = vor.u32 %v2173, %v2176
        %v2178 = vrot.slane %v2177, 4
        %v2180 = vshll.u32 %v2112, 16
        %v2182 = vrot.slane %v2180, 5
        %v2183 = vsel %vm917, %v2178, %v2182
        %v2184 = vshrl.u32 %v2112, 16
        %v2186 = vrot.slane %v2184, 4
        %v2187 = vor.u32 %v2186, %v2182
        %v2188 = vrot.slane %v2187, 4
        %v2190 = vshll.u32 %v2119, 16
        %v2192 = vrot.slane %v2190, 5
        %v2193 = vsel %vm917, %v2188, %v2192
        %v2195 = vshrl.u32 %v2113, 16
        %v2197 = vrot.slane %v2195, 4
        %v2198 = vshll.u32 %v2113, 16
        %v2200 = vrot.slane %v2198, 5
        %v2201 = vor.u32 %v2197, %v2200
        %v2202 = vrot.slane %v2201, 4
        %v2204 = vshll.u32 %v2114, 16
        %v2206 = vrot.slane %v2204, 5
        %v2207 = vsel %vm917, %v2202, %v2206
        %v2208 = vshrl.u32 %v2114, 16
        %v2210 = vrot.slane %v2208, 4
        %v2211 = vor.u32 %v2210, %v2206
        %v2212 = vrot.slane %v2211, 4
        %v2214 = vshll.u32 %v2120, 16
        %v2216 = vrot.slane %v2214, 5
        %v2217 = vsel %vm917, %v2212, %v2216
        %v2219 = vshrl.u32 %v2115, 16
        %v2221 = vrot.slane %v2219, 4
        %v2222 = vshll.u32 %v2115, 16
        %v2224 = vrot.slane %v2222, 5
        %v2225 = vor.u32 %v2221, %v2224
        %v2226 = vrot.slane %v2225, 4
        %v2228 = vshll.u32 %v2116, 16
        %v2230 = vrot.slane %v2228, 5
        %v2231 = vsel %vm917, %v2226, %v2230
        %v2232 = vshrl.u32 %v2116, 16
        %v2234 = vrot.slane %v2232, 4
        %v2235 = vor.u32 %v2234, %v2230
        %v2236 = vrot.slane %v2235, 4
        %v2238 = vshll.u32 %v2121, 16
        %v2240 = vrot.slane %v2238, 5
        %v2241 = vsel %vm917, %v2236, %v2240
        %v2242 = vld [vmem:[%s2106] sm:$0xe]
        %v2243 = vld [vmem:[%s2106 + $0xc] sm:$0xe]
        %v2244 = vld [vmem:[%s2106 + $0x18] sm:$0xe]
        %v2245 = vld [vmem:[%s2106 + $0x24] sm:$0xe]
        %v2246 = vld [vmem:[%s2106 + $0x30] sm:$0xe]
        %v2262 = vrot.slane %v2242, 5
        %v2263 = vrot.slane %v2262, 4
        %v2264 = vrot.slane %v2108, 5
        %v2265 = vsel %vm1060, %v2263, %v2264
        %v2266 = vrot.slane %v2264, 4
        %v2267 = vrot.slane %v2117, 5
        %v2268 = vsel %vm1060, %v2266, %v2267
        %v2269 = vrot.slane %v2243, 5
        %v2270 = vrot.slane %v2269, 4
        %v2271 = vrot.slane %v2110, 5
        %v2272 = vsel %vm1060, %v2270, %v2271
        %v2273 = vrot.slane %v2271, 4
        %v2274 = vrot.slane %v2118, 5
        %v2275 = vsel %vm1060, %v2273, %v2274
        %v2276 = vrot.slane %v2244, 5
        %v2277 = vrot.slane %v2276, 4
        %v2278 = vrot.slane %v2112, 5
        %v2279 = vsel %vm1060, %v2277, %v2278
        %v2280 = vrot.slane %v2278, 4
        %v2281 = vrot.slane %v2119, 5
        %v2282 = vsel %vm1060, %v2280, %v2281
        %v2283 = vrot.slane %v2245, 5
        %v2284 = vrot.slane %v2283, 4
        %v2285 = vrot.slane %v2114, 5
        %v2286 = vsel %vm1060, %v2284, %v2285
        %v2287 = vrot.slane %v2285, 4
        %v2288 = vrot.slane %v2120, 5
        %v2289 = vsel %vm1060, %v2287, %v2288
        %v2290 = vrot.slane %v2246, 5
        %v2291 = vrot.slane %v2290, 4
        %v2292 = vrot.slane %v2116, 5
        %v2293 = vsel %vm1060, %v2291, %v2292
        %v2294 = vrot.slane %v2292, 4
        %v2295 = vrot.slane %v2121, 5
        %v2296 = vsel %vm1060, %v2294, %v2295
        %s2297 = scalar_lea.vmem [#allocation2], 72
        %v2298 = vld [vmem:[%s2297] sm:$0xf]
        %v2299 = vld [vmem:[%s2297 + $0x4] sm:$0xf]
        %v2300 = vld [vmem:[%s2297 + $0xc] sm:$0xf]
        %v2301 = vld [vmem:[%s2297 + $0x10] sm:$0xf]
        %v2302 = vld [vmem:[%s2297 + $0x18] sm:$0xf]
        %v2303 = vld [vmem:[%s2297 + $0x1c] sm:$0xf]
        %v2304 = vld [vmem:[%s2297 + $0x24] sm:$0xf]
        %v2305 = vld [vmem:[%s2297 + $0x28] sm:$0xf]
        %v2306 = vld [vmem:[%s2297 + $0x30] sm:$0xf]
        %v2307 = vld [vmem:[%s2297 + $0x34] sm:$0xf]
        %v2308 = vld [vmem:[%s2297 + $0x8] sm:$0x1]
        %v2309 = vld [vmem:[%s2297 + $0x14] sm:$0x1]
        %v2310 = vld [vmem:[%s2297 + $0x20] sm:$0x1]
        %v2311 = vld [vmem:[%s2297 + $0x2c] sm:$0x1]
        %v2312 = vld [vmem:[%s2297 + $0x38] sm:$0x1]
        %v2314 = vshrl.u32 %v2298, 16
        %v2316 = vrot.slane %v2314, 4
        %v2317 = vshll.u32 %v2298, 16
        %v2319 = vrot.slane %v2317, 5
        %v2320 = vor.u32 %v2316, %v2319
        %v2321 = vrot.slane %v2320, 4
        %v2323 = vshll.u32 %v2299, 16
        %v2325 = vrot.slane %v2323, 5
        %v2326 = vsel %vm917, %v2321, %v2325
        %v2327 = vshrl.u32 %v2299, 16
        %v2329 = vrot.slane %v2327, 4
        %v2330 = vor.u32 %v2329, %v2325
        %v2331 = vrot.slane %v2330, 4
        %v2333 = vshll.u32 %v2308, 16
        %v2335 = vrot.slane %v2333, 5
        %v2336 = vsel %vm917, %v2331, %v2335
        %v2338 = vshrl.u32 %v2300, 16
        %v2340 = vrot.slane %v2338, 4
        %v2341 = vshll.u32 %v2300, 16
        %v2343 = vrot.slane %v2341, 5
        %v2344 = vor.u32 %v2340, %v2343
        %v2345 = vrot.slane %v2344, 4
        %v2347 = vshll.u32 %v2301, 16
        %v2349 = vrot.slane %v2347, 5
        %v2350 = vsel %vm917, %v2345, %v2349
        %v2351 = vshrl.u32 %v2301, 16
        %v2353 = vrot.slane %v2351, 4
        %v2354 = vor.u32 %v2353, %v2349
        %v2355 = vrot.slane %v2354, 4
        %v2357 = vshll.u32 %v2309, 16
        %v2359 = vrot.slane %v2357, 5
        %v2360 = vsel %vm917, %v2355, %v2359
        %v2362 = vshrl.u32 %v2302, 16
        %v2364 = vrot.slane %v2362, 4
        %v2365 = vshll.u32 %v2302, 16
        %v2367 = vrot.slane %v2365, 5
        %v2368 = vor.u32 %v2364, %v2367
        %v2369 = vrot.slane %v2368, 4
        %v2371 = vshll.u32 %v2303, 16
        %v2373 = vrot.slane %v2371, 5
        %v2374 = vsel %vm917, %v2369, %v2373
        %v2375 = vshrl.u32 %v2303, 16
        %v2377 = vrot.slane %v2375, 4
        %v2378 = vor.u32 %v2377, %v2373
        %v2379 = vrot.slane %v2378, 4
        %v2381 = vshll.u32 %v2310, 16
        %v2383 = vrot.slane %v2381, 5
        %v2384 = vsel %vm917, %v2379, %v2383
        %v2386 = vshrl.u32 %v2304, 16
        %v2388 = vrot.slane %v2386, 4
        %v2389 = vshll.u32 %v2304, 16
        %v2391 = vrot.slane %v2389, 5
        %v2392 = vor.u32 %v2388, %v2391
        %v2393 = vrot.slane %v2392, 4
        %v2395 = vshll.u32 %v2305, 16
        %v2397 = vrot.slane %v2395, 5
        %v2398 = vsel %vm917, %v2393, %v2397
        %v2399 = vshrl.u32 %v2305, 16
        %v2401 = vrot.slane %v2399, 4
        %v2402 = vor.u32 %v2401, %v2397
        %v2403 = vrot.slane %v2402, 4
        %v2405 = vshll.u32 %v2311, 16
        %v2407 = vrot.slane %v2405, 5
        %v2408 = vsel %vm917, %v2403, %v2407
        %v2410 = vshrl.u32 %v2306, 16
        %v2412 = vrot.slane %v2410, 4
        %v2413 = vshll.u32 %v2306, 16
        %v2415 = vrot.slane %v2413, 5
        %v2416 = vor.u32 %v2412, %v2415
        %v2417 = vrot.slane %v2416, 4
        %v2419 = vshll.u32 %v2307, 16
        %v2421 = vrot.slane %v2419, 5
        %v2422 = vsel %vm917, %v2417, %v2421
        %v2423 = vshrl.u32 %v2307, 16
        %v2425 = vrot.slane %v2423, 4
        %v2426 = vor.u32 %v2425, %v2421
        %v2427 = vrot.slane %v2426, 4
        %v2429 = vshll.u32 %v2312, 16
        %v2431 = vrot.slane %v2429, 5
        %v2432 = vsel %vm917, %v2427, %v2431
        %v2433 = vld [vmem:[%s2297] sm:$0xe]
        %v2434 = vld [vmem:[%s2297 + $0xc] sm:$0xe]
        %v2435 = vld [vmem:[%s2297 + $0x18] sm:$0xe]
        %v2436 = vld [vmem:[%s2297 + $0x24] sm:$0xe]
        %v2437 = vld [vmem:[%s2297 + $0x30] sm:$0xe]
        %v2453 = vrot.slane %v2433, 5
        %v2454 = vrot.slane %v2453, 4
        %v2455 = vrot.slane %v2299, 5
        %v2456 = vsel %vm1060, %v2454, %v2455
        %v2457 = vrot.slane %v2455, 4
        %v2458 = vrot.slane %v2308, 5
        %v2459 = vsel %vm1060, %v2457, %v2458
        %v2460 = vrot.slane %v2434, 5
        %v2461 = vrot.slane %v2460, 4
        %v2462 = vrot.slane %v2301, 5
        %v2463 = vsel %vm1060, %v2461, %v2462
        %v2464 = vrot.slane %v2462, 4
        %v2465 = vrot.slane %v2309, 5
        %v2466 = vsel %vm1060, %v2464, %v2465
        %v2467 = vrot.slane %v2435, 5
        %v2468 = vrot.slane %v2467, 4
        %v2469 = vrot.slane %v2303, 5
        %v2470 = vsel %vm1060, %v2468, %v2469
        %v2471 = vrot.slane %v2469, 4
        %v2472 = vrot.slane %v2310, 5
        %v2473 = vsel %vm1060, %v2471, %v2472
        %v2474 = vrot.slane %v2436, 5
        %v2475 = vrot.slane %v2474, 4
        %v2476 = vrot.slane %v2305, 5
        %v2477 = vsel %vm1060, %v2475, %v2476
        %v2478 = vrot.slane %v2476, 4
        %v2479 = vrot.slane %v2311, 5
        %v2480 = vsel %vm1060, %v2478, %v2479
        %v2481 = vrot.slane %v2437, 5
        %v2482 = vrot.slane %v2481, 4
        %v2483 = vrot.slane %v2307, 5
        %v2484 = vsel %vm1060, %v2482, %v2483
        %v2485 = vrot.slane %v2483, 4
        %v2486 = vrot.slane %v2312, 5
        %v2487 = vsel %vm1060, %v2485, %v2486
        %s2488 = scalar_lea.vmem [#allocation2], 84
        %v2489 = vld [vmem:[%s2488] sm:$0xf]
        %v2490 = vld [vmem:[%s2488 + $0x4] sm:$0xf]
        %v2491 = vld [vmem:[%s2488 + $0xc] sm:$0xf]
        %v2492 = vld [vmem:[%s2488 + $0x10] sm:$0xf]
        %v2493 = vld [vmem:[%s2488 + $0x18] sm:$0xf]
        %v2494 = vld [vmem:[%s2488 + $0x1c] sm:$0xf]
        %v2495 = vld [vmem:[%s2488 + $0x24] sm:$0xf]
        %v2496 = vld [vmem:[%s2488 + $0x28] sm:$0xf]
        %v2497 = vld [vmem:[%s2488 + $0x30] sm:$0xf]
        %v2498 = vld [vmem:[%s2488 + $0x34] sm:$0xf]
        %v2499 = vld [vmem:[%s2488 + $0x8] sm:$0x1]
        %v2500 = vld [vmem:[%s2488 + $0x14] sm:$0x1]
        %v2501 = vld [vmem:[%s2488 + $0x20] sm:$0x1]
        %v2502 = vld [vmem:[%s2488 + $0x2c] sm:$0x1]
        %v2503 = vld [vmem:[%s2488 + $0x38] sm:$0x1]
        %v2505 = vshrl.u32 %v2489, 16
        %v2507 = vrot.slane %v2505, 4
        %v2508 = vshll.u32 %v2489, 16
        %v2510 = vrot.slane %v2508, 5
        %v2511 = vor.u32 %v2507, %v2510
        %v2512 = vrot.slane %v2511, 4
        %v2514 = vshll.u32 %v2490, 16
        %v2516 = vrot.slane %v2514, 5
        %v2517 = vsel %vm917, %v2512, %v2516
        %v2518 = vshrl.u32 %v2490, 16
        %v2520 = vrot.slane %v2518, 4
        %v2521 = vor.u32 %v2520, %v2516
        %v2522 = vrot.slane %v2521, 4
        %v2524 = vshll.u32 %v2499, 16
        %v2526 = vrot.slane %v2524, 5
        %v2527 = vsel %vm917, %v2522, %v2526
        %v2529 = vshrl.u32 %v2491, 16
        %v2531 = vrot.slane %v2529, 4
        %v2532 = vshll.u32 %v2491, 16
        %v2534 = vrot.slane %v2532, 5
        %v2535 = vor.u32 %v2531, %v2534
        %v2536 = vrot.slane %v2535, 4
        %v2538 = vshll.u32 %v2492, 16
        %v2540 = vrot.slane %v2538, 5
        %v2541 = vsel %vm917, %v2536, %v2540
        %v2542 = vshrl.u32 %v2492, 16
        %v2544 = vrot.slane %v2542, 4
        %v2545 = vor.u32 %v2544, %v2540
        %v2546 = vrot.slane %v2545, 4
        %v2548 = vshll.u32 %v2500, 16
        %v2550 = vrot.slane %v2548, 5
        %v2551 = vsel %vm917, %v2546, %v2550
        %v2553 = vshrl.u32 %v2493, 16
        %v2555 = vrot.slane %v2553, 4
        %v2556 = vshll.u32 %v2493, 16
        %v2558 = vrot.slane %v2556, 5
        %v2559 = vor.u32 %v2555, %v2558
        %v2560 = vrot.slane %v2559, 4
        %v2562 = vshll.u32 %v2494, 16
        %v2564 = vrot.slane %v2562, 5
        %v2565 = vsel %vm917, %v2560, %v2564
        %v2566 = vshrl.u32 %v2494, 16
        %v2568 = vrot.slane %v2566, 4
        %v2569 = vor.u32 %v2568, %v2564
        %v2570 = vrot.slane %v2569, 4
        %v2572 = vshll.u32 %v2501, 16
        %v2574 = vrot.slane %v2572, 5
        %v2575 = vsel %vm917, %v2570, %v2574
        %v2577 = vshrl.u32 %v2495, 16
        %v2579 = vrot.slane %v2577, 4
        %v2580 = vshll.u32 %v2495, 16
        %v2582 = vrot.slane %v2580, 5
        %v2583 = vor.u32 %v2579, %v2582
        %v2584 = vrot.slane %v2583, 4
        %v2586 = vshll.u32 %v2496, 16
        %v2588 = vrot.slane %v2586, 5
        %v2589 = vsel %vm917, %v2584, %v2588
        %v2590 = vshrl.u32 %v2496, 16
        %v2592 = vrot.slane %v2590, 4
        %v2593 = vor.u32 %v2592, %v2588
        %v2594 = vrot.slane %v2593, 4
        %v2596 = vshll.u32 %v2502, 16
        %v2598 = vrot.slane %v2596, 5
        %v2599 = vsel %vm917, %v2594, %v2598
        %v2601 = vshrl.u32 %v2497, 16
        %v2603 = vrot.slane %v2601, 4
        %v2604 = vshll.u32 %v2497, 16
        %v2606 = vrot.slane %v2604, 5
        %v2607 = vor.u32 %v2603, %v2606
        %v2608 = vrot.slane %v2607, 4
        %v2610 = vshll.u32 %v2498, 16
        %v2612 = vrot.slane %v2610, 5
        %v2613 = vsel %vm917, %v2608, %v2612
        %v2614 = vshrl.u32 %v2498, 16
        %v2616 = vrot.slane %v2614, 4
        %v2617 = vor.u32 %v2616, %v2612
        %v2618 = vrot.slane %v2617, 4
        %v2620 = vshll.u32 %v2503, 16
        %v2622 = vrot.slane %v2620, 5
        %v2623 = vsel %vm917, %v2618, %v2622
        %v2624 = vld [vmem:[%s2488] sm:$0xe]
        %v2625 = vld [vmem:[%s2488 + $0xc] sm:$0xe]
        %v2626 = vld [vmem:[%s2488 + $0x18] sm:$0xe]
        %v2627 = vld [vmem:[%s2488 + $0x24] sm:$0xe]
        %v2628 = vld [vmem:[%s2488 + $0x30] sm:$0xe]
        %v2644 = vrot.slane %v2624, 5
        %v2645 = vrot.slane %v2644, 4
        %v2646 = vrot.slane %v2490, 5
        %v2647 = vsel %vm1060, %v2645, %v2646
        %v2648 = vrot.slane %v2646, 4
        %v2649 = vrot.slane %v2499, 5
        %v2650 = vsel %vm1060, %v2648, %v2649
        %v2651 = vrot.slane %v2625, 5
        %v2652 = vrot.slane %v2651, 4
        %v2653 = vrot.slane %v2492, 5
        %v2654 = vsel %vm1060, %v2652, %v2653
        %v2655 = vrot.slane %v2653, 4
        %v2656 = vrot.slane %v2500, 5
        %v2657 = vsel %vm1060, %v2655, %v2656
        %v2658 = vrot.slane %v2626, 5
        %v2659 = vrot.slane %v2658, 4
        %v2660 = vrot.slane %v2494, 5
        %v2661 = vsel %vm1060, %v2659, %v2660
        %v2662 = vrot.slane %v2660, 4
        %v2663 = vrot.slane %v2501, 5
        %v2664 = vsel %vm1060, %v2662, %v2663
        %v2665 = vrot.slane %v2627, 5
        %v2666 = vrot.slane %v2665, 4
        %v2667 = vrot.slane %v2496, 5
        %v2668 = vsel %vm1060, %v2666, %v2667
        %v2669 = vrot.slane %v2667, 4
        %v2670 = vrot.slane %v2502, 5
        %v2671 = vsel %vm1060, %v2669, %v2670
        %v2672 = vrot.slane %v2628, 5
        %v2673 = vrot.slane %v2672, 4
        %v2674 = vrot.slane %v2498, 5
        %v2675 = vsel %vm1060, %v2673, %v2674
        %v2676 = vrot.slane %v2674, 4
        %v2677 = vrot.slane %v2503, 5
        %v2678 = vsel %vm1060, %v2676, %v2677
        %v2684 = vunpack.c.l.b16 %v2107
        %v2685 = vunpack.c.l.b16 %v2108
        %v2686 = vunpack.c.l.b16 %v2109
        %v2687 = vunpack.c.l.b16 %v2110
        %v2688 = vunpack.c.l.b16 %v2111
        %v2689 = vunpack.c.l.b16 %v2112
        %v2690 = vunpack.c.l.b16 %v2113
        %v2691 = vunpack.c.l.b16 %v2114
        %v2692 = vunpack.c.l.b16 %v2115
        %v2693 = vunpack.c.l.b16 %v2116
        %v2694 = vpack.c.b16 %v2685, %v2684
        %v2695 = vpack.c.b16 %v2687, %v2686
        %v2696 = vpack.c.b16 %v2689, %v2688
        %v2697 = vpack.c.b16 %v2691, %v2690
        %v2698 = vpack.c.b16 %v2693, %v2692
        %v2699 = vunpack.c.l.b16 %v2135
        %v2700 = vunpack.c.l.b16 %v2145
        %v2701 = vunpack.c.l.b16 %v2159
        %v2702 = vunpack.c.l.b16 %v2169
        %v2703 = vunpack.c.l.b16 %v2183
        %v2704 = vunpack.c.l.b16 %v2193
        %v2705 = vunpack.c.l.b16 %v2207
        %v2706 = vunpack.c.l.b16 %v2217
        %v2707 = vunpack.c.l.b16 %v2231
        %v2708 = vunpack.c.l.b16 %v2241
        %v2709 = vpack.c.b16 %v2700, %v2699
        %v2710 = vpack.c.b16 %v2702, %v2701
        %v2711 = vpack.c.b16 %v2704, %v2703
        %v2712 = vpack.c.b16 %v2706, %v2705
        %v2713 = vpack.c.b16 %v2708, %v2707
        %2714 = vrot.lane.b32.xlu0 %v2709, 4
        %v2715 = vpop.permute.xlu0 %2714
        %2716 = vrot.lane.b32.xlu0 %v2710, 4
        %v2717 = vpop.permute.xlu0 %2716
        %2718 = vrot.lane.b32.xlu0 %v2711, 4
        %v2719 = vpop.permute.xlu0 %2718
        %2720 = vrot.lane.b32.xlu0 %v2712, 4
        %v2721 = vpop.permute.xlu0 %2720
        %2722 = vrot.lane.b32.xlu0 %v2713, 4
        %v2723 = vpop.permute.xlu0 %2722
        %v2724 = vunpack.c.l.b16 %v2265
        %v2725 = vunpack.c.l.b16 %v2268
        %v2726 = vunpack.c.l.b16 %v2272
        %v2727 = vunpack.c.l.b16 %v2275
        %v2728 = vunpack.c.l.b16 %v2279
        %v2729 = vunpack.c.l.b16 %v2282
        %v2730 = vunpack.c.l.b16 %v2286
        %v2731 = vunpack.c.l.b16 %v2289
        %v2732 = vunpack.c.l.b16 %v2293
        %v2733 = vunpack.c.l.b16 %v2296
        %v2734 = vpack.c.b16 %v2725, %v2724
        %v2735 = vpack.c.b16 %v2727, %v2726
        %v2736 = vpack.c.b16 %v2729, %v2728
        %v2737 = vpack.c.b16 %v2731, %v2730
        %v2738 = vpack.c.b16 %v2733, %v2732
        %2739 = vrot.lane.b32.xlu0 %v2734, 8
        %v2740 = vpop.permute.xlu0 %2739
        %2741 = vrot.lane.b32.xlu0 %v2735, 8
        %v2742 = vpop.permute.xlu0 %2741
        %2743 = vrot.lane.b32.xlu0 %v2736, 8
        %v2744 = vpop.permute.xlu0 %2743
        %2745 = vrot.lane.b32.xlu0 %v2737, 8
        %v2746 = vpop.permute.xlu0 %2745
        %2747 = vrot.lane.b32.xlu0 %v2738, 8
        %v2748 = vpop.permute.xlu0 %2747
        %v2754 = vunpack.c.l.b16 %v2298
        %v2755 = vunpack.c.l.b16 %v2299
        %v2756 = vunpack.c.l.b16 %v2300
        %v2757 = vunpack.c.l.b16 %v2301
        %v2758 = vunpack.c.l.b16 %v2302
        %v2759 = vunpack.c.l.b16 %v2303
        %v2760 = vunpack.c.l.b16 %v2304
        %v2761 = vunpack.c.l.b16 %v2305
        %v2762 = vunpack.c.l.b16 %v2306
        %v2763 = vunpack.c.l.b16 %v2307
        %v2764 = vpack.c.b16 %v2755, %v2754
        %v2765 = vpack.c.b16 %v2757, %v2756
        %v2766 = vpack.c.b16 %v2759, %v2758
        %v2767 = vpack.c.b16 %v2761, %v2760
        %v2768 = vpack.c.b16 %v2763, %v2762
        %2769 = vrot.lane.b32.xlu0 %v2764, 12
        %v2770 = vpop.permute.xlu0 %2769
        %2771 = vrot.lane.b32.xlu0 %v2765, 12
        %v2772 = vpop.permute.xlu0 %2771
        %2773 = vrot.lane.b32.xlu0 %v2766, 12
        %v2774 = vpop.permute.xlu0 %2773
        %2775 = vrot.lane.b32.xlu0 %v2767, 12
        %v2776 = vpop.permute.xlu0 %2775
        %2777 = vrot.lane.b32.xlu0 %v2768, 12
        %v2778 = vpop.permute.xlu0 %2777
        %v2779 = vunpack.c.l.b16 %v2326
        %v2780 = vunpack.c.l.b16 %v2336
        %v2781 = vunpack.c.l.b16 %v2350
        %v2782 = vunpack.c.l.b16 %v2360
        %v2783 = vunpack.c.l.b16 %v2374
        %v2784 = vunpack.c.l.b16 %v2384
        %v2785 = vunpack.c.l.b16 %v2398
        %v2786 = vunpack.c.l.b16 %v2408
        %v2787 = vunpack.c.l.b16 %v2422
        %v2788 = vunpack.c.l.b16 %v2432
        %v2789 = vpack.c.b16 %v2780, %v2779
        %v2790 = vpack.c.b16 %v2782, %v2781
        %v2791 = vpack.c.b16 %v2784, %v2783
        %v2792 = vpack.c.b16 %v2786, %v2785
        %v2793 = vpack.c.b16 %v2788, %v2787
        %2794 = vrot.lane.b32.xlu0 %v2789, 16
        %v2795 = vpop.permute.xlu0 %2794
        %2796 = vrot.lane.b32.xlu0 %v2790, 16
        %v2797 = vpop.permute.xlu0 %2796
        %2798 = vrot.lane.b32.xlu0 %v2791, 16
        %v2799 = vpop.permute.xlu0 %2798
        %2800 = vrot.lane.b32.xlu0 %v2792, 16
        %v2801 = vpop.permute.xlu0 %2800
        %2802 = vrot.lane.b32.xlu0 %v2793, 16
        %v2803 = vpop.permute.xlu0 %2802
        %v2804 = vunpack.c.l.b16 %v2456
        %v2805 = vunpack.c.l.b16 %v2459
        %v2806 = vunpack.c.l.b16 %v2463
        %v2807 = vunpack.c.l.b16 %v2466
        %v2808 = vunpack.c.l.b16 %v2470
        %v2809 = vunpack.c.l.b16 %v2473
        %v2810 = vunpack.c.l.b16 %v2477
        %v2811 = vunpack.c.l.b16 %v2480
        %v2812 = vunpack.c.l.b16 %v2484
        %v2813 = vunpack.c.l.b16 %v2487
        %v2814 = vpack.c.b16 %v2805, %v2804
        %v2815 = vpack.c.b16 %v2807, %v2806
        %v2816 = vpack.c.b16 %v2809, %v2808
        %v2817 = vpack.c.b16 %v2811, %v2810
        %v2818 = vpack.c.b16 %v2813, %v2812
        %2819 = vrot.lane.b32.xlu0 %v2814, 20
        %v2820 = vpop.permute.xlu0 %2819
        %2821 = vrot.lane.b32.xlu0 %v2815, 20
        %v2822 = vpop.permute.xlu0 %2821
        %2823 = vrot.lane.b32.xlu0 %v2816, 20
        %v2824 = vpop.permute.xlu0 %2823
        %2825 = vrot.lane.b32.xlu0 %v2817, 20
        %v2826 = vpop.permute.xlu0 %2825
        %2827 = vrot.lane.b32.xlu0 %v2818, 20
        %v2828 = vpop.permute.xlu0 %2827
        %v2834 = vunpack.c.l.b16 %v2489
        %v2835 = vunpack.c.l.b16 %v2490
        %v2836 = vunpack.c.l.b16 %v2491
        %v2837 = vunpack.c.l.b16 %v2492
        %v2838 = vunpack.c.l.b16 %v2493
        %v2839 = vunpack.c.l.b16 %v2494
        %v2840 = vunpack.c.l.b16 %v2495
        %v2841 = vunpack.c.l.b16 %v2496
        %v2842 = vunpack.c.l.b16 %v2497
        %v2843 = vunpack.c.l.b16 %v2498
        %v2844 = vpack.c.b16 %v2835, %v2834
        %v2845 = vpack.c.b16 %v2837, %v2836
        %v2846 = vpack.c.b16 %v2839, %v2838
        %v2847 = vpack.c.b16 %v2841, %v2840
        %v2848 = vpack.c.b16 %v2843, %v2842
        %2849 = vrot.lane.b32.xlu0 %v2844, 24
        %v2850 = vpop.permute.xlu0 %2849
        %2851 = vrot.lane.b32.xlu0 %v2845, 24
        %v2852 = vpop.permute.xlu0 %2851
        %2853 = vrot.lane.b32.xlu0 %v2846, 24
        %v2854 = vpop.permute.xlu0 %2853
        %2855 = vrot.lane.b32.xlu0 %v2847, 24
        %v2856 = vpop.permute.xlu0 %2855
        %2857 = vrot.lane.b32.xlu0 %v2848, 24
        %v2858 = vpop.permute.xlu0 %2857
        %v2859 = vunpack.c.l.b16 %v2517
        %v2860 = vunpack.c.l.b16 %v2527
        %v2861 = vunpack.c.l.b16 %v2541
        %v2862 = vunpack.c.l.b16 %v2551
        %v2863 = vunpack.c.l.b16 %v2565
        %v2864 = vunpack.c.l.b16 %v2575
        %v2865 = vunpack.c.l.b16 %v2589
        %v2866 = vunpack.c.l.b16 %v2599
        %v2867 = vunpack.c.l.b16 %v2613
        %v2868 = vunpack.c.l.b16 %v2623
        %v2869 = vpack.c.b16 %v2860, %v2859
        %v2870 = vpack.c.b16 %v2862, %v2861
        %v2871 = vpack.c.b16 %v2864, %v2863
        %v2872 = vpack.c.b16 %v2866, %v2865
        %v2873 = vpack.c.b16 %v2868, %v2867
        %2874 = vrot.lane.b32.xlu0 %v2869, 28
        %v2875 = vpop.permute.xlu0 %2874
        %2876 = vrot.lane.b32.xlu0 %v2870, 28
        %v2877 = vpop.permute.xlu0 %2876
        %2878 = vrot.lane.b32.xlu0 %v2871, 28
        %v2879 = vpop.permute.xlu0 %2878
        %2880 = vrot.lane.b32.xlu0 %v2872, 28
        %v2881 = vpop.permute.xlu0 %2880
        %2882 = vrot.lane.b32.xlu0 %v2873, 28
        %v2883 = vpop.permute.xlu0 %2882
        %v2884 = vunpack.c.l.b16 %v2647
        %v2885 = vunpack.c.l.b16 %v2650
        %v2886 = vunpack.c.l.b16 %v2654
        %v2887 = vunpack.c.l.b16 %v2657
        %v2888 = vunpack.c.l.b16 %v2661
        %v2889 = vunpack.c.l.b16 %v2664
        %v2890 = vunpack.c.l.b16 %v2668
        %v2891 = vunpack.c.l.b16 %v2671
        %v2892 = vunpack.c.l.b16 %v2675
        %v2893 = vunpack.c.l.b16 %v2678
        %v2894 = vpack.c.b16 %v2885, %v2884
        %v2895 = vpack.c.b16 %v2887, %v2886
        %v2896 = vpack.c.b16 %v2889, %v2888
        %v2897 = vpack.c.b16 %v2891, %v2890
        %v2898 = vpack.c.b16 %v2893, %v2892
        %2899 = vrot.lane.b32.xlu0 %v2894, 32
        %v2900 = vpop.permute.xlu0 %2899
        %2901 = vrot.lane.b32.xlu0 %v2895, 32
        %v2902 = vpop.permute.xlu0 %2901
        %2903 = vrot.lane.b32.xlu0 %v2896, 32
        %v2904 = vpop.permute.xlu0 %2903
        %2905 = vrot.lane.b32.xlu0 %v2897, 32
        %v2906 = vpop.permute.xlu0 %2905
        %2907 = vrot.lane.b32.xlu0 %v2898, 32
        %v2908 = vpop.permute.xlu0 %2907
        %v2911 = vsel %vm1707, %v2694, %v2715
        %v2914 = vsel %vm1707, %v2695, %v2717
        %v2917 = vsel %vm1707, %v2696, %v2719
        %v2920 = vsel %vm1707, %v2697, %v2721
        %v2923 = vsel %vm1707, %v2698, %v2723
        %v2925 = vsel %vm1723, %v2911, %v2740
        %v2927 = vsel %vm1723, %v2914, %v2742
        %v2929 = vsel %vm1723, %v2917, %v2744
        %v2931 = vsel %vm1723, %v2920, %v2746
        %v2933 = vsel %vm1723, %v2923, %v2748
        %v2935 = vsel %vm1734, %v2925, %v2770
        %v2937 = vsel %vm1734, %v2927, %v2772
        %v2939 = vsel %vm1734, %v2929, %v2774
        %v2941 = vsel %vm1734, %v2931, %v2776
        %v2943 = vsel %vm1734, %v2933, %v2778
        %v2945 = vsel %vm1745, %v2935, %v2795
        %v2947 = vsel %vm1745, %v2937, %v2797
        %v2949 = vsel %vm1745, %v2939, %v2799
        %v2951 = vsel %vm1745, %v2941, %v2801
        %v2953 = vsel %vm1745, %v2943, %v2803
        %v2955 = vsel %vm1756, %v2945, %v2820
        %v2957 = vsel %vm1756, %v2947, %v2822
        %v2959 = vsel %vm1756, %v2949, %v2824
        %v2961 = vsel %vm1756, %v2951, %v2826
        %v2963 = vsel %vm1756, %v2953, %v2828
        %v2965 = vsel %vm1767, %v2955, %v2850
        %v2967 = vsel %vm1767, %v2957, %v2852
        %v2969 = vsel %vm1767, %v2959, %v2854
        %v2971 = vsel %vm1767, %v2961, %v2856
        %v2973 = vsel %vm1767, %v2963, %v2858
        %v2975 = vsel %vm1778, %v2965, %v2875
        %v2977 = vsel %vm1778, %v2967, %v2877
        %v2979 = vsel %vm1778, %v2969, %v2879
        %v2981 = vsel %vm1778, %v2971, %v2881
        %v2983 = vsel %vm1778, %v2973, %v2883
        %v2985 = vsel %vm1789, %v2975, %v2900
        %v2987 = vsel %vm1789, %v2977, %v2902
        %v2989 = vsel %vm1789, %v2979, %v2904
        %v2991 = vsel %vm1789, %v2981, %v2906
        %v2993 = vsel %vm1789, %v2983, %v2908
        %v2994 = vsel %vm1800, %v2985, 0
        %v2996 = vsel %vm1800, %v2987, 0
        %v2998 = vsel %vm1800, %v2989, 0
        %v3000 = vsel %vm1800, %v2991, 0
        %v3002 = vsel %vm1800, %v2993, 0
        %3004 = vst [vmem:[#allocation4 + $0x28] sm:$0xff] %v2994
        %3005 = vst [vmem:[#allocation4 + $0x30] sm:$0xff] %v2996
        %3006 = vst [vmem:[#allocation4 + $0x38] sm:$0xff] %v2998
        %3007 = vst [vmem:[#allocation4 + $0x40] sm:$0xff] %v3000
        %3008 = vst [vmem:[#allocation4 + $0x48] sm:$0xff] %v3002
        %v3009 = vld [vmem:[#allocation4 + $0x28] sm:$0xff]
        %v3010 = vld [vmem:[#allocation4 + $0x30] sm:$0xff]
        %v3011 = vld [vmem:[#allocation4 + $0x38] sm:$0xff]
        %v3012 = vld [vmem:[#allocation4 + $0x40] sm:$0xff]
        %v3013 = vld [vmem:[#allocation4 + $0x48] sm:$0xff]
        %v3014 = vld [vmem:[#allocation11] sm:$0xf]
        %v3015 = vld [vmem:[#allocation11 + $0x4] sm:$0xf]
        %v3016 = vld [vmem:[#allocation11 + $0x8] sm:$0xf]
        %v3017 = vld [vmem:[#allocation11 + $0xc] sm:$0xf]
        %v3018 = vld [vmem:[#allocation11 + $0x10] sm:$0xf]
        %v3019 = vld [vmem:[#allocation11 + $0x14] sm:$0xf]
        %v3020 = vld [vmem:[#allocation11 + $0x18] sm:$0xf]
        %v3021 = vld [vmem:[#allocation11 + $0x1c] sm:$0xf]
        %v3022 = vld [vmem:[#allocation11 + $0x20] sm:$0xf]
        %v3023 = vld [vmem:[#allocation11 + $0x24] sm:$0xf]
        %v3024 = vld [vmem:[#allocation11 + $0x28] sm:$0xf]
        %v3025 = vld [vmem:[#allocation11 + $0x2c] sm:$0xf]
        %v3026 = vld [vmem:[#allocation11 + $0x30] sm:$0xf]
        %v3027 = vld [vmem:[#allocation11 + $0x34] sm:$0xf]
        %v3028 = vld [vmem:[#allocation11 + $0x38] sm:$0xf]
        %v3029 = vld [vmem:[#allocation11 + $0x3c] sm:$0xf]
        %v3030 = vld [vmem:[%s4] sm:$0x1]
        %v3032 = vlaneseq
        %v3033 = vshrl.u32 %v3032, 7
        %v3034 = vsub.s32 0, %v3033
        %v3035 = vrot.slane %v3030, %v3034
        %v3053 = vunpack.c.l.b16 %v3014
        %v3054 = vunpack.c.l.b16 %v3015
        %v3055 = vunpack.c.l.b16 %v3016
        %v3056 = vunpack.c.l.b16 %v3017
        %v3057 = vunpack.c.l.b16 %v3018
        %v3058 = vunpack.c.l.b16 %v3019
        %v3059 = vunpack.c.l.b16 %v3020
        %v3060 = vunpack.c.l.b16 %v3021
        %v3061 = vunpack.c.l.b16 %v3022
        %v3062 = vunpack.c.l.b16 %v3023
        %v3063 = vunpack.c.l.b16 %v3024
        %v3064 = vunpack.c.l.b16 %v3025
        %v3065 = vunpack.c.l.b16 %v3026
        %v3066 = vunpack.c.l.b16 %v3027
        %v3067 = vunpack.c.l.b16 %v3028
        %v3068 = vunpack.c.l.b16 %v3029
        %v3069 = vpack.c.b16 %v3054, %v3053
        %v3070 = vpack.c.b16 %v3056, %v3055
        %v3071 = vpack.c.b16 %v3058, %v3057
        %v3072 = vpack.c.b16 %v3060, %v3059
        %v3073 = vpack.c.b16 %v3062, %v3061
        %v3074 = vpack.c.b16 %v3064, %v3063
        %v3075 = vpack.c.b16 %v3066, %v3065
        %v3076 = vpack.c.b16 %v3068, %v3067
        %3085 = vmatprep.subr.bf16.mxu0 0
        %3086 = vmatpush1.bf16.msra.mxu0 %v3069
        %3087 = vmatprep.subr.bf16.mxu0 0
        %3088 = vmatpush1.bf16.msra.mxu0 %v3070
        %3089 = vmatprep.subr.bf16.mxu0 0
        %3090 = vmatpush1.bf16.msra.mxu0 %v3071
        %3091 = vmatprep.subr.bf16.mxu0 0
        %3092 = vmatpush1.bf16.msra.mxu0 %v3072
        %3093 = vmatprep.subr.bf16.mxu0 0
        %3094 = vmatpush1.bf16.msra.mxu0 %v3073
        %3095 = vmatprep.subr.bf16.mxu0 0
        %3096 = vmatpush1.bf16.msra.mxu0 %v3074
        %3097 = vmatprep.subr.bf16.mxu0 0
        %3098 = vmatpush1.bf16.msra.mxu0 %v3075
        %3099 = vmatprep.subr.bf16.mxu0 0
        %3100 = vmatpush1.bf16.msra.mxu0 %v3076
        %3101 = vmatprep.subr.bf16.mxu0 0
        %3102 = vmatpush1.bf16.msra.mxu0 0
        %3103 = vmatprep.subr.bf16.mxu0 0
        %3104 = vmatpush1.bf16.msra.mxu0 0
        %3105 = vmatprep.subr.bf16.mxu0 0
        %3106 = vmatpush1.bf16.msra.mxu0 0
        %3107 = vmatprep.subr.bf16.mxu0 0
        %3108 = vmatpush1.bf16.msra.mxu0 0
        %3109 = vmatprep.subr.bf16.mxu0 0
        %3110 = vmatpush1.bf16.msra.mxu0 0
        %3111 = vmatprep.subr.bf16.mxu0 0
        %3112 = vmatpush1.bf16.msra.mxu0 0
        %3113 = vmatprep.subr.bf16.mxu0 0
        %3114 = vmatpush1.bf16.msra.mxu0 0
        %3115 = vmatprep.subr.bf16.mxu0 0
        %3116 = vmatpush1.bf16.msra.mxu0 0
        %3117 = vmatprep.mubr.bf16.mxu0 0
        %3118 = vmatmul.mubr.bf16.gmra.mrb[0].mxu0 %v3009
        %v3119 = vpop.f32.mrb[0].mxu0
        %v3120 = vadd.f32 %v3035, %v3119
        %v3121 = vpop.f32.mrb[0].mxu0
        %v3122 = vpop.f32.mrb[0].mxu0
        %v3123 = vadd.f32 %v3035, %v3122
        %v3124 = vpop.f32.mrb[0].mxu0
        %3125 = vmatprep.mubr.bf16.mxu0 0
        %3126 = vmatmul.mubr.bf16.gmra.mrb[0].mxu0 %v3010
        %v3127 = vpop.f32.mrb[0].mxu0
        %v3128 = vadd.f32 %v3035, %v3127
        %v3129 = vpop.f32.mrb[0].mxu0
        %v3130 = vpop.f32.mrb[0].mxu0
        %v3131 = vadd.f32 %v3035, %v3130
        %v3132 = vpop.f32.mrb[0].mxu0
        %3133 = vmatprep.mubr.bf16.mxu0 0
        %3134 = vmatmul.mubr.bf16.gmra.mrb[0].mxu0 %v3011
        %v3135 = vpop.f32.mrb[0].mxu0
        %v3136 = vadd.f32 %v3035, %v3135
        %v3137 = vpop.f32.mrb[0].mxu0
        %v3138 = vpop.f32.mrb[0].mxu0
        %v3139 = vadd.f32 %v3035, %v3138
        %v3140 = vpop.f32.mrb[0].mxu0
        %3141 = vmatprep.mubr.bf16.mxu0 0
        %3142 = vmatmul.mubr.bf16.gmra.mrb[0].mxu0 %v3012
        %v3143 = vpop.f32.mrb[0].mxu0
        %v3144 = vadd.f32 %v3035, %v3143
        %v3145 = vpop.f32.mrb[0].mxu0
        %v3146 = vpop.f32.mrb[0].mxu0
        %v3147 = vadd.f32 %v3035, %v3146
        %v3148 = vpop.f32.mrb[0].mxu0
        %3149 = vmatprep.mubr.bf16.mxu0 0
        %3150 = vmatmul.mubr.bf16.gmra.mrb[0].mxu0 %v3013
        %v3151 = vpop.f32.mrb[0].mxu0
        %v3152 = vadd.f32 %v3035, %v3151
        %v3153 = vpop.f32.mrb[0].mxu0
        %v3154 = vpop.f32.mrb[0].mxu0
        %v3155 = vadd.f32 %v3035, %v3154
        %v3156 = vpop.f32.mrb[0].mxu0
        %3157 = vdwg.mxu0
        %v3158 = vmax.f32 %v3120, 0.0
        %v3159 = vmax.f32 %v3123, 0.0
        %v3160 = vmax.f32 %v3128, 0.0
        %v3161 = vmax.f32 %v3131, 0.0
        %v3162 = vmax.f32 %v3136, 0.0
        %v3163 = vmax.f32 %v3139, 0.0
        %v3164 = vmax.f32 %v3144, 0.0
        %v3165 = vmax.f32 %v3147, 0.0
        %v3166 = vmax.f32 %v3152, 0.0
        %v3167 = vmax.f32 %v3155, 0.0
        %v3168 = vpack.c.bf16 %v3159, %v3158
        %v3169 = vpack.c.bf16 %v3161, %v3160
        %v3170 = vpack.c.bf16 %v3163, %v3162
        %v3171 = vpack.c.bf16 %v3165, %v3164
        %v3172 = vpack.c.bf16 %v3167, %v3166
        %v3174 = vshrl.u32 %v3168, 16
        %v3176 = vrot.slane %v3174, 7
        %v3177 = vshll.u32 %v3168, 16
        %v3179 = vor.u32 %v3176, %v3177
        %v3181 = vshrl.u32 %v3169, 16
        %v3183 = vrot.slane %v3181, 7
        %v3184 = vshll.u32 %v3169, 16
        %v3186 = vor.u32 %v3183, %v3184
        %v3188 = vshrl.u32 %v3170, 16
        %v3190 = vrot.slane %v3188, 7
        %v3191 = vshll.u32 %v3170, 16
        %v3193 = vor.u32 %v3190, %v3191
        %v3195 = vshrl.u32 %v3171, 16
        %v3197 = vrot.slane %v3195, 7
        %v3198 = vshll.u32 %v3171, 16
        %v3200 = vor.u32 %v3197, %v3198
        %v3202 = vshrl.u32 %v3172, 16
        %v3204 = vrot.slane %v3202, 7
        %v3205 = vshll.u32 %v3172, 16
        %v3207 = vor.u32 %v3204, %v3205
        %v3218 = vsel %vm535, 0, %v3179
        %v3219 = vsel %vm535, 0, %v3186
        %v3220 = vsel %vm535, 0, %v3193
        %v3221 = vsel %vm535, 0, %v3200
        %v3222 = vsel %vm535, 0, %v3207
        %v3223 = vsel %vm535, %v3176, 0
        %v3224 = vsel %vm535, %v3183, 0
        %v3225 = vsel %vm535, %v3190, 0
        %v3226 = vsel %vm535, %v3197, 0
        %v3227 = vsel %vm535, %v3204, 0
        %v3238 = vunpack.c.l.b16 %v3218
        %v3239 = vunpack.c.h.b16 %v3218
        %v3240 = vunpack.c.l.b16 %v3223
        %v3241 = vunpack.c.l.b16 %v3219
        %v3242 = vunpack.c.h.b16 %v3219
        %v3243 = vunpack.c.l.b16 %v3224
        %v3244 = vunpack.c.l.b16 %v3220
        %v3245 = vunpack.c.h.b16 %v3220
        %v3246 = vunpack.c.l.b16 %v3225
        %v3247 = vunpack.c.l.b16 %v3221
        %v3248 = vunpack.c.h.b16 %v3221
        %v3249 = vunpack.c.l.b16 %v3226
        %v3250 = vunpack.c.l.b16 %v3222
        %v3251 = vunpack.c.h.b16 %v3222
        %v3252 = vunpack.c.l.b16 %v3227
        %v3253 = vpack.c.b16 %v3238, %v3238
        %v3254 = vpack.c.b16 %v3239, %v3239
        %v3255 = vpack.c.b16 %v3240, %v3240
        %v3256 = vpack.c.b16 %v3241, %v3241
        %v3257 = vpack.c.b16 %v3242, %v3242
        %v3258 = vpack.c.b16 %v3243, %v3243
        %v3259 = vpack.c.b16 %v3244, %v3244
        %v3260 = vpack.c.b16 %v3245, %v3245
        %v3261 = vpack.c.b16 %v3246, %v3246
        %v3262 = vpack.c.b16 %v3247, %v3247
        %v3263 = vpack.c.b16 %v3248, %v3248
        %v3264 = vpack.c.b16 %v3249, %v3249
        %v3265 = vpack.c.b16 %v3250, %v3250
        %v3266 = vpack.c.b16 %v3251, %v3251
        %v3267 = vpack.c.b16 %v3252, %v3252
        %s3283 = scalar_lea.vmem [#allocation3], 60
        %3284 = vst.msk [vmem:[%s3283] sm:$0xf] %vm562, %v3253
        %3285 = vst.msk [vmem:[%s3283 + $0x4] sm:$0xf] %vm562, %v3254
        %3286 = vst.msk [vmem:[%s3283 + $0x8] sm:$0x1] %vm565, %v3255
        %3287 = vst.msk [vmem:[%s3283 + $0xc] sm:$0xf] %vm562, %v3256
        %3288 = vst.msk [vmem:[%s3283 + $0x10] sm:$0xf] %vm562, %v3257
        %3289 = vst.msk [vmem:[%s3283 + $0x14] sm:$0x1] %vm565, %v3258
        %3290 = vst.msk [vmem:[%s3283 + $0x18] sm:$0xf] %vm562, %v3259
        %3291 = vst.msk [vmem:[%s3283 + $0x1c] sm:$0xf] %vm562, %v3260
        %3292 = vst.msk [vmem:[%s3283 + $0x20] sm:$0x1] %vm565, %v3261
        %3293 = vst.msk [vmem:[%s3283 + $0x24] sm:$0xf] %vm562, %v3262
        %3294 = vst.msk [vmem:[%s3283 + $0x28] sm:$0xf] %vm562, %v3263
        %3295 = vst.msk [vmem:[%s3283 + $0x2c] sm:$0x1] %vm565, %v3264
        %3296 = vst.msk [vmem:[%s3283 + $0x30] sm:$0xf] %vm562, %v3265
        %3297 = vst.msk [vmem:[%s3283 + $0x34] sm:$0xf] %vm562, %v3266
        %3298 = vst.msk [vmem:[%s3283 + $0x38] sm:$0x1] %vm565, %v3267
        %p3299 = scmp.eq.s32.totalorder %s33, 0
        // Predicated region
        $region69: #{tpu_custom_call.1} parent=47 // pred_check
          %p3300 = pneg %p3299
        $region70: #{tpu_custom_call.1} parent=47 // pred_check_branch
          %3302 = sbr.rel (%p3300) target = $region72
        $region71: #{tpu_custom_call.1} parent=47 // pred_region
          %3303 = vst.msk [vmem:[#allocation3] sm:$0xf] %vm562, 0
          %3304 = vst.msk [vmem:[#allocation3 + $0x4] sm:$0xf] %vm562, 0
          %3305 = vst.msk [vmem:[#allocation3 + $0x8] sm:$0x1] %vm565, 0
        $region72: #{tpu_custom_call.1} parent=47 // pred_fallthru
          _
        %p3306 = scmp.eq.s32.totalorder %s33, 1
        // Predicated region
        $region73: #{tpu_custom_call.1} parent=47 // pred_check
          %p3307 = pneg %p3306
        $region74: #{tpu_custom_call.1} parent=47 // pred_check_branch
          %3309 = sbr.rel (%p3307) target = $region76
        $region75: #{tpu_custom_call.1} parent=47 // pred_region
          %s3310 = scalar_lea.vmem [#allocation3], 108
          %3311 = vst.msk [vmem:[%s3310] sm:$0xf] %vm562, 0
          %3312 = vst.msk [vmem:[%s3310 + $0x4] sm:$0xf] %vm562, 0
          %3313 = vst.msk [vmem:[%s3310 + $0x8] sm:$0x1] %vm565, 0
        $region76: #{tpu_custom_call.1} parent=47 // pred_fallthru
          _
        %v3314 = vld [vmem:[#allocation3] sm:$0xf]
        %v3315 = vld [vmem:[#allocation3 + $0x4] sm:$0xf]
        %v3316 = vld [vmem:[#allocation3 + $0xc] sm:$0xf]
        %v3317 = vld [vmem:[#allocation3 + $0x10] sm:$0xf]
        %v3318 = vld [vmem:[#allocation3 + $0x18] sm:$0xf]
        %v3319 = vld [vmem:[#allocation3 + $0x1c] sm:$0xf]
        %v3320 = vld [vmem:[#allocation3 + $0x24] sm:$0xf]
        %v3321 = vld [vmem:[#allocation3 + $0x28] sm:$0xf]
        %v3322 = vld [vmem:[#allocation3 + $0x30] sm:$0xf]
        %v3323 = vld [vmem:[#allocation3 + $0x34] sm:$0xf]
        %v3324 = vld [vmem:[#allocation3 + $0x8] sm:$0x1]
        %v3325 = vld [vmem:[#allocation3 + $0x14] sm:$0x1]
        %v3326 = vld [vmem:[#allocation3 + $0x20] sm:$0x1]
        %v3327 = vld [vmem:[#allocation3 + $0x2c] sm:$0x1]
        %v3328 = vld [vmem:[#allocation3 + $0x38] sm:$0x1]
        %v3330 = vshrl.u32 %v3314, 16
        %v3332 = vrot.slane %v3330, 4
        %v3333 = vshll.u32 %v3314, 16
        %v3335 = vrot.slane %v3333, 5
        %v3336 = vor.u32 %v3332, %v3335
        %v3337 = vrot.slane %v3336, 4
        %v3339 = vshll.u32 %v3315, 16
        %v3341 = vrot.slane %v3339, 5
        %v3342 = vsel %vm917, %v3337, %v3341
        %v3343 = vshrl.u32 %v3315, 16
        %v3345 = vrot.slane %v3343, 4
        %v3346 = vor.u32 %v3345, %v3341
        %v3347 = vrot.slane %v3346, 4
        %v3349 = vshll.u32 %v3324, 16
        %v3351 = vrot.slane %v3349, 5
        %v3352 = vsel %vm917, %v3347, %v3351
        %v3354 = vshrl.u32 %v3316, 16
        %v3356 = vrot.slane %v3354, 4
        %v3357 = vshll.u32 %v3316, 16
        %v3359 = vrot.slane %v3357, 5
        %v3360 = vor.u32 %v3356, %v3359
        %v3361 = vrot.slane %v3360, 4
        %v3363 = vshll.u32 %v3317, 16
        %v3365 = vrot.slane %v3363, 5
        %v3366 = vsel %vm917, %v3361, %v3365
        %v3367 = vshrl.u32 %v3317, 16
        %v3369 = vrot.slane %v3367, 4
        %v3370 = vor.u32 %v3369, %v3365
        %v3371 = vrot.slane %v3370, 4
        %v3373 = vshll.u32 %v3325, 16
        %v3375 = vrot.slane %v3373, 5
        %v3376 = vsel %vm917, %v3371, %v3375
        %v3378 = vshrl.u32 %v3318, 16
        %v3380 = vrot.slane %v3378, 4
        %v3381 = vshll.u32 %v3318, 16
        %v3383 = vrot.slane %v3381, 5
        %v3384 = vor.u32 %v3380, %v3383
        %v3385 = vrot.slane %v3384, 4
        %v3387 = vshll.u32 %v3319, 16
        %v3389 = vrot.slane %v3387, 5
        %v3390 = vsel %vm917, %v3385, %v3389
        %v3391 = vshrl.u32 %v3319, 16
        %v3393 = vrot.slane %v3391, 4
        %v3394 = vor.u32 %v3393, %v3389
        %v3395 = vrot.slane %v3394, 4
        %v3397 = vshll.u32 %v3326, 16
        %v3399 = vrot.slane %v3397, 5
        %v3400 = vsel %vm917, %v3395, %v3399
        %v3402 = vshrl.u32 %v3320, 16
        %v3404 = vrot.slane %v3402, 4
        %v3405 = vshll.u32 %v3320, 16
        %v3407 = vrot.slane %v3405, 5
        %v3408 = vor.u32 %v3404, %v3407
        %v3409 = vrot.slane %v3408, 4
        %v3411 = vshll.u32 %v3321, 16
        %v3413 = vrot.slane %v3411, 5
        %v3414 = vsel %vm917, %v3409, %v3413
        %v3415 = vshrl.u32 %v3321, 16
        %v3417 = vrot.slane %v3415, 4
        %v3418 = vor.u32 %v3417, %v3413
        %v3419 = vrot.slane %v3418, 4
        %v3421 = vshll.u32 %v3327, 16
        %v3423 = vrot.slane %v3421, 5
        %v3424 = vsel %vm917, %v3419, %v3423
        %v3426 = vshrl.u32 %v3322, 16
        %v3428 = vrot.slane %v3426, 4
        %v3429 = vshll.u32 %v3322, 16
        %v3431 = vrot.slane %v3429, 5
        %v3432 = vor.u32 %v3428, %v3431
        %v3433 = vrot.slane %v3432, 4
        %v3435 = vshll.u32 %v3323, 16
        %v3437 = vrot.slane %v3435, 5
        %v3438 = vsel %vm917, %v3433, %v3437
        %v3439 = vshrl.u32 %v3323, 16
        %v3441 = vrot.slane %v3439, 4
        %v3442 = vor.u32 %v3441, %v3437
        %v3443 = vrot.slane %v3442, 4
        %v3445 = vshll.u32 %v3328, 16
        %v3447 = vrot.slane %v3445, 5
        %v3448 = vsel %vm917, %v3443, %v3447
        %v3449 = vld [vmem:[#allocation3] sm:$0xe]
        %v3450 = vld [vmem:[#allocation3 + $0xc] sm:$0xe]
        %v3451 = vld [vmem:[#allocation3 + $0x18] sm:$0xe]
        %v3452 = vld [vmem:[#allocation3 + $0x24] sm:$0xe]
        %v3453 = vld [vmem:[#allocation3 + $0x30] sm:$0xe]
        %v3469 = vrot.slane %v3449, 5
        %v3470 = vrot.slane %v3469, 4
        %v3471 = vrot.slane %v3315, 5
        %v3472 = vsel %vm1060, %v3470, %v3471
        %v3473 = vrot.slane %v3471, 4
        %v3474 = vrot.slane %v3324, 5
        %v3475 = vsel %vm1060, %v3473, %v3474
        %v3476 = vrot.slane %v3450, 5
        %v3477 = vrot.slane %v3476, 4
        %v3478 = vrot.slane %v3317, 5
        %v3479 = vsel %vm1060, %v3477, %v3478
        %v3480 = vrot.slane %v3478, 4
        %v3481 = vrot.slane %v3325, 5
        %v3482 = vsel %vm1060, %v3480, %v3481
        %v3483 = vrot.slane %v3451, 5
        %v3484 = vrot.slane %v3483, 4
        %v3485 = vrot.slane %v3319, 5
        %v3486 = vsel %vm1060, %v3484, %v3485
        %v3487 = vrot.slane %v3485, 4
        %v3488 = vrot.slane %v3326, 5
        %v3489 = vsel %vm1060, %v3487, %v3488
        %v3490 = vrot.slane %v3452, 5
        %v3491 = vrot.slane %v3490, 4
        %v3492 = vrot.slane %v3321, 5
        %v3493 = vsel %vm1060, %v3491, %v3492
        %v3494 = vrot.slane %v3492, 4
        %v3495 = vrot.slane %v3327, 5
        %v3496 = vsel %vm1060, %v3494, %v3495
        %v3497 = vrot.slane %v3453, 5
        %v3498 = vrot.slane %v3497, 4
        %v3499 = vrot.slane %v3323, 5
        %v3500 = vsel %vm1060, %v3498, %v3499
        %v3501 = vrot.slane %v3499, 4
        %v3502 = vrot.slane %v3328, 5
        %v3503 = vsel %vm1060, %v3501, %v3502
        %s3504 = scalar_lea.vmem [#allocation3], 12
        %v3505 = vld [vmem:[%s3504] sm:$0xf]
        %v3506 = vld [vmem:[%s3504 + $0x4] sm:$0xf]
        %v3507 = vld [vmem:[%s3504 + $0xc] sm:$0xf]
        %v3508 = vld [vmem:[%s3504 + $0x10] sm:$0xf]
        %v3509 = vld [vmem:[%s3504 + $0x18] sm:$0xf]
        %v3510 = vld [vmem:[%s3504 + $0x1c] sm:$0xf]
        %v3511 = vld [vmem:[%s3504 + $0x24] sm:$0xf]
        %v3512 = vld [vmem:[%s3504 + $0x28] sm:$0xf]
        %v3513 = vld [vmem:[%s3504 + $0x30] sm:$0xf]
        %v3514 = vld [vmem:[%s3504 + $0x34] sm:$0xf]
        %v3515 = vld [vmem:[%s3504 + $0x8] sm:$0x1]
        %v3516 = vld [vmem:[%s3504 + $0x14] sm:$0x1]
        %v3517 = vld [vmem:[%s3504 + $0x20] sm:$0x1]
        %v3518 = vld [vmem:[%s3504 + $0x2c] sm:$0x1]
        %v3519 = vld [vmem:[%s3504 + $0x38] sm:$0x1]
        %v3521 = vshrl.u32 %v3505, 16
        %v3523 = vrot.slane %v3521, 4
        %v3524 = vshll.u32 %v3505, 16
        %v3526 = vrot.slane %v3524, 5
        %v3527 = vor.u32 %v3523, %v3526
        %v3528 = vrot.slane %v3527, 4
        %v3530 = vshll.u32 %v3506, 16
        %v3532 = vrot.slane %v3530, 5
        %v3533 = vsel %vm917, %v3528, %v3532
        %v3534 = vshrl.u32 %v3506, 16
        %v3536 = vrot.slane %v3534, 4
        %v3537 = vor.u32 %v3536, %v3532
        %v3538 = vrot.slane %v3537, 4
        %v3540 = vshll.u32 %v3515, 16
        %v3542 = vrot.slane %v3540, 5
        %v3543 = vsel %vm917, %v3538, %v3542
        %v3545 = vshrl.u32 %v3507, 16
        %v3547 = vrot.slane %v3545, 4
        %v3548 = vshll.u32 %v3507, 16
        %v3550 = vrot.slane %v3548, 5
        %v3551 = vor.u32 %v3547, %v3550
        %v3552 = vrot.slane %v3551, 4
        %v3554 = vshll.u32 %v3508, 16
        %v3556 = vrot.slane %v3554, 5
        %v3557 = vsel %vm917, %v3552, %v3556
        %v3558 = vshrl.u32 %v3508, 16
        %v3560 = vrot.slane %v3558, 4
        %v3561 = vor.u32 %v3560, %v3556
        %v3562 = vrot.slane %v3561, 4
        %v3564 = vshll.u32 %v3516, 16
        %v3566 = vrot.slane %v3564, 5
        %v3567 = vsel %vm917, %v3562, %v3566
        %v3569 = vshrl.u32 %v3509, 16
        %v3571 = vrot.slane %v3569, 4
        %v3572 = vshll.u32 %v3509, 16
        %v3574 = vrot.slane %v3572, 5
        %v3575 = vor.u32 %v3571, %v3574
        %v3576 = vrot.slane %v3575, 4
        %v3578 = vshll.u32 %v3510, 16
        %v3580 = vrot.slane %v3578, 5
        %v3581 = vsel %vm917, %v3576, %v3580
        %v3582 = vshrl.u32 %v3510, 16
        %v3584 = vrot.slane %v3582, 4
        %v3585 = vor.u32 %v3584, %v3580
        %v3586 = vrot.slane %v3585, 4
        %v3588 = vshll.u32 %v3517, 16
        %v3590 = vrot.slane %v3588, 5
        %v3591 = vsel %vm917, %v3586, %v3590
        %v3593 = vshrl.u32 %v3511, 16
        %v3595 = vrot.slane %v3593, 4
        %v3596 = vshll.u32 %v3511, 16
        %v3598 = vrot.slane %v3596, 5
        %v3599 = vor.u32 %v3595, %v3598
        %v3600 = vrot.slane %v3599, 4
        %v3602 = vshll.u32 %v3512, 16
        %v3604 = vrot.slane %v3602, 5
        %v3605 = vsel %vm917, %v3600, %v3604
        %v3606 = vshrl.u32 %v3512, 16
        %v3608 = vrot.slane %v3606, 4
        %v3609 = vor.u32 %v3608, %v3604
        %v3610 = vrot.slane %v3609, 4
        %v3612 = vshll.u32 %v3518, 16
        %v3614 = vrot.slane %v3612, 5
        %v3615 = vsel %vm917, %v3610, %v3614
        %v3617 = vshrl.u32 %v3513, 16
        %v3619 = vrot.slane %v3617, 4
        %v3620 = vshll.u32 %v3513, 16
        %v3622 = vrot.slane %v3620, 5
        %v3623 = vor.u32 %v3619, %v3622
        %v3624 = vrot.slane %v3623, 4
        %v3626 = vshll.u32 %v3514, 16
        %v3628 = vrot.slane %v3626, 5
        %v3629 = vsel %vm917, %v3624, %v3628
        %v3630 = vshrl.u32 %v3514, 16
        %v3632 = vrot.slane %v3630, 4
        %v3633 = vor.u32 %v3632, %v3628
        %v3634 = vrot.slane %v3633, 4
        %v3636 = vshll.u32 %v3519, 16
        %v3638 = vrot.slane %v3636, 5
        %v3639 = vsel %vm917, %v3634, %v3638
        %v3640 = vld [vmem:[%s3504] sm:$0xe]
        %v3641 = vld [vmem:[%s3504 + $0xc] sm:$0xe]
        %v3642 = vld [vmem:[%s3504 + $0x18] sm:$0xe]
        %v3643 = vld [vmem:[%s3504 + $0x24] sm:$0xe]
        %v3644 = vld [vmem:[%s3504 + $0x30] sm:$0xe]
        %v3660 = vrot.slane %v3640, 5
        %v3661 = vrot.slane %v3660, 4
        %v3662 = vrot.slane %v3506, 5
        %v3663 = vsel %vm1060, %v3661, %v3662
        %v3664 = vrot.slane %v3662, 4
        %v3665 = vrot.slane %v3515, 5
        %v3666 = vsel %vm1060, %v3664, %v3665
        %v3667 = vrot.slane %v3641, 5
        %v3668 = vrot.slane %v3667, 4
        %v3669 = vrot.slane %v3508, 5
        %v3670 = vsel %vm1060, %v3668, %v3669
        %v3671 = vrot.slane %v3669, 4
        %v3672 = vrot.slane %v3516, 5
        %v3673 = vsel %vm1060, %v3671, %v3672
        %v3674 = vrot.slane %v3642, 5
        %v3675 = vrot.slane %v3674, 4
        %v3676 = vrot.slane %v3510, 5
        %v3677 = vsel %vm1060, %v3675, %v3676
        %v3678 = vrot.slane %v3676, 4
        %v3679 = vrot.slane %v3517, 5
        %v3680 = vsel %vm1060, %v3678, %v3679
        %v3681 = vrot.slane %v3643, 5
        %v3682 = vrot.slane %v3681, 4
        %v3683 = vrot.slane %v3512, 5
        %v3684 = vsel %vm1060, %v3682, %v3683
        %v3685 = vrot.slane %v3683, 4
        %v3686 = vrot.slane %v3518, 5
        %v3687 = vsel %vm1060, %v3685, %v3686
        %v3688 = vrot.slane %v3644, 5
        %v3689 = vrot.slane %v3688, 4
        %v3690 = vrot.slane %v3514, 5
        %v3691 = vsel %vm1060, %v3689, %v3690
        %v3692 = vrot.slane %v3690, 4
        %v3693 = vrot.slane %v3519, 5
        %v3694 = vsel %vm1060, %v3692, %v3693
        %s3695 = scalar_lea.vmem [#allocation3], 24
        %v3696 = vld [vmem:[%s3695] sm:$0xf]
        %v3697 = vld [vmem:[%s3695 + $0x4] sm:$0xf]
        %v3698 = vld [vmem:[%s3695 + $0xc] sm:$0xf]
        %v3699 = vld [vmem:[%s3695 + $0x10] sm:$0xf]
        %v3700 = vld [vmem:[%s3695 + $0x18] sm:$0xf]
        %v3701 = vld [vmem:[%s3695 + $0x1c] sm:$0xf]
        %v3702 = vld [vmem:[%s3695 + $0x24] sm:$0xf]
        %v3703 = vld [vmem:[%s3695 + $0x28] sm:$0xf]
        %v3704 = vld [vmem:[%s3695 + $0x30] sm:$0xf]
        %v3705 = vld [vmem:[%s3695 + $0x34] sm:$0xf]
        %v3706 = vld [vmem:[%s3695 + $0x8] sm:$0x1]
        %v3707 = vld [vmem:[%s3695 + $0x14] sm:$0x1]
        %v3708 = vld [vmem:[%s3695 + $0x20] sm:$0x1]
        %v3709 = vld [vmem:[%s3695 + $0x2c] sm:$0x1]
        %v3710 = vld [vmem:[%s3695 + $0x38] sm:$0x1]
        %v3712 = vshrl.u32 %v3696, 16
        %v3714 = vrot.slane %v3712, 4
        %v3715 = vshll.u32 %v3696, 16
        %v3717 = vrot.slane %v3715, 5
        %v3718 = vor.u32 %v3714, %v3717
        %v3719 = vrot.slane %v3718, 4
        %v3721 = vshll.u32 %v3697, 16
        %v3723 = vrot.slane %v3721, 5
        %v3724 = vsel %vm917, %v3719, %v3723
        %v3725 = vshrl.u32 %v3697, 16
        %v3727 = vrot.slane %v3725, 4
        %v3728 = vor.u32 %v3727, %v3723
        %v3729 = vrot.slane %v3728, 4
        %v3731 = vshll.u32 %v3706, 16
        %v3733 = vrot.slane %v3731, 5
        %v3734 = vsel %vm917, %v3729, %v3733
        %v3736 = vshrl.u32 %v3698, 16
        %v3738 = vrot.slane %v3736, 4
        %v3739 = vshll.u32 %v3698, 16
        %v3741 = vrot.slane %v3739, 5
        %v3742 = vor.u32 %v3738, %v3741
        %v3743 = vrot.slane %v3742, 4
        %v3745 = vshll.u32 %v3699, 16
        %v3747 = vrot.slane %v3745, 5
        %v3748 = vsel %vm917, %v3743, %v3747
        %v3749 = vshrl.u32 %v3699, 16
        %v3751 = vrot.slane %v3749, 4
        %v3752 = vor.u32 %v3751, %v3747
        %v3753 = vrot.slane %v3752, 4
        %v3755 = vshll.u32 %v3707, 16
        %v3757 = vrot.slane %v3755, 5
        %v3758 = vsel %vm917, %v3753, %v3757
        %v3760 = vshrl.u32 %v3700, 16
        %v3762 = vrot.slane %v3760, 4
        %v3763 = vshll.u32 %v3700, 16
        %v3765 = vrot.slane %v3763, 5
        %v3766 = vor.u32 %v3762, %v3765
        %v3767 = vrot.slane %v3766, 4
        %v3769 = vshll.u32 %v3701, 16
        %v3771 = vrot.slane %v3769, 5
        %v3772 = vsel %vm917, %v3767, %v3771
        %v3773 = vshrl.u32 %v3701, 16
        %v3775 = vrot.slane %v3773, 4
        %v3776 = vor.u32 %v3775, %v3771
        %v3777 = vrot.slane %v3776, 4
        %v3779 = vshll.u32 %v3708, 16
        %v3781 = vrot.slane %v3779, 5
        %v3782 = vsel %vm917, %v3777, %v3781
        %v3784 = vshrl.u32 %v3702, 16
        %v3786 = vrot.slane %v3784, 4
        %v3787 = vshll.u32 %v3702, 16
        %v3789 = vrot.slane %v3787, 5
        %v3790 = vor.u32 %v3786, %v3789
        %v3791 = vrot.slane %v3790, 4
        %v3793 = vshll.u32 %v3703, 16
        %v3795 = vrot.slane %v3793, 5
        %v3796 = vsel %vm917, %v3791, %v3795
        %v3797 = vshrl.u32 %v3703, 16
        %v3799 = vrot.slane %v3797, 4
        %v3800 = vor.u32 %v3799, %v3795
        %v3801 = vrot.slane %v3800, 4
        %v3803 = vshll.u32 %v3709, 16
        %v3805 = vrot.slane %v3803, 5
        %v3806 = vsel %vm917, %v3801, %v3805
        %v3808 = vshrl.u32 %v3704, 16
        %v3810 = vrot.slane %v3808, 4
        %v3811 = vshll.u32 %v3704, 16
        %v3813 = vrot.slane %v3811, 5
        %v3814 = vor.u32 %v3810, %v3813
        %v3815 = vrot.slane %v3814, 4
        %v3817 = vshll.u32 %v3705, 16
        %v3819 = vrot.slane %v3817, 5
        %v3820 = vsel %vm917, %v3815, %v3819
        %v3821 = vshrl.u32 %v3705, 16
        %v3823 = vrot.slane %v3821, 4
        %v3824 = vor.u32 %v3823, %v3819
        %v3825 = vrot.slane %v3824, 4
        %v3827 = vshll.u32 %v3710, 16
        %v3829 = vrot.slane %v3827, 5
        %v3830 = vsel %vm917, %v3825, %v3829
        %v3831 = vld [vmem:[%s3695] sm:$0xe]
        %v3832 = vld [vmem:[%s3695 + $0xc] sm:$0xe]
        %v3833 = vld [vmem:[%s3695 + $0x18] sm:$0xe]
        %v3834 = vld [vmem:[%s3695 + $0x24] sm:$0xe]
        %v3835 = vld [vmem:[%s3695 + $0x30] sm:$0xe]
        %v3851 = vrot.slane %v3831, 5
        %v3852 = vrot.slane %v3851, 4
        %v3853 = vrot.slane %v3697, 5
        %v3854 = vsel %vm1060, %v3852, %v3853
        %v3855 = vrot.slane %v3853, 4
        %v3856 = vrot.slane %v3706, 5
        %v3857 = vsel %vm1060, %v3855, %v3856
        %v3858 = vrot.slane %v3832, 5
        %v3859 = vrot.slane %v3858, 4
        %v3860 = vrot.slane %v3699, 5
        %v3861 = vsel %vm1060, %v3859, %v3860
        %v3862 = vrot.slane %v3860, 4
        %v3863 = vrot.slane %v3707, 5
        %v3864 = vsel %vm1060, %v3862, %v3863
        %v3865 = vrot.slane %v3833, 5
        %v3866 = vrot.slane %v3865, 4
        %v3867 = vrot.slane %v3701, 5
        %v3868 = vsel %vm1060, %v3866, %v3867
        %v3869 = vrot.slane %v3867, 4
        %v3870 = vrot.slane %v3708, 5
        %v3871 = vsel %vm1060, %v3869, %v3870
        %v3872 = vrot.slane %v3834, 5
        %v3873 = vrot.slane %v3872, 4
        %v3874 = vrot.slane %v3703, 5
        %v3875 = vsel %vm1060, %v3873, %v3874
        %v3876 = vrot.slane %v3874, 4
        %v3877 = vrot.slane %v3709, 5
        %v3878 = vsel %vm1060, %v3876, %v3877
        %v3879 = vrot.slane %v3835, 5
        %v3880 = vrot.slane %v3879, 4
        %v3881 = vrot.slane %v3705, 5
        %v3882 = vsel %vm1060, %v3880, %v3881
        %v3883 = vrot.slane %v3881, 4
        %v3884 = vrot.slane %v3710, 5
        %v3885 = vsel %vm1060, %v3883, %v3884
        %v3891 = vunpack.c.l.b16 %v3314
        %v3892 = vunpack.c.l.b16 %v3315
        %v3893 = vunpack.c.l.b16 %v3316
        %v3894 = vunpack.c.l.b16 %v3317
        %v3895 = vunpack.c.l.b16 %v3318
        %v3896 = vunpack.c.l.b16 %v3319
        %v3897 = vunpack.c.l.b16 %v3320
        %v3898 = vunpack.c.l.b16 %v3321
        %v3899 = vunpack.c.l.b16 %v3322
        %v3900 = vunpack.c.l.b16 %v3323
        %v3901 = vpack.c.b16 %v3892, %v3891
        %v3902 = vpack.c.b16 %v3894, %v3893
        %v3903 = vpack.c.b16 %v3896, %v3895
        %v3904 = vpack.c.b16 %v3898, %v3897
        %v3905 = vpack.c.b16 %v3900, %v3899
        %v3906 = vunpack.c.l.b16 %v3342
        %v3907 = vunpack.c.l.b16 %v3352
        %v3908 = vunpack.c.l.b16 %v3366
        %v3909 = vunpack.c.l.b16 %v3376
        %v3910 = vunpack.c.l.b16 %v3390
        %v3911 = vunpack.c.l.b16 %v3400
        %v3912 = vunpack.c.l.b16 %v3414
        %v3913 = vunpack.c.l.b16 %v3424
        %v3914 = vunpack.c.l.b16 %v3438
        %v3915 = vunpack.c.l.b16 %v3448
        %v3916 = vpack.c.b16 %v3907, %v3906
        %v3917 = vpack.c.b16 %v3909, %v3908
        %v3918 = vpack.c.b16 %v3911, %v3910
        %v3919 = vpack.c.b16 %v3913, %v3912
        %v3920 = vpack.c.b16 %v3915, %v3914
        %3921 = vrot.lane.b32.xlu0 %v3916, 4
        %v3922 = vpop.permute.xlu0 %3921
        %3923 = vrot.lane.b32.xlu0 %v3917, 4
        %v3924 = vpop.permute.xlu0 %3923
        %3925 = vrot.lane.b32.xlu0 %v3918, 4
        %v3926 = vpop.permute.xlu0 %3925
        %3927 = vrot.lane.b32.xlu0 %v3919, 4
        %v3928 = vpop.permute.xlu0 %3927
        %3929 = vrot.lane.b32.xlu0 %v3920, 4
        %v3930 = vpop.permute.xlu0 %3929
        %v3931 = vunpack.c.l.b16 %v3472
        %v3932 = vunpack.c.l.b16 %v3475
        %v3933 = vunpack.c.l.b16 %v3479
        %v3934 = vunpack.c.l.b16 %v3482
        %v3935 = vunpack.c.l.b16 %v3486
        %v3936 = vunpack.c.l.b16 %v3489
        %v3937 = vunpack.c.l.b16 %v3493
        %v3938 = vunpack.c.l.b16 %v3496
        %v3939 = vunpack.c.l.b16 %v3500
        %v3940 = vunpack.c.l.b16 %v3503
        %v3941 = vpack.c.b16 %v3932, %v3931
        %v3942 = vpack.c.b16 %v3934, %v3933
        %v3943 = vpack.c.b16 %v3936, %v3935
        %v3944 = vpack.c.b16 %v3938, %v3937
        %v3945 = vpack.c.b16 %v3940, %v3939
        %3946 = vrot.lane.b32.xlu0 %v3941, 8
        %v3947 = vpop.permute.xlu0 %3946
        %3948 = vrot.lane.b32.xlu0 %v3942, 8
        %v3949 = vpop.permute.xlu0 %3948
        %3950 = vrot.lane.b32.xlu0 %v3943, 8
        %v3951 = vpop.permute.xlu0 %3950
        %3952 = vrot.lane.b32.xlu0 %v3944, 8
        %v3953 = vpop.permute.xlu0 %3952
        %3954 = vrot.lane.b32.xlu0 %v3945, 8
        %v3955 = vpop.permute.xlu0 %3954
        %v3961 = vunpack.c.l.b16 %v3505
        %v3962 = vunpack.c.l.b16 %v3506
        %v3963 = vunpack.c.l.b16 %v3507
        %v3964 = vunpack.c.l.b16 %v3508
        %v3965 = vunpack.c.l.b16 %v3509
        %v3966 = vunpack.c.l.b16 %v3510
        %v3967 = vunpack.c.l.b16 %v3511
        %v3968 = vunpack.c.l.b16 %v3512
        %v3969 = vunpack.c.l.b16 %v3513
        %v3970 = vunpack.c.l.b16 %v3514
        %v3971 = vpack.c.b16 %v3962, %v3961
        %v3972 = vpack.c.b16 %v3964, %v3963
        %v3973 = vpack.c.b16 %v3966, %v3965
        %v3974 = vpack.c.b16 %v3968, %v3967
        %v3975 = vpack.c.b16 %v3970, %v3969
        %3976 = vrot.lane.b32.xlu0 %v3971, 12
        %v3977 = vpop.permute.xlu0 %3976
        %3978 = vrot.lane.b32.xlu0 %v3972, 12
        %v3979 = vpop.permute.xlu0 %3978
        %3980 = vrot.lane.b32.xlu0 %v3973, 12
        %v3981 = vpop.permute.xlu0 %3980
        %3982 = vrot.lane.b32.xlu0 %v3974, 12
        %v3983 = vpop.permute.xlu0 %3982
        %3984 = vrot.lane.b32.xlu0 %v3975, 12
        %v3985 = vpop.permute.xlu0 %3984
        %v3986 = vunpack.c.l.b16 %v3533
        %v3987 = vunpack.c.l.b16 %v3543
        %v3988 = vunpack.c.l.b16 %v3557
        %v3989 = vunpack.c.l.b16 %v3567
        %v3990 = vunpack.c.l.b16 %v3581
        %v3991 = vunpack.c.l.b16 %v3591
        %v3992 = vunpack.c.l.b16 %v3605
        %v3993 = vunpack.c.l.b16 %v3615
        %v3994 = vunpack.c.l.b16 %v3629
        %v3995 = vunpack.c.l.b16 %v3639
        %v3996 = vpack.c.b16 %v3987, %v3986
        %v3997 = vpack.c.b16 %v3989, %v3988
        %v3998 = vpack.c.b16 %v3991, %v3990
        %v3999 = vpack.c.b16 %v3993, %v3992
        %v4000 = vpack.c.b16 %v3995, %v3994
        %4001 = vrot.lane.b32.xlu0 %v3996, 16
        %v4002 = vpop.permute.xlu0 %4001
        %4003 = vrot.lane.b32.xlu0 %v3997, 16
        %v4004 = vpop.permute.xlu0 %4003
        %4005 = vrot.lane.b32.xlu0 %v3998, 16
        %v4006 = vpop.permute.xlu0 %4005
        %4007 = vrot.lane.b32.xlu0 %v3999, 16
        %v4008 = vpop.permute.xlu0 %4007
        %4009 = vrot.lane.b32.xlu0 %v4000, 16
        %v4010 = vpop.permute.xlu0 %4009
        %v4011 = vunpack.c.l.b16 %v3663
        %v4012 = vunpack.c.l.b16 %v3666
        %v4013 = vunpack.c.l.b16 %v3670
        %v4014 = vunpack.c.l.b16 %v3673
        %v4015 = vunpack.c.l.b16 %v3677
        %v4016 = vunpack.c.l.b16 %v3680
        %v4017 = vunpack.c.l.b16 %v3684
        %v4018 = vunpack.c.l.b16 %v3687
        %v4019 = vunpack.c.l.b16 %v3691
        %v4020 = vunpack.c.l.b16 %v3694
        %v4021 = vpack.c.b16 %v4012, %v4011
        %v4022 = vpack.c.b16 %v4014, %v4013
        %v4023 = vpack.c.b16 %v4016, %v4015
        %v4024 = vpack.c.b16 %v4018, %v4017
        %v4025 = vpack.c.b16 %v4020, %v4019
        %4026 = vrot.lane.b32.xlu0 %v4021, 20
        %v4027 = vpop.permute.xlu0 %4026
        %4028 = vrot.lane.b32.xlu0 %v4022, 20
        %v4029 = vpop.permute.xlu0 %4028
        %4030 = vrot.lane.b32.xlu0 %v4023, 20
        %v4031 = vpop.permute.xlu0 %4030
        %4032 = vrot.lane.b32.xlu0 %v4024, 20
        %v4033 = vpop.permute.xlu0 %4032
        %4034 = vrot.lane.b32.xlu0 %v4025, 20
        %v4035 = vpop.permute.xlu0 %4034
        %v4041 = vunpack.c.l.b16 %v3696
        %v4042 = vunpack.c.l.b16 %v3697
        %v4043 = vunpack.c.l.b16 %v3698
        %v4044 = vunpack.c.l.b16 %v3699
        %v4045 = vunpack.c.l.b16 %v3700
        %v4046 = vunpack.c.l.b16 %v3701
        %v4047 = vunpack.c.l.b16 %v3702
        %v4048 = vunpack.c.l.b16 %v3703
        %v4049 = vunpack.c.l.b16 %v3704
        %v4050 = vunpack.c.l.b16 %v3705
        %v4051 = vpack.c.b16 %v4042, %v4041
        %v4052 = vpack.c.b16 %v4044, %v4043
        %v4053 = vpack.c.b16 %v4046, %v4045
        %v4054 = vpack.c.b16 %v4048, %v4047
        %v4055 = vpack.c.b16 %v4050, %v4049
        %4056 = vrot.lane.b32.xlu0 %v4051, 24
        %v4057 = vpop.permute.xlu0 %4056
        %4058 = vrot.lane.b32.xlu0 %v4052, 24
        %v4059 = vpop.permute.xlu0 %4058
        %4060 = vrot.lane.b32.xlu0 %v4053, 24
        %v4061 = vpop.permute.xlu0 %4060
        %4062 = vrot.lane.b32.xlu0 %v4054, 24
        %v4063 = vpop.permute.xlu0 %4062
        %4064 = vrot.lane.b32.xlu0 %v4055, 24
        %v4065 = vpop.permute.xlu0 %4064
        %v4066 = vunpack.c.l.b16 %v3724
        %v4067 = vunpack.c.l.b16 %v3734
        %v4068 = vunpack.c.l.b16 %v3748
        %v4069 = vunpack.c.l.b16 %v3758
        %v4070 = vunpack.c.l.b16 %v3772
        %v4071 = vunpack.c.l.b16 %v3782
        %v4072 = vunpack.c.l.b16 %v3796
        %v4073 = vunpack.c.l.b16 %v3806
        %v4074 = vunpack.c.l.b16 %v3820
        %v4075 = vunpack.c.l.b16 %v3830
        %v4076 = vpack.c.b16 %v4067, %v4066
        %v4077 = vpack.c.b16 %v4069, %v4068
        %v4078 = vpack.c.b16 %v4071, %v4070
        %v4079 = vpack.c.b16 %v4073, %v4072
        %v4080 = vpack.c.b16 %v4075, %v4074
        %4081 = vrot.lane.b32.xlu0 %v4076, 28
        %v4082 = vpop.permute.xlu0 %4081
        %4083 = vrot.lane.b32.xlu0 %v4077, 28
        %v4084 = vpop.permute.xlu0 %4083
        %4085 = vrot.lane.b32.xlu0 %v4078, 28
        %v4086 = vpop.permute.xlu0 %4085
        %4087 = vrot.lane.b32.xlu0 %v4079, 28
        %v4088 = vpop.permute.xlu0 %4087
        %4089 = vrot.lane.b32.xlu0 %v4080, 28
        %v4090 = vpop.permute.xlu0 %4089
        %v4091 = vunpack.c.l.b16 %v3854
        %v4092 = vunpack.c.l.b16 %v3857
        %v4093 = vunpack.c.l.b16 %v3861
        %v4094 = vunpack.c.l.b16 %v3864
        %v4095 = vunpack.c.l.b16 %v3868
        %v4096 = vunpack.c.l.b16 %v3871
        %v4097 = vunpack.c.l.b16 %v3875
        %v4098 = vunpack.c.l.b16 %v3878
        %v4099 = vunpack.c.l.b16 %v3882
        %v4100 = vunpack.c.l.b16 %v3885
        %v4101 = vpack.c.b16 %v4092, %v4091
        %v4102 = vpack.c.b16 %v4094, %v4093
        %v4103 = vpack.c.b16 %v4096, %v4095
        %v4104 = vpack.c.b16 %v4098, %v4097
        %v4105 = vpack.c.b16 %v4100, %v4099
        %4106 = vrot.lane.b32.xlu0 %v4101, 32
        %v4107 = vpop.permute.xlu0 %4106
        %4108 = vrot.lane.b32.xlu0 %v4102, 32
        %v4109 = vpop.permute.xlu0 %4108
        %4110 = vrot.lane.b32.xlu0 %v4103, 32
        %v4111 = vpop.permute.xlu0 %4110
        %4112 = vrot.lane.b32.xlu0 %v4104, 32
        %v4113 = vpop.permute.xlu0 %4112
        %4114 = vrot.lane.b32.xlu0 %v4105, 32
        %v4115 = vpop.permute.xlu0 %4114
        %v4118 = vsel %vm1707, %v3901, %v3922
        %v4121 = vsel %vm1707, %v3902, %v3924
        %v4124 = vsel %vm1707, %v3903, %v3926
        %v4127 = vsel %vm1707, %v3904, %v3928
        %v4130 = vsel %vm1707, %v3905, %v3930
        %v4132 = vsel %vm1723, %v4118, %v3947
        %v4134 = vsel %vm1723, %v4121, %v3949
        %v4136 = vsel %vm1723, %v4124, %v3951
        %v4138 = vsel %vm1723, %v4127, %v3953
        %v4140 = vsel %vm1723, %v4130, %v3955
        %v4142 = vsel %vm1734, %v4132, %v3977
        %v4144 = vsel %vm1734, %v4134, %v3979
        %v4146 = vsel %vm1734, %v4136, %v3981
        %v4148 = vsel %vm1734, %v4138, %v3983
        %v4150 = vsel %vm1734, %v4140, %v3985
        %v4152 = vsel %vm1745, %v4142, %v4002
        %v4154 = vsel %vm1745, %v4144, %v4004
        %v4156 = vsel %vm1745, %v4146, %v4006
        %v4158 = vsel %vm1745, %v4148, %v4008
        %v4160 = vsel %vm1745, %v4150, %v4010
        %v4162 = vsel %vm1756, %v4152, %v4027
        %v4164 = vsel %vm1756, %v4154, %v4029
        %v4166 = vsel %vm1756, %v4156, %v4031
        %v4168 = vsel %vm1756, %v4158, %v4033
        %v4170 = vsel %vm1756, %v4160, %v4035
        %v4172 = vsel %vm1767, %v4162, %v4057
        %v4174 = vsel %vm1767, %v4164, %v4059
        %v4176 = vsel %vm1767, %v4166, %v4061
        %v4178 = vsel %vm1767, %v4168, %v4063
        %v4180 = vsel %vm1767, %v4170, %v4065
        %v4182 = vsel %vm1778, %v4172, %v4082
        %v4184 = vsel %vm1778, %v4174, %v4084
        %v4186 = vsel %vm1778, %v4176, %v4086
        %v4188 = vsel %vm1778, %v4178, %v4088
        %v4190 = vsel %vm1778, %v4180, %v4090
        %v4192 = vsel %vm1789, %v4182, %v4107
        %v4194 = vsel %vm1789, %v4184, %v4109
        %v4196 = vsel %vm1789, %v4186, %v4111
        %v4198 = vsel %vm1789, %v4188, %v4113
        %v4200 = vsel %vm1789, %v4190, %v4115
        %v4201 = vsel %vm1800, %v4192, 0
        %v4203 = vsel %vm1800, %v4194, 0
        %v4205 = vsel %vm1800, %v4196, 0
        %v4207 = vsel %vm1800, %v4198, 0
        %v4209 = vsel %vm1800, %v4200, 0
        %4211 = vst [vmem:[#allocation4] sm:$0xff] %v4201
        %4212 = vst [vmem:[#allocation4 + $0x8] sm:$0xff] %v4203
        %4213 = vst [vmem:[#allocation4 + $0x10] sm:$0xff] %v4205
        %4214 = vst [vmem:[#allocation4 + $0x18] sm:$0xff] %v4207
        %4215 = vst [vmem:[#allocation4 + $0x20] sm:$0xff] %v4209
        %v4216 = vld [vmem:[#allocation4] sm:$0xff]
        %v4217 = vld [vmem:[#allocation4 + $0x8] sm:$0xff]
        %v4218 = vld [vmem:[#allocation4 + $0x10] sm:$0xff]
        %v4219 = vld [vmem:[#allocation4 + $0x18] sm:$0xff]
        %v4220 = vld [vmem:[#allocation4 + $0x20] sm:$0xff]
        %v4221 = vld [vmem:[#allocation13] sm:$0xf]
        %v4222 = vld [vmem:[#allocation13 + $0x4] sm:$0xf]
        %v4223 = vld [vmem:[#allocation13 + $0x8] sm:$0xf]
        %v4224 = vld [vmem:[#allocation13 + $0xc] sm:$0xf]
        %v4225 = vld [vmem:[#allocation13 + $0x10] sm:$0xf]
        %v4226 = vld [vmem:[#allocation13 + $0x14] sm:$0xf]
        %v4227 = vld [vmem:[#allocation13 + $0x18] sm:$0xf]
        %v4228 = vld [vmem:[#allocation13 + $0x1c] sm:$0xf]
        %v4229 = vld [vmem:[#allocation13 + $0x20] sm:$0xf]
        %v4230 = vld [vmem:[#allocation13 + $0x24] sm:$0xf]
        %v4231 = vld [vmem:[#allocation13 + $0x28] sm:$0xf]
        %v4232 = vld [vmem:[#allocation13 + $0x2c] sm:$0xf]
        %v4233 = vld [vmem:[#allocation13 + $0x30] sm:$0xf]
        %v4234 = vld [vmem:[#allocation13 + $0x34] sm:$0xf]
        %v4235 = vld [vmem:[#allocation13 + $0x38] sm:$0xf]
        %v4236 = vld [vmem:[#allocation13 + $0x3c] sm:$0xf]
        %v4237 = vld [vmem:[%s6] sm:$0x1]
        %v4239 = vlaneseq
        %v4240 = vshrl.u32 %v4239, 7
        %v4241 = vsub.s32 0, %v4240
        %v4242 = vrot.slane %v4237, %v4241
        %v4260 = vunpack.c.l.b16 %v4221
        %v4261 = vunpack.c.l.b16 %v4222
        %v4262 = vunpack.c.l.b16 %v4223
        %v4263 = vunpack.c.l.b16 %v4224
        %v4264 = vunpack.c.l.b16 %v4225
        %v4265 = vunpack.c.l.b16 %v4226
        %v4266 = vunpack.c.l.b16 %v4227
        %v4267 = vunpack.c.l.b16 %v4228
        %v4268 = vunpack.c.l.b16 %v4229
        %v4269 = vunpack.c.l.b16 %v4230
        %v4270 = vunpack.c.l.b16 %v4231
        %v4271 = vunpack.c.l.b16 %v4232
        %v4272 = vunpack.c.l.b16 %v4233
        %v4273 = vunpack.c.l.b16 %v4234
        %v4274 = vunpack.c.l.b16 %v4235
        %v4275 = vunpack.c.l.b16 %v4236
        %v4276 = vpack.c.b16 %v4261, %v4260
        %v4277 = vpack.c.b16 %v4263, %v4262
        %v4278 = vpack.c.b16 %v4265, %v4264
        %v4279 = vpack.c.b16 %v4267, %v4266
        %v4280 = vpack.c.b16 %v4269, %v4268
        %v4281 = vpack.c.b16 %v4271, %v4270
        %v4282 = vpack.c.b16 %v4273, %v4272
        %v4283 = vpack.c.b16 %v4275, %v4274
        %4292 = vmatprep.subr.bf16.mxu0 0
        %4293 = vmatpush1.bf16.msra.mxu0 %v4276
        %4294 = vmatprep.subr.bf16.mxu0 0
        %4295 = vmatpush1.bf16.msra.mxu0 %v4277
        %4296 = vmatprep.subr.bf16.mxu0 0
        %4297 = vmatpush1.bf16.msra.mxu0 %v4278
        %4298 = vmatprep.subr.bf16.mxu0 0
        %4299 = vmatpush1.bf16.msra.mxu0 %v4279
        %4300 = vmatprep.subr.bf16.mxu0 0
        %4301 = vmatpush1.bf16.msra.mxu0 %v4280
        %4302 = vmatprep.subr.bf16.mxu0 0
        %4303 = vmatpush1.bf16.msra.mxu0 %v4281
        %4304 = vmatprep.subr.bf16.mxu0 0
        %4305 = vmatpush1.bf16.msra.mxu0 %v4282
        %4306 = vmatprep.subr.bf16.mxu0 0
        %4307 = vmatpush1.bf16.msra.mxu0 %v4283
        %4308 = vmatprep.subr.bf16.mxu0 0
        %4309 = vmatpush1.bf16.msra.mxu0 0
        %4310 = vmatprep.subr.bf16.mxu0 0
        %4311 = vmatpush1.bf16.msra.mxu0 0
        %4312 = vmatprep.subr.bf16.mxu0 0
        %4313 = vmatpush1.bf16.msra.mxu0 0
        %4314 = vmatprep.subr.bf16.mxu0 0
        %4315 = vmatpush1.bf16.msra.mxu0 0
        %4316 = vmatprep.subr.bf16.mxu0 0
        %4317 = vmatpush1.bf16.msra.mxu0 0
        %4318 = vmatprep.subr.bf16.mxu0 0
        %4319 = vmatpush1.bf16.msra.mxu0 0
        %4320 = vmatprep.subr.bf16.mxu0 0
        %4321 = vmatpush1.bf16.msra.mxu0 0
        %4322 = vmatprep.subr.bf16.mxu0 0
        %4323 = vmatpush1.bf16.msra.mxu0 0
        %4324 = vmatprep.mubr.bf16.mxu0 0
        %4325 = vmatmul.mubr.bf16.gmra.mrb[0].mxu0 %v4216
        %v4326 = vpop.f32.mrb[0].mxu0
        %v4327 = vadd.f32 %v4242, %v4326
        %v4328 = vpop.f32.mrb[0].mxu0
        %v4329 = vpop.f32.mrb[0].mxu0
        %v4330 = vadd.f32 %v4242, %v4329
        %v4331 = vpop.f32.mrb[0].mxu0
        %4332 = vmatprep.mubr.bf16.mxu0 0
        %4333 = vmatmul.mubr.bf16.gmra.mrb[0].mxu0 %v4217
        %v4334 = vpop.f32.mrb[0].mxu0
        %v4335 = vadd.f32 %v4242, %v4334
        %v4336 = vpop.f32.mrb[0].mxu0
        %v4337 = vpop.f32.mrb[0].mxu0
        %v4338 = vadd.f32 %v4242, %v4337
        %v4339 = vpop.f32.mrb[0].mxu0
        %4340 = vmatprep.mubr.bf16.mxu0 0
        %4341 = vmatmul.mubr.bf16.gmra.mrb[0].mxu0 %v4218
        %v4342 = vpop.f32.mrb[0].mxu0
        %v4343 = vadd.f32 %v4242, %v4342
        %v4344 = vpop.f32.mrb[0].mxu0
        %v4345 = vpop.f32.mrb[0].mxu0
        %v4346 = vadd.f32 %v4242, %v4345
        %v4347 = vpop.f32.mrb[0].mxu0
        %4348 = vmatprep.mubr.bf16.mxu0 0
        %4349 = vmatmul.mubr.bf16.gmra.mrb[0].mxu0 %v4219
        %v4350 = vpop.f32.mrb[0].mxu0
        %v4351 = vadd.f32 %v4242, %v4350
        %v4352 = vpop.f32.mrb[0].mxu0
        %v4353 = vpop.f32.mrb[0].mxu0
        %v4354 = vadd.f32 %v4242, %v4353
        %v4355 = vpop.f32.mrb[0].mxu0
        %4356 = vmatprep.mubr.bf16.mxu0 0
        %4357 = vmatmul.mubr.bf16.gmra.mrb[0].mxu0 %v4220
        %v4358 = vpop.f32.mrb[0].mxu0
        %v4359 = vadd.f32 %v4242, %v4358
        %v4360 = vpop.f32.mrb[0].mxu0
        %v4361 = vpop.f32.mrb[0].mxu0
        %v4362 = vadd.f32 %v4242, %v4361
        %v4363 = vpop.f32.mrb[0].mxu0
        %4364 = vdwg.mxu0
        %v4365 = vld [vmem:[%s389] sm:$0xf]
        %v4366 = vld [vmem:[%s389 + $0x4] sm:$0xf]
        %v4367 = vld [vmem:[%s389 + $0x8] sm:$0xf]
        %v4368 = vld [vmem:[%s389 + $0xc] sm:$0xf]
        %v4369 = vld [vmem:[%s389 + $0x10] sm:$0xf]
        %v4370 = vld [vmem:[%s389 + $0x14] sm:$0xf]
        %v4371 = vld [vmem:[%s389 + $0x18] sm:$0xf]
        %v4372 = vld [vmem:[%s389 + $0x1c] sm:$0xf]
        %v4373 = vld [vmem:[%s389 + $0x20] sm:$0xf]
        %v4374 = vld [vmem:[%s389 + $0x24] sm:$0xf]
        %v4375 = vunpack.c.l.bf16 %v4365
        %v4376 = vunpack.c.l.bf16 %v4366
        %v4377 = vunpack.c.l.bf16 %v4367
        %v4378 = vunpack.c.l.bf16 %v4368
        %v4379 = vunpack.c.l.bf16 %v4369
        %v4380 = vunpack.c.l.bf16 %v4370
        %v4381 = vunpack.c.l.bf16 %v4371
        %v4382 = vunpack.c.l.bf16 %v4372
        %v4383 = vunpack.c.l.bf16 %v4373
        %v4384 = vunpack.c.l.bf16 %v4374
        %v4385 = vadd.f32 %v4375, %v4327
        %v4386 = vadd.f32 %v4376, %v4330
        %v4387 = vadd.f32 %v4377, %v4335
        %v4388 = vadd.f32 %v4378, %v4338
        %v4389 = vadd.f32 %v4379, %v4343
        %v4390 = vadd.f32 %v4380, %v4346
        %v4391 = vadd.f32 %v4381, %v4351
        %v4392 = vadd.f32 %v4382, %v4354
        %v4393 = vadd.f32 %v4383, %v4359
        %v4394 = vadd.f32 %v4384, %v4362
        %v4395 = vpack.c.bf16 %v4386, %v4385
        %v4396 = vpack.c.bf16 %v4388, %v4387
        %v4397 = vpack.c.bf16 %v4390, %v4389
        %v4398 = vpack.c.bf16 %v4392, %v4391
        %v4399 = vpack.c.bf16 %v4394, %v4393
        %v4405 = vunpack.c.l.b16 %v4395
        %v4406 = vunpack.c.h.b16 %v4395
        %v4407 = vunpack.c.l.b16 %v4396
        %v4408 = vunpack.c.h.b16 %v4396
        %v4409 = vunpack.c.l.b16 %v4397
        %v4410 = vunpack.c.h.b16 %v4397
        %v4411 = vunpack.c.l.b16 %v4398
        %v4412 = vunpack.c.h.b16 %v4398
        %v4413 = vunpack.c.l.b16 %v4399
        %v4414 = vunpack.c.h.b16 %v4399
        %v4415 = vpack.c.b16 %v4405, %v4405
        %v4416 = vpack.c.b16 %v4406, %v4406
        %v4417 = vpack.c.b16 %v4407, %v4407
        %v4418 = vpack.c.b16 %v4408, %v4408
        %v4419 = vpack.c.b16 %v4409, %v4409
        %v4420 = vpack.c.b16 %v4410, %v4410
        %v4421 = vpack.c.b16 %v4411, %v4411
        %v4422 = vpack.c.b16 %v4412, %v4412
        %v4423 = vpack.c.b16 %v4413, %v4413
        %v4424 = vpack.c.b16 %v4414, %v4414
        %4435 = vst [vmem:[%s455] sm:$0xf] %v4415
        %4436 = vst [vmem:[%s455 + $0x4] sm:$0xf] %v4416
        %4437 = vst [vmem:[%s455 + $0x8] sm:$0xf] %v4417
        %4438 = vst [vmem:[%s455 + $0xc] sm:$0xf] %v4418
        %4439 = vst [vmem:[%s455 + $0x10] sm:$0xf] %v4419
        %4440 = vst [vmem:[%s455 + $0x14] sm:$0xf] %v4420
        %4441 = vst [vmem:[%s455 + $0x18] sm:$0xf] %v4421
        %4442 = vst [vmem:[%s455 + $0x1c] sm:$0xf] %v4422
        %4443 = vst [vmem:[%s455 + $0x20] sm:$0xf] %v4423
        %4444 = vst [vmem:[%s455 + $0x24] sm:$0xf] %v4424
        %v4445 = vld [vmem:[%s3283] sm:$0xf]
        %v4446 = vld [vmem:[%s3283 + $0x4] sm:$0xf]
        %v4447 = vld [vmem:[%s3283 + $0xc] sm:$0xf]
        %v4448 = vld [vmem:[%s3283 + $0x10] sm:$0xf]
        %v4449 = vld [vmem:[%s3283 + $0x18] sm:$0xf]
        %v4450 = vld [vmem:[%s3283 + $0x1c] sm:$0xf]
        %v4451 = vld [vmem:[%s3283 + $0x8] sm:$0x1]
        %v4452 = vld [vmem:[%s3283 + $0x14] sm:$0x1]
        %v4453 = vld [vmem:[%s3283 + $0x20] sm:$0x1]
        %v4455 = vshrl.u32 %v4445, 16
        %v4457 = vrot.slane %v4455, 4
        %v4458 = vshll.u32 %v4445, 16
        %v4460 = vrot.slane %v4458, 5
        %v4461 = vor.u32 %v4457, %v4460
        %v4462 = vrot.slane %v4461, 4
        %v4464 = vshll.u32 %v4446, 16
        %v4466 = vrot.slane %v4464, 5
        %v4467 = vsel %vm917, %v4462, %v4466
        %v4468 = vshrl.u32 %v4446, 16
        %v4470 = vrot.slane %v4468, 4
        %v4471 = vor.u32 %v4470, %v4466
        %v4472 = vrot.slane %v4471, 4
        %v4474 = vshll.u32 %v4451, 16
        %v4476 = vrot.slane %v4474, 5
        %v4477 = vsel %vm917, %v4472, %v4476
        %v4479 = vshrl.u32 %v4447, 16
        %v4481 = vrot.slane %v4479, 4
        %v4482 = vshll.u32 %v4447, 16
        %v4484 = vrot.slane %v4482, 5
        %v4485 = vor.u32 %v4481, %v4484
        %v4486 = vrot.slane %v4485, 4
        %v4488 = vshll.u32 %v4448, 16
        %v4490 = vrot.slane %v4488, 5
        %v4491 = vsel %vm917, %v4486, %v4490
        %v4492 = vshrl.u32 %v4448, 16
        %v4494 = vrot.slane %v4492, 4
        %v4495 = vor.u32 %v4494, %v4490
        %v4496 = vrot.slane %v4495, 4
        %v4498 = vshll.u32 %v4452, 16
        %v4500 = vrot.slane %v4498, 5
        %v4501 = vsel %vm917, %v4496, %v4500
        %v4503 = vshrl.u32 %v4449, 16
        %v4505 = vrot.slane %v4503, 4
        %v4506 = vshll.u32 %v4449, 16
        %v4508 = vrot.slane %v4506, 5
        %v4509 = vor.u32 %v4505, %v4508
        %v4510 = vrot.slane %v4509, 4
        %v4512 = vshll.u32 %v4450, 16
        %v4514 = vrot.slane %v4512, 5
        %v4515 = vsel %vm917, %v4510, %v4514
        %v4516 = vshrl.u32 %v4450, 16
        %v4518 = vrot.slane %v4516, 4
        %v4519 = vor.u32 %v4518, %v4514
        %v4520 = vrot.slane %v4519, 4
        %v4522 = vshll.u32 %v4453, 16
        %v4524 = vrot.slane %v4522, 5
        %v4525 = vsel %vm917, %v4520, %v4524
        %v4526 = vld [vmem:[%s3283] sm:$0xe]
        %v4527 = vld [vmem:[%s3283 + $0xc] sm:$0xe]
        %v4528 = vld [vmem:[%s3283 + $0x18] sm:$0xe]
        %v4538 = vrot.slane %v4526, 5
        %v4539 = vrot.slane %v4538, 4
        %v4540 = vrot.slane %v4446, 5
        %v4541 = vsel %vm1060, %v4539, %v4540
        %v4542 = vrot.slane %v4540, 4
        %v4543 = vrot.slane %v4451, 5
        %v4544 = vsel %vm1060, %v4542, %v4543
        %v4545 = vrot.slane %v4527, 5
        %v4546 = vrot.slane %v4545, 4
        %v4547 = vrot.slane %v4448, 5
        %v4548 = vsel %vm1060, %v4546, %v4547
        %v4549 = vrot.slane %v4547, 4
        %v4550 = vrot.slane %v4452, 5
        %v4551 = vsel %vm1060, %v4549, %v4550
        %v4552 = vrot.slane %v4528, 5
        %v4553 = vrot.slane %v4552, 4
        %v4554 = vrot.slane %v4450, 5
        %v4555 = vsel %vm1060, %v4553, %v4554
        %v4556 = vrot.slane %v4554, 4
        %v4557 = vrot.slane %v4453, 5
        %v4558 = vsel %vm1060, %v4556, %v4557
        %s4559 = scalar_lea.vmem [#allocation3], 72
        %v4560 = vld [vmem:[%s4559] sm:$0xf]
        %v4561 = vld [vmem:[%s4559 + $0x4] sm:$0xf]
        %v4562 = vld [vmem:[%s4559 + $0xc] sm:$0xf]
        %v4563 = vld [vmem:[%s4559 + $0x10] sm:$0xf]
        %v4564 = vld [vmem:[%s4559 + $0x18] sm:$0xf]
        %v4565 = vld [vmem:[%s4559 + $0x1c] sm:$0xf]
        %v4566 = vld [vmem:[%s4559 + $0x8] sm:$0x1]
        %v4567 = vld [vmem:[%s4559 + $0x14] sm:$0x1]
        %v4568 = vld [vmem:[%s4559 + $0x20] sm:$0x1]
        %v4570 = vshrl.u32 %v4560, 16
        %v4572 = vrot.slane %v4570, 4
        %v4573 = vshll.u32 %v4560, 16
        %v4575 = vrot.slane %v4573, 5
        %v4576 = vor.u32 %v4572, %v4575
        %v4577 = vrot.slane %v4576, 4
        %v4579 = vshll.u32 %v4561, 16
        %v4581 = vrot.slane %v4579, 5
        %v4582 = vsel %vm917, %v4577, %v4581
        %v4583 = vshrl.u32 %v4561, 16
        %v4585 = vrot.slane %v4583, 4
        %v4586 = vor.u32 %v4585, %v4581
        %v4587 = vrot.slane %v4586, 4
        %v4589 = vshll.u32 %v4566, 16
        %v4591 = vrot.slane %v4589, 5
        %v4592 = vsel %vm917, %v4587, %v4591
        %v4594 = vshrl.u32 %v4562, 16
        %v4596 = vrot.slane %v4594, 4
        %v4597 = vshll.u32 %v4562, 16
        %v4599 = vrot.slane %v4597, 5
        %v4600 = vor.u32 %v4596, %v4599
        %v4601 = vrot.slane %v4600, 4
        %v4603 = vshll.u32 %v4563, 16
        %v4605 = vrot.slane %v4603, 5
        %v4606 = vsel %vm917, %v4601, %v4605
        %v4607 = vshrl.u32 %v4563, 16
        %v4609 = vrot.slane %v4607, 4
        %v4610 = vor.u32 %v4609, %v4605
        %v4611 = vrot.slane %v4610, 4
        %v4613 = vshll.u32 %v4567, 16
        %v4615 = vrot.slane %v4613, 5
        %v4616 = vsel %vm917, %v4611, %v4615
        %v4618 = vshrl.u32 %v4564, 16
        %v4620 = vrot.slane %v4618, 4
        %v4621 = vshll.u32 %v4564, 16
        %v4623 = vrot.slane %v4621, 5
        %v4624 = vor.u32 %v4620, %v4623
        %v4625 = vrot.slane %v4624, 4
        %v4627 = vshll.u32 %v4565, 16
        %v4629 = vrot.slane %v4627, 5
        %v4630 = vsel %vm917, %v4625, %v4629
        %v4631 = vshrl.u32 %v4565, 16
        %v4633 = vrot.slane %v4631, 4
        %v4634 = vor.u32 %v4633, %v4629
        %v4635 = vrot.slane %v4634, 4
        %v4637 = vshll.u32 %v4568, 16
        %v4639 = vrot.slane %v4637, 5
        %v4640 = vsel %vm917, %v4635, %v4639
        %v4641 = vld [vmem:[%s4559] sm:$0xe]
        %v4642 = vld [vmem:[%s4559 + $0xc] sm:$0xe]
        %v4643 = vld [vmem:[%s4559 + $0x18] sm:$0xe]
        %v4653 = vrot.slane %v4641, 5
        %v4654 = vrot.slane %v4653, 4
        %v4655 = vrot.slane %v4561, 5
        %v4656 = vsel %vm1060, %v4654, %v4655
        %v4657 = vrot.slane %v4655, 4
        %v4658 = vrot.slane %v4566, 5
        %v4659 = vsel %vm1060, %v4657, %v4658
        %v4660 = vrot.slane %v4642, 5
        %v4661 = vrot.slane %v4660, 4
        %v4662 = vrot.slane %v4563, 5
        %v4663 = vsel %vm1060, %v4661, %v4662
        %v4664 = vrot.slane %v4662, 4
        %v4665 = vrot.slane %v4567, 5
        %v4666 = vsel %vm1060, %v4664, %v4665
        %v4667 = vrot.slane %v4643, 5
        %v4668 = vrot.slane %v4667, 4
        %v4669 = vrot.slane %v4565, 5
        %v4670 = vsel %vm1060, %v4668, %v4669
        %v4671 = vrot.slane %v4669, 4
        %v4672 = vrot.slane %v4568, 5
        %v4673 = vsel %vm1060, %v4671, %v4672
        %s4674 = scalar_lea.vmem [#allocation3], 84
        %v4675 = vld [vmem:[%s4674] sm:$0xf]
        %v4676 = vld [vmem:[%s4674 + $0x4] sm:$0xf]
        %v4677 = vld [vmem:[%s4674 + $0xc] sm:$0xf]
        %v4678 = vld [vmem:[%s4674 + $0x10] sm:$0xf]
        %v4679 = vld [vmem:[%s4674 + $0x18] sm:$0xf]
        %v4680 = vld [vmem:[%s4674 + $0x1c] sm:$0xf]
        %v4681 = vld [vmem:[%s4674 + $0x8] sm:$0x1]
        %v4682 = vld [vmem:[%s4674 + $0x14] sm:$0x1]
        %v4683 = vld [vmem:[%s4674 + $0x20] sm:$0x1]
        %v4685 = vshrl.u32 %v4675, 16
        %v4687 = vrot.slane %v4685, 4
        %v4688 = vshll.u32 %v4675, 16
        %v4690 = vrot.slane %v4688, 5
        %v4691 = vor.u32 %v4687, %v4690
        %v4692 = vrot.slane %v4691, 4
        %v4694 = vshll.u32 %v4676, 16
        %v4696 = vrot.slane %v4694, 5
        %v4697 = vsel %vm917, %v4692, %v4696
        %v4698 = vshrl.u32 %v4676, 16
        %v4700 = vrot.slane %v4698, 4
        %v4701 = vor.u32 %v4700, %v4696
        %v4702 = vrot.slane %v4701, 4
        %v4704 = vshll.u32 %v4681, 16
        %v4706 = vrot.slane %v4704, 5
        %v4707 = vsel %vm917, %v4702, %v4706
        %v4709 = vshrl.u32 %v4677, 16
        %v4711 = vrot.slane %v4709, 4
        %v4712 = vshll.u32 %v4677, 16
        %v4714 = vrot.slane %v4712, 5
        %v4715 = vor.u32 %v4711, %v4714
        %v4716 = vrot.slane %v4715, 4
        %v4718 = vshll.u32 %v4678, 16
        %v4720 = vrot.slane %v4718, 5
        %v4721 = vsel %vm917, %v4716, %v4720
        %v4722 = vshrl.u32 %v4678, 16
        %v4724 = vrot.slane %v4722, 4
        %v4725 = vor.u32 %v4724, %v4720
        %v4726 = vrot.slane %v4725, 4
        %v4728 = vshll.u32 %v4682, 16
        %v4730 = vrot.slane %v4728, 5
        %v4731 = vsel %vm917, %v4726, %v4730
        %v4733 = vshrl.u32 %v4679, 16
        %v4735 = vrot.slane %v4733, 4
        %v4736 = vshll.u32 %v4679, 16
        %v4738 = vrot.slane %v4736, 5
        %v4739 = vor.u32 %v4735, %v4738
        %v4740 = vrot.slane %v4739, 4
        %v4742 = vshll.u32 %v4680, 16
        %v4744 = vrot.slane %v4742, 5
        %v4745 = vsel %vm917, %v4740, %v4744
        %v4746 = vshrl.u32 %v4680, 16
        %v4748 = vrot.slane %v4746, 4
        %v4749 = vor.u32 %v4748, %v4744
        %v4750 = vrot.slane %v4749, 4
        %v4752 = vshll.u32 %v4683, 16
        %v4754 = vrot.slane %v4752, 5
        %v4755 = vsel %vm917, %v4750, %v4754
        %v4756 = vld [vmem:[%s4674] sm:$0xe]
        %v4757 = vld [vmem:[%s4674 + $0xc] sm:$0xe]
        %v4758 = vld [vmem:[%s4674 + $0x18] sm:$0xe]
        %v4768 = vrot.slane %v4756, 5
        %v4769 = vrot.slane %v4768, 4
        %v4770 = vrot.slane %v4676, 5
        %v4771 = vsel %vm1060, %v4769, %v4770
        %v4772 = vrot.slane %v4770, 4
        %v4773 = vrot.slane %v4681, 5
        %v4774 = vsel %vm1060, %v4772, %v4773
        %v4775 = vrot.slane %v4757, 5
        %v4776 = vrot.slane %v4775, 4
        %v4777 = vrot.slane %v4678, 5
        %v4778 = vsel %vm1060, %v4776, %v4777
        %v4779 = vrot.slane %v4777, 4
        %v4780 = vrot.slane %v4682, 5
        %v4781 = vsel %vm1060, %v4779, %v4780
        %v4782 = vrot.slane %v4758, 5
        %v4783 = vrot.slane %v4782, 4
        %v4784 = vrot.slane %v4680, 5
        %v4785 = vsel %vm1060, %v4783, %v4784
        %v4786 = vrot.slane %v4784, 4
        %v4787 = vrot.slane %v4683, 5
        %v4788 = vsel %vm1060, %v4786, %v4787
        %v4792 = vunpack.c.l.b16 %v4445
        %v4793 = vunpack.c.l.b16 %v4446
        %v4794 = vunpack.c.l.b16 %v4447
        %v4795 = vunpack.c.l.b16 %v4448
        %v4796 = vunpack.c.l.b16 %v4449
        %v4797 = vunpack.c.l.b16 %v4450
        %v4798 = vpack.c.b16 %v4793, %v4792
        %v4799 = vpack.c.b16 %v4795, %v4794
        %v4800 = vpack.c.b16 %v4797, %v4796
        %v4801 = vunpack.c.l.b16 %v4467
        %v4802 = vunpack.c.l.b16 %v4477
        %v4803 = vunpack.c.l.b16 %v4491
        %v4804 = vunpack.c.l.b16 %v4501
        %v4805 = vunpack.c.l.b16 %v4515
        %v4806 = vunpack.c.l.b16 %v4525
        %v4807 = vpack.c.b16 %v4802, %v4801
        %v4808 = vpack.c.b16 %v4804, %v4803
        %v4809 = vpack.c.b16 %v4806, %v4805
        %4810 = vrot.lane.b32.xlu0 %v4807, 4
        %v4811 = vpop.permute.xlu0 %4810
        %4812 = vrot.lane.b32.xlu0 %v4808, 4
        %v4813 = vpop.permute.xlu0 %4812
        %4814 = vrot.lane.b32.xlu0 %v4809, 4
        %v4815 = vpop.permute.xlu0 %4814
        %v4816 = vunpack.c.l.b16 %v4541
        %v4817 = vunpack.c.l.b16 %v4544
        %v4818 = vunpack.c.l.b16 %v4548
        %v4819 = vunpack.c.l.b16 %v4551
        %v4820 = vunpack.c.l.b16 %v4555
        %v4821 = vunpack.c.l.b16 %v4558
        %v4822 = vpack.c.b16 %v4817, %v4816
        %v4823 = vpack.c.b16 %v4819, %v4818
        %v4824 = vpack.c.b16 %v4821, %v4820
        %4825 = vrot.lane.b32.xlu0 %v4822, 8
        %v4826 = vpop.permute.xlu0 %4825
        %4827 = vrot.lane.b32.xlu0 %v4823, 8
        %v4828 = vpop.permute.xlu0 %4827
        %4829 = vrot.lane.b32.xlu0 %v4824, 8
        %v4830 = vpop.permute.xlu0 %4829
        %v4834 = vunpack.c.l.b16 %v4560
        %v4835 = vunpack.c.l.b16 %v4561
        %v4836 = vunpack.c.l.b16 %v4562
        %v4837 = vunpack.c.l.b16 %v4563
        %v4838 = vunpack.c.l.b16 %v4564
        %v4839 = vunpack.c.l.b16 %v4565
        %v4840 = vpack.c.b16 %v4835, %v4834
        %v4841 = vpack.c.b16 %v4837, %v4836
        %v4842 = vpack.c.b16 %v4839, %v4838
        %4843 = vrot.lane.b32.xlu0 %v4840, 12
        %v4844 = vpop.permute.xlu0 %4843
        %4845 = vrot.lane.b32.xlu0 %v4841, 12
        %v4846 = vpop.permute.xlu0 %4845
        %4847 = vrot.lane.b32.xlu0 %v4842, 12
        %v4848 = vpop.permute.xlu0 %4847
        %v4849 = vunpack.c.l.b16 %v4582
        %v4850 = vunpack.c.l.b16 %v4592
        %v4851 = vunpack.c.l.b16 %v4606
        %v4852 = vunpack.c.l.b16 %v4616
        %v4853 = vunpack.c.l.b16 %v4630
        %v4854 = vunpack.c.l.b16 %v4640
        %v4855 = vpack.c.b16 %v4850, %v4849
        %v4856 = vpack.c.b16 %v4852, %v4851
        %v4857 = vpack.c.b16 %v4854, %v4853
        %4858 = vrot.lane.b32.xlu0 %v4855, 16
        %v4859 = vpop.permute.xlu0 %4858
        %4860 = vrot.lane.b32.xlu0 %v4856, 16
        %v4861 = vpop.permute.xlu0 %4860
        %4862 = vrot.lane.b32.xlu0 %v4857, 16
        %v4863 = vpop.permute.xlu0 %4862
        %v4864 = vunpack.c.l.b16 %v4656
        %v4865 = vunpack.c.l.b16 %v4659
        %v4866 = vunpack.c.l.b16 %v4663
        %v4867 = vunpack.c.l.b16 %v4666
        %v4868 = vunpack.c.l.b16 %v4670
        %v4869 = vunpack.c.l.b16 %v4673
        %v4870 = vpack.c.b16 %v4865, %v4864
        %v4871 = vpack.c.b16 %v4867, %v4866
        %v4872 = vpack.c.b16 %v4869, %v4868
        %4873 = vrot.lane.b32.xlu0 %v4870, 20
        %v4874 = vpop.permute.xlu0 %4873
        %4875 = vrot.lane.b32.xlu0 %v4871, 20
        %v4876 = vpop.permute.xlu0 %4875
        %4877 = vrot.lane.b32.xlu0 %v4872, 20
        %v4878 = vpop.permute.xlu0 %4877
        %v4882 = vunpack.c.l.b16 %v4675
        %v4883 = vunpack.c.l.b16 %v4676
        %v4884 = vunpack.c.l.b16 %v4677
        %v4885 = vunpack.c.l.b16 %v4678
        %v4886 = vunpack.c.l.b16 %v4679
        %v4887 = vunpack.c.l.b16 %v4680
        %v4888 = vpack.c.b16 %v4883, %v4882
        %v4889 = vpack.c.b16 %v4885, %v4884
        %v4890 = vpack.c.b16 %v4887, %v4886
        %4891 = vrot.lane.b32.xlu0 %v4888, 24
        %v4892 = vpop.permute.xlu0 %4891
        %4893 = vrot.lane.b32.xlu0 %v4889, 24
        %v4894 = vpop.permute.xlu0 %4893
        %4895 = vrot.lane.b32.xlu0 %v4890, 24
        %v4896 = vpop.permute.xlu0 %4895
        %v4897 = vunpack.c.l.b16 %v4697
        %v4898 = vunpack.c.l.b16 %v4707
        %v4899 = vunpack.c.l.b16 %v4721
        %v4900 = vunpack.c.l.b16 %v4731
        %v4901 = vunpack.c.l.b16 %v4745
        %v4902 = vunpack.c.l.b16 %v4755
        %v4903 = vpack.c.b16 %v4898, %v4897
        %v4904 = vpack.c.b16 %v4900, %v4899
        %v4905 = vpack.c.b16 %v4902, %v4901
        %4906 = vrot.lane.b32.xlu0 %v4903, 28
        %v4907 = vpop.permute.xlu0 %4906
        %4908 = vrot.lane.b32.xlu0 %v4904, 28
        %v4909 = vpop.permute.xlu0 %4908
        %4910 = vrot.lane.b32.xlu0 %v4905, 28
        %v4911 = vpop.permute.xlu0 %4910
        %v4912 = vunpack.c.l.b16 %v4771
        %v4913 = vunpack.c.l.b16 %v4774
        %v4914 = vunpack.c.l.b16 %v4778
        %v4915 = vunpack.c.l.b16 %v4781
        %v4916 = vunpack.c.l.b16 %v4785
        %v4917 = vunpack.c.l.b16 %v4788
        %v4918 = vpack.c.b16 %v4913, %v4912
        %v4919 = vpack.c.b16 %v4915, %v4914
        %v4920 = vpack.c.b16 %v4917, %v4916
        %4921 = vrot.lane.b32.xlu0 %v4918, 32
        %v4922 = vpop.permute.xlu0 %4921
        %4923 = vrot.lane.b32.xlu0 %v4919, 32
        %v4924 = vpop.permute.xlu0 %4923
        %4925 = vrot.lane.b32.xlu0 %v4920, 32
        %v4926 = vpop.permute.xlu0 %4925
        %v4929 = vsel %vm1707, %v4798, %v4811
        %v4932 = vsel %vm1707, %v4799, %v4813
        %v4935 = vsel %vm1707, %v4800, %v4815
        %v4937 = vsel %vm1723, %v4929, %v4826
        %v4939 = vsel %vm1723, %v4932, %v4828
        %v4941 = vsel %vm1723, %v4935, %v4830
        %v4943 = vsel %vm1734, %v4937, %v4844
        %v4945 = vsel %vm1734, %v4939, %v4846
        %v4947 = vsel %vm1734, %v4941, %v4848
        %v4949 = vsel %vm1745, %v4943, %v4859
        %v4951 = vsel %vm1745, %v4945, %v4861
        %v4953 = vsel %vm1745, %v4947, %v4863
        %v4955 = vsel %vm1756, %v4949, %v4874
        %v4957 = vsel %vm1756, %v4951, %v4876
        %v4959 = vsel %vm1756, %v4953, %v4878
        %v4961 = vsel %vm1767, %v4955, %v4892
        %v4963 = vsel %vm1767, %v4957, %v4894
        %v4965 = vsel %vm1767, %v4959, %v4896
        %v4967 = vsel %vm1778, %v4961, %v4907
        %v4969 = vsel %vm1778, %v4963, %v4909
        %v4971 = vsel %vm1778, %v4965, %v4911
        %v4973 = vsel %vm1789, %v4967, %v4922
        %v4975 = vsel %vm1789, %v4969, %v4924
        %v4977 = vsel %vm1789, %v4971, %v4926
        %v4978 = vsel %vm1800, %v4973, 0
        %v4980 = vsel %vm1800, %v4975, 0
        %v4982 = vsel %vm1800, %v4977, 0
        %4984 = vst [vmem:[#allocation4 + $0x28] sm:$0xff] %v4978
        %4985 = vst [vmem:[#allocation4 + $0x30] sm:$0xff] %v4980
        %4986 = vst [vmem:[#allocation4 + $0x38] sm:$0xff] %v4982
        %v4987 = vld [vmem:[#allocation4 + $0x28] sm:$0xff]
        %v4988 = vld [vmem:[#allocation4 + $0x30] sm:$0xff]
        %v4989 = vld [vmem:[#allocation4 + $0x38] sm:$0xff]
        %v4990 = vld [vmem:[#allocation13] sm:$0xf]
        %v4991 = vld [vmem:[#allocation13 + $0x4] sm:$0xf]
        %v4992 = vld [vmem:[#allocation13 + $0x8] sm:$0xf]
        %v4993 = vld [vmem:[#allocation13 + $0xc] sm:$0xf]
        %v4994 = vld [vmem:[#allocation13 + $0x10] sm:$0xf]
        %v4995 = vld [vmem:[#allocation13 + $0x14] sm:$0xf]
        %v4996 = vld [vmem:[#allocation13 + $0x18] sm:$0xf]
        %v4997 = vld [vmem:[#allocation13 + $0x1c] sm:$0xf]
        %v4998 = vld [vmem:[#allocation13 + $0x20] sm:$0xf]
        %v4999 = vld [vmem:[#allocation13 + $0x24] sm:$0xf]
        %v5000 = vld [vmem:[#allocation13 + $0x28] sm:$0xf]
        %v5001 = vld [vmem:[#allocation13 + $0x2c] sm:$0xf]
        %v5002 = vld [vmem:[#allocation13 + $0x30] sm:$0xf]
        %v5003 = vld [vmem:[#allocation13 + $0x34] sm:$0xf]
        %v5004 = vld [vmem:[#allocation13 + $0x38] sm:$0xf]
        %v5005 = vld [vmem:[#allocation13 + $0x3c] sm:$0xf]
        %v5006 = vld [vmem:[%s6] sm:$0x1]
        %v5008 = vlaneseq
        %v5009 = vshrl.u32 %v5008, 7
        %v5010 = vsub.s32 0, %v5009
        %v5011 = vrot.slane %v5006, %v5010
        %v5029 = vunpack.c.l.b16 %v4990
        %v5030 = vunpack.c.l.b16 %v4991
        %v5031 = vunpack.c.l.b16 %v4992
        %v5032 = vunpack.c.l.b16 %v4993
        %v5033 = vunpack.c.l.b16 %v4994
        %v5034 = vunpack.c.l.b16 %v4995
        %v5035 = vunpack.c.l.b16 %v4996
        %v5036 = vunpack.c.l.b16 %v4997
        %v5037 = vunpack.c.l.b16 %v4998
        %v5038 = vunpack.c.l.b16 %v4999
        %v5039 = vunpack.c.l.b16 %v5000
        %v5040 = vunpack.c.l.b16 %v5001
        %v5041 = vunpack.c.l.b16 %v5002
        %v5042 = vunpack.c.l.b16 %v5003
        %v5043 = vunpack.c.l.b16 %v5004
        %v5044 = vunpack.c.l.b16 %v5005
        %v5045 = vpack.c.b16 %v5030, %v5029
        %v5046 = vpack.c.b16 %v5032, %v5031
        %v5047 = vpack.c.b16 %v5034, %v5033
        %v5048 = vpack.c.b16 %v5036, %v5035
        %v5049 = vpack.c.b16 %v5038, %v5037
        %v5050 = vpack.c.b16 %v5040, %v5039
        %v5051 = vpack.c.b16 %v5042, %v5041
        %v5052 = vpack.c.b16 %v5044, %v5043
        %5061 = vmatprep.subr.bf16.mxu0 0
        %5062 = vmatpush1.bf16.msra.mxu0 %v5045
        %5063 = vmatprep.subr.bf16.mxu0 0
        %5064 = vmatpush1.bf16.msra.mxu0 %v5046
        %5065 = vmatprep.subr.bf16.mxu0 0
        %5066 = vmatpush1.bf16.msra.mxu0 %v5047
        %5067 = vmatprep.subr.bf16.mxu0 0
        %5068 = vmatpush1.bf16.msra.mxu0 %v5048
        %5069 = vmatprep.subr.bf16.mxu0 0
        %5070 = vmatpush1.bf16.msra.mxu0 %v5049
        %5071 = vmatprep.subr.bf16.mxu0 0
        %5072 = vmatpush1.bf16.msra.mxu0 %v5050
        %5073 = vmatprep.subr.bf16.mxu0 0
        %5074 = vmatpush1.bf16.msra.mxu0 %v5051
        %5075 = vmatprep.subr.bf16.mxu0 0
        %5076 = vmatpush1.bf16.msra.mxu0 %v5052
        %5077 = vmatprep.subr.bf16.mxu0 0
        %5078 = vmatpush1.bf16.msra.mxu0 0
        %5079 = vmatprep.subr.bf16.mxu0 0
        %5080 = vmatpush1.bf16.msra.mxu0 0
        %5081 = vmatprep.subr.bf16.mxu0 0
        %5082 = vmatpush1.bf16.msra.mxu0 0
        %5083 = vmatprep.subr.bf16.mxu0 0
        %5084 = vmatpush1.bf16.msra.mxu0 0
        %5085 = vmatprep.subr.bf16.mxu0 0
        %5086 = vmatpush1.bf16.msra.mxu0 0
        %5087 = vmatprep.subr.bf16.mxu0 0
        %5088 = vmatpush1.bf16.msra.mxu0 0
        %5089 = vmatprep.subr.bf16.mxu0 0
        %5090 = vmatpush1.bf16.msra.mxu0 0
        %5091 = vmatprep.subr.bf16.mxu0 0
        %5092 = vmatpush1.bf16.msra.mxu0 0
        %5093 = vmatprep.mubr.bf16.mxu0 0
        %5094 = vmatmul.mubr.bf16.gmra.mrb[0].mxu0 %v4987
        %v5095 = vpop.f32.mrb[0].mxu0
        %v5096 = vadd.f32 %v5011, %v5095
        %v5097 = vpop.f32.mrb[0].mxu0
        %v5098 = vpop.f32.mrb[0].mxu0
        %v5099 = vadd.f32 %v5011, %v5098
        %v5100 = vpop.f32.mrb[0].mxu0
        %5101 = vmatprep.mubr.bf16.mxu0 0
        %5102 = vmatmul.mubr.bf16.gmra.mrb[0].mxu0 %v4988
        %v5103 = vpop.f32.mrb[0].mxu0
        %v5104 = vadd.f32 %v5011, %v5103
        %v5105 = vpop.f32.mrb[0].mxu0
        %v5106 = vpop.f32.mrb[0].mxu0
        %v5107 = vadd.f32 %v5011, %v5106
        %v5108 = vpop.f32.mrb[0].mxu0
        %5109 = vmatprep.mubr.bf16.mxu0 0
        %5110 = vmatmul.mubr.bf16.gmra.mrb[0].mxu0 %v4989
        %v5111 = vpop.f32.mrb[0].mxu0
        %v5112 = vadd.f32 %v5011, %v5111
        %v5113 = vpop.f32.mrb[0].mxu0
        %v5114 = vpop.f32.mrb[0].mxu0
        %v5115 = vadd.f32 %v5011, %v5114
        %v5116 = vpop.f32.mrb[0].mxu0
        %5117 = vdwg.mxu0
        %s5118 = scalar_lea.vmem %s389, 40 [#allocation5]
        %v5119 = vld [vmem:[%s5118] sm:$0xf]
        %v5120 = vld [vmem:[%s5118 + $0x4] sm:$0xf]
        %v5121 = vld [vmem:[%s5118 + $0x8] sm:$0xf]
        %v5122 = vld [vmem:[%s5118 + $0xc] sm:$0xf]
        %v5123 = vld [vmem:[%s5118 + $0x10] sm:$0xf]
        %v5124 = vld [vmem:[%s5118 + $0x14] sm:$0xf]
        %v5125 = vunpack.c.l.bf16 %v5119
        %v5126 = vunpack.c.l.bf16 %v5120
        %v5127 = vunpack.c.l.bf16 %v5121
        %v5128 = vunpack.c.l.bf16 %v5122
        %v5129 = vunpack.c.l.bf16 %v5123
        %v5130 = vunpack.c.l.bf16 %v5124
        %v5131 = vadd.f32 %v5125, %v5096
        %v5132 = vadd.f32 %v5126, %v5099
        %v5133 = vadd.f32 %v5127, %v5104
        %v5134 = vadd.f32 %v5128, %v5107
        %v5135 = vadd.f32 %v5129, %v5112
        %v5136 = vadd.f32 %v5130, %v5115
        %v5137 = vpack.c.bf16 %v5132, %v5131
        %v5138 = vpack.c.bf16 %v5134, %v5133
        %v5139 = vpack.c.bf16 %v5136, %v5135
        %v5143 = vunpack.c.l.b16 %v5137
        %v5144 = vunpack.c.h.b16 %v5137
        %v5145 = vunpack.c.l.b16 %v5138
        %v5146 = vunpack.c.h.b16 %v5138
        %v5147 = vunpack.c.l.b16 %v5139
        %v5148 = vunpack.c.h.b16 %v5139
        %v5149 = vpack.c.b16 %v5143, %v5143
        %v5150 = vpack.c.b16 %v5144, %v5144
        %v5151 = vpack.c.b16 %v5145, %v5145
        %v5152 = vpack.c.b16 %v5146, %v5146
        %v5153 = vpack.c.b16 %v5147, %v5147
        %v5154 = vpack.c.b16 %v5148, %v5148
        %s5161 = scalar_lea.vmem %s455, 40 [#allocation14]
        %5162 = vst [vmem:[%s5161] sm:$0xf] %v5149
        %5163 = vst [vmem:[%s5161 + $0x4] sm:$0xf] %v5150
        %5164 = vst [vmem:[%s5161 + $0x8] sm:$0xf] %v5151
        %5165 = vst [vmem:[%s5161 + $0xc] sm:$0xf] %v5152
        %5166 = vst [vmem:[%s5161 + $0x10] sm:$0xf] %v5153
        %5167 = vst [vmem:[%s5161 + $0x14] sm:$0xf] %v5154
        %s5168 = sand.u32 %s234, 1
        %s5169 = scalar_lea.sflag [#allocation7], %s5168
        %s5170 = sand.u32 %s234, 1
        %s5171 = smul.addr %s5170, 64
        %s5172 = scalar_lea.vmem [#allocation14], %s5171
        // Predicated region
        $region77: #{tpu_custom_call.1} parent=47 // pred_check
          %p5173 = pneg %p244
        $region78: #{tpu_custom_call.1} parent=47 // pred_check_branch
          %5175 = sbr.rel (%p5173) target = $region80
        $region79: #{tpu_custom_call.1} parent=47 // pred_region
          %s5176 = smul.u32 8, %s33
          %s5178 = ssub.s32 1024, 1024
          %5179 = vsyncadd %s5169, %s5178
          %s5180 = smul.addr %s5176, 2
          %s5181 = smul.addr %s32, 32
          %s5182 = sadd.s32 %s5180, %s5181
          %s5183 = smul.addr %s5182, 64
          %s5184 = scalar_lea.hbm %s7, %s5183
          %s5185 = sshll.u32 %s5172, 4
          %s5186 = int_to_ptr.vmem [resolvable:$true] %s5185
          %5191 = dma.vmem_to_hbm [thread:$0]  %s5186, 1024, %s5184, %s5169, 64, 64, 4
        $region80: #{tpu_custom_call.1} parent=47 // pred_fallthru
          _
      $region48: #{tpu_custom_call.1} parent=5 // pred_fallthru
        _
      %p5192 = scmp.le.s32.totalorder 2, %s23
      // Predicated region
      $region81: #{tpu_custom_call.1} parent=5 // pred_check
        %p5193 = pneg %p5192
      $region82: #{tpu_custom_call.1} parent=5 // pred_check_branch
        %5195 = sbr.rel (%p5193) target = $region84
      $region83: #{tpu_custom_call.1} parent=5 // pred_region
        %s5196 = ssub.s32 %s23, 2
        // Predicated region
        $region85: #{tpu_custom_call.1} parent=83 // pred_check
          %p5197 = pneg %p250
        $region86: #{tpu_custom_call.1} parent=83 // pred_check_branch
          %5199 = sbr.rel (%p5197) target = $region88
        $region87: #{tpu_custom_call.1} parent=83 // pred_region
          %s5200 = sand.u32 %s235, 1
          %s5201 = scalar_lea.sflag [#allocation7], %s5200
          %s5202 = sand.u32 %s235, 1
          %s5203 = smul.addr %s5202, 64
          %s5204 = scalar_lea.vmem [#allocation14], %s5203
          %5205 = dma.done %s5201, 1024
        $region88: #{tpu_custom_call.1} parent=83 // pred_fallthru
          _
      $region84: #{tpu_custom_call.1} parent=5 // pred_fallthru
        _
    $region6: #{tpu_custom_call.1} parent=1 // loop_footer
      %s27 = sadd.s32 1, %s23
    $region7: #{tpu_custom_call.1} parent=1 // loop_footer_branch
      %22 = sbr.rel target = $region3
    $region8: #{tpu_custom_call.1} parent=1 // loop_exit
      _
    %5206 = vsyncpa [#allocation6], 1
    %s5207 = scalar_lea.sflag [#allocation6], 1
    %5208 = vsyncpa %s5207, 1
    %5209 = vsyncpa [#allocation9], 1
    %s5210 = scalar_lea.sflag [#allocation9], 1
    %5211 = vsyncpa %s5210, 1
    %5212 = vsyncpa [#allocation12], 1
    %5213 = vsyncpa [#allocation7], 1
    %s5214 = scalar_lea.sflag [#allocation7], 1
    %5215 = vsyncpa %s5214, 1

</llo_original>
